<compile_context>
chip_gen: v5e
topology: v5e:2x2
jax: 0.10.0
libtpu: 0.0.40
codegen_flags: <defaults>
</compile_context>

<pallas_src>
import math

import jax
import jax.numpy as jnp
from jax import lax
from jax.experimental import pallas as pl
from jax.experimental.pallas import tpu as pltpu

# ---- module hyper-parameters (small, consistent with the PyTorch module) ----
D_MODEL = 32            # c
N_HEADS = 4             # h
D_HEAD = D_MODEL // N_HEADS
BLOCK_EXP = 4           # MLP expansion factor
HIDDEN = BLOCK_EXP * D_MODEL
SEQ = 64                # nx = vert_anchors * horz_anchors = 8 * 8
LN_EPS = 1e-5           # torch.nn.LayerNorm default

# Rows of the packed small-parameter tile (8, 128).
_ROW_LN1_G, _ROW_LN1_B, _ROW_LN2_G, _ROW_LN2_B = 0, 1, 2, 3
_ROW_BO, _ROW_B2, _ROW_BQKV, _ROW_B1 = 4, 5, 6, 7


# --------------------------- kernel helpers ---------------------------------
def _layer_norm(x, gamma, beta):
    mu = jnp.mean(x, axis=-1, keepdims=True)
    var = jnp.mean((x - mu) ** 2, axis=-1, keepdims=True)
    return (x - mu) * lax.rsqrt(var + LN_EPS) * gamma + beta


# --------------------------- fused Pallas kernel -----------------------------
def fused_block_kernel(x_ref, pack_ref, wqkv_ref, wo_ref, w1_ref, w2_ref,
                       o_ref, attn_ref):
    """Whole transformer block (attention + MLP, both residuals) for one batch block."""
    bsb, nx, c = x_ref.shape
    rows = bsb * nx
    x = x_ref[...].reshape(rows, c)                       # (R, 32), free relayout (nx % 8 == 0)

    # Unpack the small parameters from the single (8, 128) tile (static slices).
    ln1_g = pack_ref[_ROW_LN1_G:_ROW_LN1_G + 1, :D_MODEL]
    ln1_b = pack_ref[_ROW_LN1_B:_ROW_LN1_B + 1, :D_MODEL]
    ln2_g = pack_ref[_ROW_LN2_G:_ROW_LN2_G + 1, :D_MODEL]
    ln2_b = pack_ref[_ROW_LN2_B:_ROW_LN2_B + 1, :D_MODEL]
    bo    = pack_ref[_ROW_BO:_ROW_BO + 1, :D_MODEL]
    b2    = pack_ref[_ROW_B2:_ROW_B2 + 1, :D_MODEL]
    bqkv  = pack_ref[_ROW_BQKV:_ROW_BQKV + 1, :3 * D_MODEL]
    b1    = pack_ref[_ROW_B1:_ROW_B1 + 1, :HIDDEN]

    # ---------------- x = x + SelfAttention(LayerNorm(x)) ----------------
    y = _layer_norm(x, ln1_g, ln1_b)
    # One wide QKV matmul; the 1/sqrt(d_k) scale is pre-folded into the Q columns.
    qkv = jnp.dot(y, wqkv_ref[...], preferred_element_type=jnp.float32) + bqkv

    qk_dn = (((1,), (1,)), ((), ()))                      # contract d_head: q . k^T
    for b in range(bsb):                                  # static loop over batch in block
        r0 = b * nx
        for i in range(N_HEADS):                          # static per-head loop
            c0 = i * D_HEAD
            qh = qkv[r0:r0 + nx, c0:c0 + D_HEAD]
            kh = qkv[r0:r0 + nx, D_MODEL + c0:D_MODEL + c0 + D_HEAD]
            vh = qkv[r0:r0 + nx, 2 * D_MODEL + c0:2 * D_MODEL + c0 + D_HEAD]

            logits = lax.dot_general(qh, kh, qk_dn,
                                     preferred_element_type=jnp.float32)
            m = jnp.max(logits, axis=-1, keepdims=True)
            e = jnp.exp(logits - m)
            probs = e / jnp.sum(e, axis=-1, keepdims=True)      # exact divide

            head_out = jnp.dot(probs, vh, preferred_element_type=jnp.float32)
            # Write this head's output at its static lane offset; the o-proj is
            # done once, after the loop, as a single depth-32 MXU push.
            attn_ref[r0:r0 + nx, c0:c0 + D_HEAD] = head_out

    sa = jnp.dot(attn_ref[...], wo_ref[...], preferred_element_type=jnp.float32) + bo
    x = x + sa                                            # residual 1

    # ---------------- x = x + MLP(LayerNorm(x)) ----------------
    y = _layer_norm(x, ln2_g, ln2_b)
    h = jnp.dot(y, w1_ref[...], preferred_element_type=jnp.float32) + b1
    h = 0.5 * h * (1.0 + lax.erf(h * (1.0 / math.sqrt(2.0))))   # exact GELU (nn.GELU default)
    x = x + jnp.dot(h, w2_ref[...], preferred_element_type=jnp.float32) + b2

    o_ref[...] = x.reshape(bsb, nx, c)                    # residual 2


# --------------------------- wrapper -----------------------------------------
def _num_batch_blocks(bs):
    """v7x has 2 TensorCores per chip: give each one half the batch.
    Single-TC chips (v5e/v6e): fold the whole batch into one grid step."""
    try:
        kind = jax.devices()[0].device_kind.lower()
    except Exception:
        kind = ""
    if "v7" in kind and bs % 2 == 0:
        return 2
    return 1


def transformer_block(x, prepared):
    bs, nx, c = x.shape
    nb = _num_batch_blocks(bs)
    bsb = bs // nb

    xb_spec = pl.BlockSpec((bsb, nx, c), lambda b: (b, 0, 0))

    def rep2d(a):
        """Full-array BlockSpec, same block for every grid step (DMA'd once)."""
        return pl.BlockSpec(a.shape, lambda b: (0, 0))

    args = (prepared["pack"], prepared["wqkv"], prepared["wo"],
            prepared["w1"], prepared["w2"])

    return pl.pallas_call(
        fused_block_kernel,
        out_shape=jax.ShapeDtypeStruct(x.shape, x.dtype),
        grid=(nb,),
        in_specs=[xb_spec] + [rep2d(a) for a in args],
        out_specs=xb_spec,
        scratch_shapes=[pltpu.VMEM((bsb * nx, c), jnp.float32)],
        compiler_params=pltpu.CompilerParams(
            dimension_semantics=("parallel",)),
    )(x, *args)


# --------------------------- params & reference -----------------------------
def init_params(key):
    ks = jax.random.split(key, 8)
    d, hd = D_MODEL, HIDDEN
    p = {
        # LayerNorms: torch default init (weight=1, bias=0)
        "ln1_g": jnp.ones((1, d), jnp.float32), "ln1_b": jnp.zeros((1, d), jnp.float32),
        "ln2_g": jnp.ones((1, d), jnp.float32), "ln2_b": jnp.zeros((1, d), jnp.float32),
        # SelfAttention linears: init.normal_(std=0.001), bias=0 (per init_weights)
        "wq": 0.001 * jax.random.normal(ks[0], (d, d), jnp.float32),
        "wk": 0.001 * jax.random.normal(ks[1], (d, d), jnp.float32),
        "wv": 0.001 * jax.random.normal(ks[2], (d, d), jnp.float32),
        "wo": 0.001 * jax.random.normal(ks[3], (d, d), jnp.float32),
        "bq": jnp.zeros((1, d), jnp.float32), "bk": jnp.zeros((1, d), jnp.float32),
        "bv": jnp.zeros((1, d), jnp.float32), "bo": jnp.zeros((1, d), jnp.float32),
        # MLP linears: deterministic synthetic init
        "w1": 0.02 * jax.random.normal(ks[4], (d, hd), jnp.float32),
        "b1": 0.02 * jax.random.normal(ks[5], (1, hd), jnp.float32),
        "w2": 0.02 * jax.random.normal(ks[6], (hd, d), jnp.float32),
        "b2": 0.02 * jax.random.normal(ks[7], (1, d), jnp.float32),
    }
    return p


def prepare_params(p):
    """One-time parameter transform (outside the jit):
       fuse QKV, fold 1/sqrt(d_k) into Q, pack all small vectors into one tile."""
    inv = 1.0 / math.sqrt(D_HEAD)
    wqkv = jnp.concatenate([p["wq"] * inv, p["wk"], p["wv"]], axis=1)   # (32, 96)
    bqkv = jnp.concatenate([p["bq"] * inv, p["bk"], p["bv"]], axis=1)   # (1, 96)

    pack = jnp.zeros((8, 128), jnp.float32)
    pack = pack.at[_ROW_LN1_G, :D_MODEL].set(p["ln1_g"][0])
    pack = pack.at[_ROW_LN1_B, :D_MODEL].set(p["ln1_b"][0])
    pack = pack.at[_ROW_LN2_G, :D_MODEL].set(p["ln2_g"][0])
    pack = pack.at[_ROW_LN2_B, :D_MODEL].set(p["ln2_b"][0])
    pack = pack.at[_ROW_BO, :D_MODEL].set(p["bo"][0])
    pack = pack.at[_ROW_B2, :D_MODEL].set(p["b2"][0])
    pack = pack.at[_ROW_BQKV, :3 * D_MODEL].set(bqkv[0])
    pack = pack.at[_ROW_B1, :HIDDEN].set(p["b1"][0])

    return {"pack": pack, "wqkv": wqkv, "wo": p["wo"],
            "w1": p["w1"], "w2": p["w2"]}


def reference(x, p):
    """Pure-JAX mirror of the PyTorch forward (eval mode, use_AiA=False)."""
    bs = x.shape[0]

    def ln(v, g, b):
        mu = v.mean(-1, keepdims=True)
        var = ((v - mu) ** 2).mean(-1, keepdims=True)
        return (v - mu) / jnp.sqrt(var + LN_EPS) * g + b

    y = ln(x, p["ln1_g"], p["ln1_b"])
    q = y @ p["wq"] + p["bq"]
    k = y @ p["wk"] + p["bk"]
    v = y @ p["wv"] + p["bv"]

    def split(t):  # (bs, nx, h*dh) -> (bs, h, nx, dh), matches torch view+permute
        return t.reshape(bs, SEQ, N_HEADS, D_HEAD).transpose(0, 2, 1, 3)

    qh, kh, vh = split(q), split(k), split(v)
    att = jnp.einsum("bhqd,bhkd->bhqk", qh, kh) / math.sqrt(D_HEAD)
    att = jax.nn.softmax(att, axis=-1)
    o = jnp.einsum("bhqk,bhkd->bhqd", att, vh)
    o = o.transpose(0, 2, 1, 3).reshape(bs, SEQ, D_MODEL)
    x = x + (o @ p["wo"] + p["bo"])

    y = ln(x, p["ln2_g"], p["ln2_b"])
    h = y @ p["w1"] + p["b1"]
    h = 0.5 * h * (1.0 + jax.scipy.special.erf(h / math.sqrt(2.0)))
    x = x + (h @ p["w2"] + p["b2"])
    return x


# --------------------------- main --------------------------------------------
if __name__ == "__main__":
    key = jax.random.PRNGKey(0)
    kx, kp = jax.random.split(key)
    bs = 2
    x = jax.random.normal(kx, (bs, SEQ, D_MODEL), jnp.float32)
    params = init_params(kp)
    prepared = prepare_params(params)          # one-time transform, outside jit

    fwd = jax.jit(transformer_block)
    out = jax.block_until_ready(fwd(x, prepared))

    ref = reference(x, params)
    assert out.shape == (bs, SEQ, D_MODEL)
    assert jnp.allclose(out, ref, rtol=1e-4, atol=1e-4), "kernel mismatch vs reference"
    print("KERNEL_OK")
</pallas_src>

<mosaic_0001>
module attributes {stable_mosaic.version = 11 : i64} {
  func.func @fused_block_kernel(%arg0: i32, %arg1: memref<2x64x32xf32, #tpu.memory_space<vmem>>, %arg2: memref<8x128xf32, #tpu.memory_space<vmem>>, %arg3: memref<32x96xf32, #tpu.memory_space<vmem>>, %arg4: memref<32x32xf32, #tpu.memory_space<vmem>>, %arg5: memref<32x128xf32, #tpu.memory_space<vmem>>, %arg6: memref<128x32xf32, #tpu.memory_space<vmem>>, %arg7: memref<2x64x32xf32, #tpu.memory_space<vmem>>, %arg8: memref<128x32xf32, #tpu.memory_space<vmem>>) attributes {dimension_semantics = [#tpu.dimension_semantics<parallel>], iteration_bounds = array<i64: 1>, scalar_prefetch = 0 : i64, scratch_operands = 1 : i64, tpu.core_type = #tpu.core_type<tc>, window_params = [{transform_indices = @transform_0, window_bounds = array<i64: 2, 64, 32>}, {pipeline_mode = #tpu.pipeline_mode<synchronous>, transform_indices = @transform_1, window_bounds = array<i64: 8, 128>}, {pipeline_mode = #tpu.pipeline_mode<synchronous>, transform_indices = @transform_2, window_bounds = array<i64: 32, 96>}, {pipeline_mode = #tpu.pipeline_mode<synchronous>, transform_indices = @transform_3, window_bounds = array<i64: 32, 32>}, {pipeline_mode = #tpu.pipeline_mode<synchronous>, transform_indices = @transform_4, window_bounds = array<i64: 32, 128>}, {pipeline_mode = #tpu.pipeline_mode<synchronous>, transform_indices = @transform_5, window_bounds = array<i64: 128, 32>}, {transform_indices = @transform_6, window_bounds = array<i64: 2, 64, 32>}]} {
    %c0 = arith.constant 0 : index
    %c0_0 = arith.constant 0 : index
    %c0_1 = arith.constant 0 : index
    %0 = vector.load %arg1[%c0, %c0_0, %c0_1] : memref<2x64x32xf32, #tpu.memory_space<vmem>>, vector<2x64x32xf32>
    %1 = vector.shape_cast %0 : vector<2x64x32xf32> to vector<128x32xf32>
    %c0_2 = arith.constant 0 : index
    %c0_3 = arith.constant 0 : index
    %2 = vector.load %arg2[%c0_2, %c0_3] : memref<8x128xf32, #tpu.memory_space<vmem>>, vector<1x32xf32>
    %c1 = arith.constant 1 : index
    %c0_4 = arith.constant 0 : index
    %3 = vector.load %arg2[%c1, %c0_4] : memref<8x128xf32, #tpu.memory_space<vmem>>, vector<1x32xf32>
    %c2 = arith.constant 2 : index
    %c0_5 = arith.constant 0 : index
    %4 = vector.load %arg2[%c2, %c0_5] : memref<8x128xf32, #tpu.memory_space<vmem>>, vector<1x32xf32>
    %c3 = arith.constant 3 : index
    %c0_6 = arith.constant 0 : index
    %5 = vector.load %arg2[%c3, %c0_6] : memref<8x128xf32, #tpu.memory_space<vmem>>, vector<1x32xf32>
    %c4 = arith.constant 4 : index
    %c0_7 = arith.constant 0 : index
    %6 = vector.load %arg2[%c4, %c0_7] : memref<8x128xf32, #tpu.memory_space<vmem>>, vector<1x32xf32>
    %c5 = arith.constant 5 : index
    %c0_8 = arith.constant 0 : index
    %7 = vector.load %arg2[%c5, %c0_8] : memref<8x128xf32, #tpu.memory_space<vmem>>, vector<1x32xf32>
    %c6 = arith.constant 6 : index
    %c0_9 = arith.constant 0 : index
    %8 = vector.load %arg2[%c6, %c0_9] : memref<8x128xf32, #tpu.memory_space<vmem>>, vector<1x96xf32>
    %c7 = arith.constant 7 : index
    %c0_10 = arith.constant 0 : index
    %9 = vector.load %arg2[%c7, %c0_10] : memref<8x128xf32, #tpu.memory_space<vmem>>, vector<1x128xf32>
    %cst = arith.constant dense<0.000000e+00> : vector<128xf32>
    %10 = vector.multi_reduction <add>, %1, %cst [1] : vector<128x32xf32> to vector<128xf32>
    %11 = vector.shape_cast %10 : vector<128xf32> to vector<128x1xf32>
    %cst_11 = arith.constant 3.200000e+01 : f32
    %12 = vector.broadcast %cst_11 : f32 to vector<128x1xf32>
    %13 = arith.divf %11, %12 : vector<128x1xf32>
    %14 = vector.broadcast %13 : vector<128x1xf32> to vector<128x32xf32>
    %15 = arith.subf %1, %14 : vector<128x32xf32>
    %16 = arith.mulf %15, %15 : vector<128x32xf32>
    %cst_12 = arith.constant dense<0.000000e+00> : vector<128xf32>
    %17 = vector.multi_reduction <add>, %16, %cst_12 [1] : vector<128x32xf32> to vector<128xf32>
    %18 = vector.shape_cast %17 : vector<128xf32> to vector<128x1xf32>
    %cst_13 = arith.constant 3.200000e+01 : f32
    %19 = vector.broadcast %cst_13 : f32 to vector<128x1xf32>
    %20 = arith.divf %18, %19 : vector<128x1xf32>
    %21 = vector.broadcast %13 : vector<128x1xf32> to vector<128x32xf32>
    %22 = arith.subf %1, %21 : vector<128x32xf32>
    %cst_14 = arith.constant 9.99999974E-6 : f32
    %23 = vector.broadcast %cst_14 : f32 to vector<128x1xf32>
    %24 = arith.addf %20, %23 : vector<128x1xf32>
    %25 = math.rsqrt %24 : vector<128x1xf32>
    %26 = vector.broadcast %25 : vector<128x1xf32> to vector<128x32xf32>
    %27 = arith.mulf %22, %26 : vector<128x32xf32>
    %28 = vector.broadcast %2 : vector<1x32xf32> to vector<128x32xf32>
    %29 = arith.mulf %27, %28 : vector<128x32xf32>
    %30 = vector.broadcast %3 : vector<1x32xf32> to vector<128x32xf32>
    %31 = arith.addf %29, %30 : vector<128x32xf32>
    %c0_15 = arith.constant 0 : index
    %c0_16 = arith.constant 0 : index
    %32 = vector.load %arg3[%c0_15, %c0_16] : memref<32x96xf32, #tpu.memory_space<vmem>>, vector<32x96xf32>
    %cst_17 = arith.constant dense<0.000000e+00> : vector<128x96xf32>
    %33 = tpu.matmul %31, %32, %cst_17 {dimension_numbers = #tpu.dot_dimension_numbers<[1], [0], [0], [1], [0, 0, 1, 1], [], []>} : vector<128x32xf32>, vector<32x96xf32>, vector<128x96xf32> -> vector<128x96xf32>
    %34 = vector.broadcast %8 : vector<1x96xf32> to vector<128x96xf32>
    %35 = arith.addf %33, %34 : vector<128x96xf32>
    %36 = vector.extract_strided_slice %35 {offsets = [0, 0], sizes = [64, 8], strides = [1, 1]} : vector<128x96xf32> to vector<64x8xf32>
    %37 = vector.extract_strided_slice %35 {offsets = [0, 32], sizes = [64, 8], strides = [1, 1]} : vector<128x96xf32> to vector<64x8xf32>
    %38 = vector.extract_strided_slice %35 {offsets = [0, 64], sizes = [64, 8], strides = [1, 1]} : vector<128x96xf32> to vector<64x8xf32>
    %cst_18 = arith.constant dense<0.000000e+00> : vector<64x64xf32>
    %39 = tpu.matmul %36, %37, %cst_18 {dimension_numbers = #tpu.dot_dimension_numbers<[1], [1], [0], [0], [0, 0, 1, 0], [], []>} : vector<64x8xf32>, vector<64x8xf32>, vector<64x64xf32> -> vector<64x64xf32>
    %cst_19 = arith.constant dense<0xFF800000> : vector<64xf32>
    %40 = vector.multi_reduction <maximumf>, %39, %cst_19 [1] : vector<64x64xf32> to vector<64xf32>
    %41 = vector.shape_cast %40 : vector<64xf32> to vector<64x1xf32>
    %42 = vector.broadcast %41 : vector<64x1xf32> to vector<64x64xf32>
    %43 = arith.subf %39, %42 : vector<64x64xf32>
    %44 = math.exp %43 : vector<64x64xf32>
    %cst_20 = arith.constant dense<0.000000e+00> : vector<64xf32>
    %45 = vector.multi_reduction <add>, %44, %cst_20 [1] : vector<64x64xf32> to vector<64xf32>
    %46 = vector.shape_cast %45 : vector<64xf32> to vector<64x1xf32>
    %47 = vector.broadcast %46 : vector<64x1xf32> to vector<64x64xf32>
    %48 = arith.divf %44, %47 : vector<64x64xf32>
    %cst_21 = arith.constant dense<0.000000e+00> : vector<64x8xf32>
    %49 = tpu.matmul %48, %38, %cst_21 {dimension_numbers = #tpu.dot_dimension_numbers<[1], [0], [0], [1], [0, 0, 1, 1], [], []>} : vector<64x64xf32>, vector<64x8xf32>, vector<64x8xf32> -> vector<64x8xf32>
    %c0_22 = arith.constant 0 : index
    %c0_23 = arith.constant 0 : index
    %50 = vector.load %arg8[%c0_22, %c0_23] : memref<128x32xf32, #tpu.memory_space<vmem>>, vector<64x8xf32>
    tpu.vector_store %arg8[%c0_22, %c0_23], %49 {strides = array<i32>} : memref<128x32xf32, #tpu.memory_space<vmem>>, vector<64x8xf32>,
    %51 = vector.extract_strided_slice %35 {offsets = [0, 8], sizes = [64, 8], strides = [1, 1]} : vector<128x96xf32> to vector<64x8xf32>
    %52 = vector.extract_strided_slice %35 {offsets = [0, 40], sizes = [64, 8], strides = [1, 1]} : vector<128x96xf32> to vector<64x8xf32>
    %53 = vector.extract_strided_slice %35 {offsets = [0, 72], sizes = [64, 8], strides = [1, 1]} : vector<128x96xf32> to vector<64x8xf32>
    %cst_24 = arith.constant dense<0.000000e+00> : vector<64x64xf32>
    %54 = tpu.matmul %51, %52, %cst_24 {dimension_numbers = #tpu.dot_dimension_numbers<[1], [1], [0], [0], [0, 0, 1, 0], [], []>} : vector<64x8xf32>, vector<64x8xf32>, vector<64x64xf32> -> vector<64x64xf32>
    %cst_25 = arith.constant dense<0xFF800000> : vector<64xf32>
    %55 = vector.multi_reduction <maximumf>, %54, %cst_25 [1] : vector<64x64xf32> to vector<64xf32>
    %56 = vector.shape_cast %55 : vector<64xf32> to vector<64x1xf32>
    %57 = vector.broadcast %56 : vector<64x1xf32> to vector<64x64xf32>
    %58 = arith.subf %54, %57 : vector<64x64xf32>
    %59 = math.exp %58 : vector<64x64xf32>
    %cst_26 = arith.constant dense<0.000000e+00> : vector<64xf32>
    %60 = vector.multi_reduction <add>, %59, %cst_26 [1] : vector<64x64xf32> to vector<64xf32>
    %61 = vector.shape_cast %60 : vector<64xf32> to vector<64x1xf32>
    %62 = vector.broadcast %61 : vector<64x1xf32> to vector<64x64xf32>
    %63 = arith.divf %59, %62 : vector<64x64xf32>
    %cst_27 = arith.constant dense<0.000000e+00> : vector<64x8xf32>
    %64 = tpu.matmul %63, %53, %cst_27 {dimension_numbers = #tpu.dot_dimension_numbers<[1], [0], [0], [1], [0, 0, 1, 1], [], []>} : vector<64x64xf32>, vector<64x8xf32>, vector<64x8xf32> -> vector<64x8xf32>
    %c0_28 = arith.constant 0 : index
    %c8 = arith.constant 8 : index
    %65 = vector.load %arg8[%c0_28, %c8] : memref<128x32xf32, #tpu.memory_space<vmem>>, vector<64x8xf32>
    tpu.vector_store %arg8[%c0_28, %c8], %64 {strides = array<i32>} : memref<128x32xf32, #tpu.memory_space<vmem>>, vector<64x8xf32>,
    %66 = vector.extract_strided_slice %35 {offsets = [0, 16], sizes = [64, 8], strides = [1, 1]} : vector<128x96xf32> to vector<64x8xf32>
    %67 = vector.extract_strided_slice %35 {offsets = [0, 48], sizes = [64, 8], strides = [1, 1]} : vector<128x96xf32> to vector<64x8xf32>
    %68 = vector.extract_strided_slice %35 {offsets = [0, 80], sizes = [64, 8], strides = [1, 1]} : vector<128x96xf32> to vector<64x8xf32>
    %cst_29 = arith.constant dense<0.000000e+00> : vector<64x64xf32>
    %69 = tpu.matmul %66, %67, %cst_29 {dimension_numbers = #tpu.dot_dimension_numbers<[1], [1], [0], [0], [0, 0, 1, 0], [], []>} : vector<64x8xf32>, vector<64x8xf32>, vector<64x64xf32> -> vector<64x64xf32>
    %cst_30 = arith.constant dense<0xFF800000> : vector<64xf32>
    %70 = vector.multi_reduction <maximumf>, %69, %cst_30 [1] : vector<64x64xf32> to vector<64xf32>
    %71 = vector.shape_cast %70 : vector<64xf32> to vector<64x1xf32>
    %72 = vector.broadcast %71 : vector<64x1xf32> to vector<64x64xf32>
    %73 = arith.subf %69, %72 : vector<64x64xf32>
    %74 = math.exp %73 : vector<64x64xf32>
    %cst_31 = arith.constant dense<0.000000e+00> : vector<64xf32>
    %75 = vector.multi_reduction <add>, %74, %cst_31 [1] : vector<64x64xf32> to vector<64xf32>
    %76 = vector.shape_cast %75 : vector<64xf32> to vector<64x1xf32>
    %77 = vector.broadcast %76 : vector<64x1xf32> to vector<64x64xf32>
    %78 = arith.divf %74, %77 : vector<64x64xf32>
    %cst_32 = arith.constant dense<0.000000e+00> : vector<64x8xf32>
    %79 = tpu.matmul %78, %68, %cst_32 {dimension_numbers = #tpu.dot_dimension_numbers<[1], [0], [0], [1], [0, 0, 1, 1], [], []>} : vector<64x64xf32>, vector<64x8xf32>, vector<64x8xf32> -> vector<64x8xf32>
    %c0_33 = arith.constant 0 : index
    %c16 = arith.constant 16 : index
    %80 = vector.load %arg8[%c0_33, %c16] : memref<128x32xf32, #tpu.memory_space<vmem>>, vector<64x8xf32>
    tpu.vector_store %arg8[%c0_33, %c16], %79 {strides = array<i32>} : memref<128x32xf32, #tpu.memory_space<vmem>>, vector<64x8xf32>,
    %81 = vector.extract_strided_slice %35 {offsets = [0, 24], sizes = [64, 8], strides = [1, 1]} : vector<128x96xf32> to vector<64x8xf32>
    %82 = vector.extract_strided_slice %35 {offsets = [0, 56], sizes = [64, 8], strides = [1, 1]} : vector<128x96xf32> to vector<64x8xf32>
    %83 = vector.extract_strided_slice %35 {offsets = [0, 88], sizes = [64, 8], strides = [1, 1]} : vector<128x96xf32> to vector<64x8xf32>
    %cst_34 = arith.constant dense<0.000000e+00> : vector<64x64xf32>
    %84 = tpu.matmul %81, %82, %cst_34 {dimension_numbers = #tpu.dot_dimension_numbers<[1], [1], [0], [0], [0, 0, 1, 0], [], []>} : vector<64x8xf32>, vector<64x8xf32>, vector<64x64xf32> -> vector<64x64xf32>
    %cst_35 = arith.constant dense<0xFF800000> : vector<64xf32>
    %85 = vector.multi_reduction <maximumf>, %84, %cst_35 [1] : vector<64x64xf32> to vector<64xf32>
    %86 = vector.shape_cast %85 : vector<64xf32> to vector<64x1xf32>
    %87 = vector.broadcast %86 : vector<64x1xf32> to vector<64x64xf32>
    %88 = arith.subf %84, %87 : vector<64x64xf32>
    %89 = math.exp %88 : vector<64x64xf32>
    %cst_36 = arith.constant dense<0.000000e+00> : vector<64xf32>
    %90 = vector.multi_reduction <add>, %89, %cst_36 [1] : vector<64x64xf32> to vector<64xf32>
    %91 = vector.shape_cast %90 : vector<64xf32> to vector<64x1xf32>
    %92 = vector.broadcast %91 : vector<64x1xf32> to vector<64x64xf32>
    %93 = arith.divf %89, %92 : vector<64x64xf32>
    %cst_37 = arith.constant dense<0.000000e+00> : vector<64x8xf32>
    %94 = tpu.matmul %93, %83, %cst_37 {dimension_numbers = #tpu.dot_dimension_numbers<[1], [0], [0], [1], [0, 0, 1, 1], [], []>} : vector<64x64xf32>, vector<64x8xf32>, vector<64x8xf32> -> vector<64x8xf32>
    %c0_38 = arith.constant 0 : index
    %c24 = arith.constant 24 : index
    %95 = vector.load %arg8[%c0_38, %c24] : memref<128x32xf32, #tpu.memory_space<vmem>>, vector<64x8xf32>
    tpu.vector_store %arg8[%c0_38, %c24], %94 {strides = array<i32>} : memref<128x32xf32, #tpu.memory_space<vmem>>, vector<64x8xf32>,
    %96 = vector.extract_strided_slice %35 {offsets = [64, 0], sizes = [64, 8], strides = [1, 1]} : vector<128x96xf32> to vector<64x8xf32>
    %97 = vector.extract_strided_slice %35 {offsets = [64, 32], sizes = [64, 8], strides = [1, 1]} : vector<128x96xf32> to vector<64x8xf32>
    %98 = vector.extract_strided_slice %35 {offsets = [64, 64], sizes = [64, 8], strides = [1, 1]} : vector<128x96xf32> to vector<64x8xf32>
    %cst_39 = arith.constant dense<0.000000e+00> : vector<64x64xf32>
    %99 = tpu.matmul %96, %97, %cst_39 {dimension_numbers = #tpu.dot_dimension_numbers<[1], [1], [0], [0], [0, 0, 1, 0], [], []>} : vector<64x8xf32>, vector<64x8xf32>, vector<64x64xf32> -> vector<64x64xf32>
    %cst_40 = arith.constant dense<0xFF800000> : vector<64xf32>
    %100 = vector.multi_reduction <maximumf>, %99, %cst_40 [1] : vector<64x64xf32> to vector<64xf32>
    %101 = vector.shape_cast %100 : vector<64xf32> to vector<64x1xf32>
    %102 = vector.broadcast %101 : vector<64x1xf32> to vector<64x64xf32>
    %103 = arith.subf %99, %102 : vector<64x64xf32>
    %104 = math.exp %103 : vector<64x64xf32>
    %cst_41 = arith.constant dense<0.000000e+00> : vector<64xf32>
    %105 = vector.multi_reduction <add>, %104, %cst_41 [1] : vector<64x64xf32> to vector<64xf32>
    %106 = vector.shape_cast %105 : vector<64xf32> to vector<64x1xf32>
    %107 = vector.broadcast %106 : vector<64x1xf32> to vector<64x64xf32>
    %108 = arith.divf %104, %107 : vector<64x64xf32>
    %cst_42 = arith.constant dense<0.000000e+00> : vector<64x8xf32>
    %109 = tpu.matmul %108, %98, %cst_42 {dimension_numbers = #tpu.dot_dimension_numbers<[1], [0], [0], [1], [0, 0, 1, 1], [], []>} : vector<64x64xf32>, vector<64x8xf32>, vector<64x8xf32> -> vector<64x8xf32>
    %c64 = arith.constant 64 : index
    %c0_43 = arith.constant 0 : index
    %110 = vector.load %arg8[%c64, %c0_43] : memref<128x32xf32, #tpu.memory_space<vmem>>, vector<64x8xf32>
    tpu.vector_store %arg8[%c64, %c0_43], %109 {strides = array<i32>} : memref<128x32xf32, #tpu.memory_space<vmem>>, vector<64x8xf32>,
    %111 = vector.extract_strided_slice %35 {offsets = [64, 8], sizes = [64, 8], strides = [1, 1]} : vector<128x96xf32> to vector<64x8xf32>
    %112 = vector.extract_strided_slice %35 {offsets = [64, 40], sizes = [64, 8], strides = [1, 1]} : vector<128x96xf32> to vector<64x8xf32>
    %113 = vector.extract_strided_slice %35 {offsets = [64, 72], sizes = [64, 8], strides = [1, 1]} : vector<128x96xf32> to vector<64x8xf32>
    %cst_44 = arith.constant dense<0.000000e+00> : vector<64x64xf32>
    %114 = tpu.matmul %111, %112, %cst_44 {dimension_numbers = #tpu.dot_dimension_numbers<[1], [1], [0], [0], [0, 0, 1, 0], [], []>} : vector<64x8xf32>, vector<64x8xf32>, vector<64x64xf32> -> vector<64x64xf32>
    %cst_45 = arith.constant dense<0xFF800000> : vector<64xf32>
    %115 = vector.multi_reduction <maximumf>, %114, %cst_45 [1] : vector<64x64xf32> to vector<64xf32>
    %116 = vector.shape_cast %115 : vector<64xf32> to vector<64x1xf32>
    %117 = vector.broadcast %116 : vector<64x1xf32> to vector<64x64xf32>
    %118 = arith.subf %114, %117 : vector<64x64xf32>
    %119 = math.exp %118 : vector<64x64xf32>
    %cst_46 = arith.constant dense<0.000000e+00> : vector<64xf32>
    %120 = vector.multi_reduction <add>, %119, %cst_46 [1] : vector<64x64xf32> to vector<64xf32>
    %121 = vector.shape_cast %120 : vector<64xf32> to vector<64x1xf32>
    %122 = vector.broadcast %121 : vector<64x1xf32> to vector<64x64xf32>
    %123 = arith.divf %119, %122 : vector<64x64xf32>
    %cst_47 = arith.constant dense<0.000000e+00> : vector<64x8xf32>
    %124 = tpu.matmul %123, %113, %cst_47 {dimension_numbers = #tpu.dot_dimension_numbers<[1], [0], [0], [1], [0, 0, 1, 1], [], []>} : vector<64x64xf32>, vector<64x8xf32>, vector<64x8xf32> -> vector<64x8xf32>
    %c64_48 = arith.constant 64 : index
    %c8_49 = arith.constant 8 : index
    %125 = vector.load %arg8[%c64_48, %c8_49] : memref<128x32xf32, #tpu.memory_space<vmem>>, vector<64x8xf32>
    tpu.vector_store %arg8[%c64_48, %c8_49], %124 {strides = array<i32>} : memref<128x32xf32, #tpu.memory_space<vmem>>, vector<64x8xf32>,
    %126 = vector.extract_strided_slice %35 {offsets = [64, 16], sizes = [64, 8], strides = [1, 1]} : vector<128x96xf32> to vector<64x8xf32>
    %127 = vector.extract_strided_slice %35 {offsets = [64, 48], sizes = [64, 8], strides = [1, 1]} : vector<128x96xf32> to vector<64x8xf32>
    %128 = vector.extract_strided_slice %35 {offsets = [64, 80], sizes = [64, 8], strides = [1, 1]} : vector<128x96xf32> to vector<64x8xf32>
    %cst_50 = arith.constant dense<0.000000e+00> : vector<64x64xf32>
    %129 = tpu.matmul %126, %127, %cst_50 {dimension_numbers = #tpu.dot_dimension_numbers<[1], [1], [0], [0], [0, 0, 1, 0], [], []>} : vector<64x8xf32>, vector<64x8xf32>, vector<64x64xf32> -> vector<64x64xf32>
    %cst_51 = arith.constant dense<0xFF800000> : vector<64xf32>
    %130 = vector.multi_reduction <maximumf>, %129, %cst_51 [1] : vector<64x64xf32> to vector<64xf32>
    %131 = vector.shape_cast %130 : vector<64xf32> to vector<64x1xf32>
    %132 = vector.broadcast %131 : vector<64x1xf32> to vector<64x64xf32>
    %133 = arith.subf %129, %132 : vector<64x64xf32>
    %134 = math.exp %133 : vector<64x64xf32>
    %cst_52 = arith.constant dense<0.000000e+00> : vector<64xf32>
    %135 = vector.multi_reduction <add>, %134, %cst_52 [1] : vector<64x64xf32> to vector<64xf32>
    %136 = vector.shape_cast %135 : vector<64xf32> to vector<64x1xf32>
    %137 = vector.broadcast %136 : vector<64x1xf32> to vector<64x64xf32>
    %138 = arith.divf %134, %137 : vector<64x64xf32>
    %cst_53 = arith.constant dense<0.000000e+00> : vector<64x8xf32>
    %139 = tpu.matmul %138, %128, %cst_53 {dimension_numbers = #tpu.dot_dimension_numbers<[1], [0], [0], [1], [0, 0, 1, 1], [], []>} : vector<64x64xf32>, vector<64x8xf32>, vector<64x8xf32> -> vector<64x8xf32>
    %c64_54 = arith.constant 64 : index
    %c16_55 = arith.constant 16 : index
    %140 = vector.load %arg8[%c64_54, %c16_55] : memref<128x32xf32, #tpu.memory_space<vmem>>, vector<64x8xf32>
    tpu.vector_store %arg8[%c64_54, %c16_55], %139 {strides = array<i32>} : memref<128x32xf32, #tpu.memory_space<vmem>>, vector<64x8xf32>,
    %141 = vector.extract_strided_slice %35 {offsets = [64, 24], sizes = [64, 8], strides = [1, 1]} : vector<128x96xf32> to vector<64x8xf32>
    %142 = vector.extract_strided_slice %35 {offsets = [64, 56], sizes = [64, 8], strides = [1, 1]} : vector<128x96xf32> to vector<64x8xf32>
    %143 = vector.extract_strided_slice %35 {offsets = [64, 88], sizes = [64, 8], strides = [1, 1]} : vector<128x96xf32> to vector<64x8xf32>
    %cst_56 = arith.constant dense<0.000000e+00> : vector<64x64xf32>
    %144 = tpu.matmul %141, %142, %cst_56 {dimension_numbers = #tpu.dot_dimension_numbers<[1], [1], [0], [0], [0, 0, 1, 0], [], []>} : vector<64x8xf32>, vector<64x8xf32>, vector<64x64xf32> -> vector<64x64xf32>
    %cst_57 = arith.constant dense<0xFF800000> : vector<64xf32>
    %145 = vector.multi_reduction <maximumf>, %144, %cst_57 [1] : vector<64x64xf32> to vector<64xf32>
    %146 = vector.shape_cast %145 : vector<64xf32> to vector<64x1xf32>
    %147 = vector.broadcast %146 : vector<64x1xf32> to vector<64x64xf32>
    %148 = arith.subf %144, %147 : vector<64x64xf32>
    %149 = math.exp %148 : vector<64x64xf32>
    %cst_58 = arith.constant dense<0.000000e+00> : vector<64xf32>
    %150 = vector.multi_reduction <add>, %149, %cst_58 [1] : vector<64x64xf32> to vector<64xf32>
    %151 = vector.shape_cast %150 : vector<64xf32> to vector<64x1xf32>
    %152 = vector.broadcast %151 : vector<64x1xf32> to vector<64x64xf32>
    %153 = arith.divf %149, %152 : vector<64x64xf32>
    %cst_59 = arith.constant dense<0.000000e+00> : vector<64x8xf32>
    %154 = tpu.matmul %153, %143, %cst_59 {dimension_numbers = #tpu.dot_dimension_numbers<[1], [0], [0], [1], [0, 0, 1, 1], [], []>} : vector<64x64xf32>, vector<64x8xf32>, vector<64x8xf32> -> vector<64x8xf32>
    %c64_60 = arith.constant 64 : index
    %c24_61 = arith.constant 24 : index
    %155 = vector.load %arg8[%c64_60, %c24_61] : memref<128x32xf32, #tpu.memory_space<vmem>>, vector<64x8xf32>
    tpu.vector_store %arg8[%c64_60, %c24_61], %154 {strides = array<i32>} : memref<128x32xf32, #tpu.memory_space<vmem>>, vector<64x8xf32>,
    %c0_62 = arith.constant 0 : index
    %c0_63 = arith.constant 0 : index
    %156 = vector.load %arg8[%c0_62, %c0_63] : memref<128x32xf32, #tpu.memory_space<vmem>>, vector<128x32xf32>
    %c0_64 = arith.constant 0 : index
    %c0_65 = arith.constant 0 : index
    %157 = vector.load %arg4[%c0_64, %c0_65] : memref<32x32xf32, #tpu.memory_space<vmem>>, vector<32x32xf32>
    %cst_66 = arith.constant dense<0.000000e+00> : vector<128x32xf32>
    %158 = tpu.matmul %156, %157, %cst_66 {dimension_numbers = #tpu.dot_dimension_numbers<[1], [0], [0], [1], [0, 0, 1, 1], [], []>} : vector<128x32xf32>, vector<32x32xf32>, vector<128x32xf32> -> vector<128x32xf32>
    %159 = vector.broadcast %6 : vector<1x32xf32> to vector<128x32xf32>
    %160 = arith.addf %158, %159 : vector<128x32xf32>
    %161 = arith.addf %1, %160 : vector<128x32xf32>
    %cst_67 = arith.constant dense<0.000000e+00> : vector<128xf32>
    %162 = vector.multi_reduction <add>, %161, %cst_67 [1] : vector<128x32xf32> to vector<128xf32>
    %163 = vector.shape_cast %162 : vector<128xf32> to vector<128x1xf32>
    %cst_68 = arith.constant 3.200000e+01 : f32
    %164 = vector.broadcast %cst_68 : f32 to vector<128x1xf32>
    %165 = arith.divf %163, %164 : vector<128x1xf32>
    %166 = vector.broadcast %165 : vector<128x1xf32> to vector<128x32xf32>
    %167 = arith.subf %161, %166 : vector<128x32xf32>
    %168 = arith.mulf %167, %167 : vector<128x32xf32>
    %cst_69 = arith.constant dense<0.000000e+00> : vector<128xf32>
    %169 = vector.multi_reduction <add>, %168, %cst_69 [1] : vector<128x32xf32> to vector<128xf32>
    %170 = vector.shape_cast %169 : vector<128xf32> to vector<128x1xf32>
    %cst_70 = arith.constant 3.200000e+01 : f32
    %171 = vector.broadcast %cst_70 : f32 to vector<128x1xf32>
    %172 = arith.divf %170, %171 : vector<128x1xf32>
    %173 = vector.broadcast %165 : vector<128x1xf32> to vector<128x32xf32>
    %174 = arith.subf %161, %173 : vector<128x32xf32>
    %cst_71 = arith.constant 9.99999974E-6 : f32
    %175 = vector.broadcast %cst_71 : f32 to vector<128x1xf32>
    %176 = arith.addf %172, %175 : vector<128x1xf32>
    %177 = math.rsqrt %176 : vector<128x1xf32>
    %178 = vector.broadcast %177 : vector<128x1xf32> to vector<128x32xf32>
    %179 = arith.mulf %174, %178 : vector<128x32xf32>
    %180 = vector.broadcast %4 : vector<1x32xf32> to vector<128x32xf32>
    %181 = arith.mulf %179, %180 : vector<128x32xf32>
    %182 = vector.broadcast %5 : vector<1x32xf32> to vector<128x32xf32>
    %183 = arith.addf %181, %182 : vector<128x32xf32>
    %c0_72 = arith.constant 0 : index
    %c0_73 = arith.constant 0 : index
    %184 = vector.load %arg5[%c0_72, %c0_73] : memref<32x128xf32, #tpu.memory_space<vmem>>, vector<32x128xf32>
    %cst_74 = arith.constant dense<0.000000e+00> : vector<128x128xf32>
    %185 = tpu.matmul %183, %184, %cst_74 {dimension_numbers = #tpu.dot_dimension_numbers<[1], [0], [0], [1], [0, 0, 1, 1], [], []>} : vector<128x32xf32>, vector<32x128xf32>, vector<128x128xf32> -> vector<128x128xf32>
    %186 = vector.broadcast %9 : vector<1x128xf32> to vector<128x128xf32>
    %187 = arith.addf %185, %186 : vector<128x128xf32>
    %cst_75 = arith.constant 5.000000e-01 : f32
    %188 = vector.broadcast %cst_75 : f32 to vector<128x128xf32>
    %189 = arith.mulf %188, %187 : vector<128x128xf32>
    %cst_76 = arith.constant 0.707106769 : f32
    %190 = vector.broadcast %cst_76 : f32 to vector<128x128xf32>
    %191 = arith.mulf %187, %190 : vector<128x128xf32>
    %192 = math.erf %191 : vector<128x128xf32>
    %cst_77 = arith.constant 1.000000e+00 : f32
    %193 = vector.broadcast %cst_77 : f32 to vector<128x128xf32>
    %194 = arith.addf %193, %192 : vector<128x128xf32>
    %195 = arith.mulf %189, %194 : vector<128x128xf32>
    %c0_78 = arith.constant 0 : index
    %c0_79 = arith.constant 0 : index
    %196 = vector.load %arg6[%c0_78, %c0_79] : memref<128x32xf32, #tpu.memory_space<vmem>>, vector<128x32xf32>
    %cst_80 = arith.constant dense<0.000000e+00> : vector<128x32xf32>
    %197 = tpu.matmul %195, %196, %cst_80 {dimension_numbers = #tpu.dot_dimension_numbers<[1], [0], [0], [1], [0, 0, 1, 1], [], []>} : vector<128x128xf32>, vector<128x32xf32>, vector<128x32xf32> -> vector<128x32xf32>
    %198 = arith.addf %161, %197 : vector<128x32xf32>
    %199 = vector.broadcast %7 : vector<1x32xf32> to vector<128x32xf32>
    %200 = arith.addf %198, %199 : vector<128x32xf32>
    %201 = vector.shape_cast %200 : vector<128x32xf32> to vector<2x64x32xf32>
    %c0_81 = arith.constant 0 : index
    %c0_82 = arith.constant 0 : index
    %c0_83 = arith.constant 0 : index
    %202 = vector.load %arg7[%c0_81, %c0_82, %c0_83] : memref<2x64x32xf32, #tpu.memory_space<vmem>>, vector<2x64x32xf32>
    tpu.vector_store %arg7[%c0_81, %c0_82, %c0_83], %201 {strides = array<i32>} : memref<2x64x32xf32, #tpu.memory_space<vmem>>, vector<2x64x32xf32>,
    return
  }
  func.func @transform_0(%arg0: i32) -> (i32, i32, i32) {
    %c0_i32 = arith.constant 0 : i32
    %c0_i32_0 = arith.constant 0 : i32
    %c0_i32_1 = arith.constant 0 : i32
    return %arg0, %c0_i32, %c0_i32_0 : i32, i32, i32
  }
  func.func @transform_1(%arg0: i32) -> (i32, i32) {
    %c0_i32 = arith.constant 0 : i32
    %c0_i32_0 = arith.constant 0 : i32
    %c0_i32_1 = arith.constant 0 : i32
    return %c0_i32, %c0_i32_0 : i32, i32
  }
  func.func @transform_2(%arg0: i32) -> (i32, i32) {
    %c0_i32 = arith.constant 0 : i32
    %c0_i32_0 = arith.constant 0 : i32
    %c0_i32_1 = arith.constant 0 : i32
    return %c0_i32, %c0_i32_0 : i32, i32
  }
  func.func @transform_3(%arg0: i32) -> (i32, i32) {
    %c0_i32 = arith.constant 0 : i32
    %c0_i32_0 = arith.constant 0 : i32
    %c0_i32_1 = arith.constant 0 : i32
    return %c0_i32, %c0_i32_0 : i32, i32
  }
  func.func @transform_4(%arg0: i32) -> (i32, i32) {
    %c0_i32 = arith.constant 0 : i32
    %c0_i32_0 = arith.constant 0 : i32
    %c0_i32_1 = arith.constant 0 : i32
    return %c0_i32, %c0_i32_0 : i32, i32
  }
  func.func @transform_5(%arg0: i32) -> (i32, i32) {
    %c0_i32 = arith.constant 0 : i32
    %c0_i32_0 = arith.constant 0 : i32
    %c0_i32_1 = arith.constant 0 : i32
    return %c0_i32, %c0_i32_0 : i32, i32
  }
  func.func @transform_6(%arg0: i32) -> (i32, i32, i32) {
    %c0_i32 = arith.constant 0 : i32
    %c0_i32_0 = arith.constant 0 : i32
    %c0_i32_1 = arith.constant 0 : i32
    return %arg0, %c0_i32, %c0_i32_0 : i32, i32, i32
  }
}

</mosaic_0001>

<llo_original>
// kernel: transformer_block.1
$region0: #{transformer_block.1}
  #allocation0 [shape = 'u32[]', space=smem, size = 0x4, offset = 0x4, fixed_abs, tag = 'smem constant byte address 0x4 - core index']
  #allocation1 [shape = 'u32[72,128]{1,0:T(1,128)}', space=vmem, size = 0x9000, scoped, tag = 'internal scratch']
  #allocation2 [shape = 'f32[128,32]{1,0:T(8,128)}', space=vmem, size = 0x10000, scoped, tag = 'scratch operand']
  %s0 = inlined_call_operand.vmem [shape: f32[2,64,32], index: 0, kind: input, shape index: {}]
  %s1 = inlined_call_operand.vmem [shape: f32[8,128], index: 1, kind: input, shape index: {}]
  %s2 = inlined_call_operand.vmem [shape: f32[32,96], index: 2, kind: input, shape index: {}]
  %s3 = inlined_call_operand.vmem [shape: f32[32,32], index: 3, kind: input, shape index: {}]
  %s4 = inlined_call_operand.vmem [shape: f32[32,128], index: 4, kind: input, shape index: {}]
  %s5 = inlined_call_operand.vmem [shape: f32[128,32], index: 5, kind: input, shape index: {}]
  %s6 = inlined_call_operand.vmem [shape: f32[2,64,32], index: 6, kind: output, shape index: {}]
  %s7 = sld [smem:[#allocation0]]
  $region34: #{transformer_block.1} parent=0
    _
  %s9 = ssub.s32 1, %s7
  %s10 = scalar_select 0, %s9, %s7
  // Predicated region
  $region2: #{transformer_block.1} parent=0 // pred_check
    _
  $region3: #{transformer_block.1} parent=0 // pred_check_branch
    %12 = sbr.rel (0) target = $region5
  $region4: #{transformer_block.1} parent=0 // pred_region
    _
  $region5: #{transformer_block.1} parent=0 // pred_fallthru
    _
  // Predicated region
  $region6: #{transformer_block.1} parent=0 // pred_check
    _
  $region7: #{transformer_block.1} parent=0 // pred_check_branch
    %14 = sbr.rel (0) target = $region9
  $region8: #{transformer_block.1} parent=0 // pred_region
    _
  $region9: #{transformer_block.1} parent=0 // pred_fallthru
    _
  // Predicated region
  $region10: #{transformer_block.1} parent=0 // pred_check
    _
  $region11: #{transformer_block.1} parent=0 // pred_check_branch
    %16 = sbr.rel (0) target = $region13
  $region12: #{transformer_block.1} parent=0 // pred_region
    _
  $region13: #{transformer_block.1} parent=0 // pred_fallthru
    _
  // Predicated region
  $region14: #{transformer_block.1} parent=0 // pred_check
    _
  $region15: #{transformer_block.1} parent=0 // pred_check_branch
    %18 = sbr.rel (0) target = $region17
  $region16: #{transformer_block.1} parent=0 // pred_region
    _
  $region17: #{transformer_block.1} parent=0 // pred_fallthru
    _
  // Predicated region
  $region18: #{transformer_block.1} parent=0 // pred_check
    _
  $region19: #{transformer_block.1} parent=0 // pred_check_branch
    %20 = sbr.rel (0) target = $region21
  $region20: #{transformer_block.1} parent=0 // pred_region
    _
  $region21: #{transformer_block.1} parent=0 // pred_fallthru
    _
  // Predicated region
  $region22: #{transformer_block.1} parent=0 // pred_check
    _
  $region23: #{transformer_block.1} parent=0 // pred_check_branch
    %22 = sbr.rel (0) target = $region25
  $region24: #{transformer_block.1} parent=0 // pred_region
    _
  $region25: #{transformer_block.1} parent=0 // pred_fallthru
    _
  %v23 = vld [vmem:[%s0] sm:$0xff]
  %v24 = vld [vmem:[%s0 + $0x8] sm:$0xff]
  %v25 = vld [vmem:[%s0 + $0x10] sm:$0xff]
  %v26 = vld [vmem:[%s0 + $0x18] sm:$0xff]
  %v27 = vld [vmem:[%s0 + $0x20] sm:$0xff]
  %v28 = vld [vmem:[%s0 + $0x28] sm:$0xff]
  %v29 = vld [vmem:[%s0 + $0x30] sm:$0xff]
  %v30 = vld [vmem:[%s0 + $0x38] sm:$0xff]
  %v31 = vld [vmem:[%s0 + $0x40] sm:$0xff]
  %v32 = vld [vmem:[%s0 + $0x48] sm:$0xff]
  %v33 = vld [vmem:[%s0 + $0x50] sm:$0xff]
  %v34 = vld [vmem:[%s0 + $0x58] sm:$0xff]
  %v35 = vld [vmem:[%s0 + $0x60] sm:$0xff]
  %v36 = vld [vmem:[%s0 + $0x68] sm:$0xff]
  %v37 = vld [vmem:[%s0 + $0x70] sm:$0xff]
  %v38 = vld [vmem:[%s0 + $0x78] sm:$0xff]
  %v39 = vld [vmem:[%s1] sm:$0x1]
  %v40 = vld [vmem:[%s1 + $0x1] sm:$0x1]
  %v41 = vld [vmem:[%s1 + $0x2] sm:$0x1]
  %v42 = vld [vmem:[%s1 + $0x3] sm:$0x1]
  %v43 = vld [vmem:[%s1 + $0x4] sm:$0x1]
  %v44 = vld [vmem:[%s1 + $0x5] sm:$0x1]
  %v45 = vld [vmem:[%s1 + $0x6] sm:$0x1]
  %v46 = vld [vmem:[%s1 + $0x7] sm:$0x1]
  %vm47 = vcmask 261120
  %v48 = vsel %vm47, %v23, 0.0
  %49 = vadd.xlane.f32.xlu0 %v48
  %v50 = vpop.xlane.xlu0 %49
  %v51 = vsel %vm47, %v24, 0.0
  %52 = vadd.xlane.f32.xlu0 %v51
  %v53 = vpop.xlane.xlu0 %52
  %v54 = vsel %vm47, %v25, 0.0
  %55 = vadd.xlane.f32.xlu0 %v54
  %v56 = vpop.xlane.xlu0 %55
  %v57 = vsel %vm47, %v26, 0.0
  %58 = vadd.xlane.f32.xlu0 %v57
  %v59 = vpop.xlane.xlu0 %58
  %v60 = vsel %vm47, %v27, 0.0
  %61 = vadd.xlane.f32.xlu0 %v60
  %v62 = vpop.xlane.xlu0 %61
  %v63 = vsel %vm47, %v28, 0.0
  %64 = vadd.xlane.f32.xlu0 %v63
  %v65 = vpop.xlane.xlu0 %64
  %v66 = vsel %vm47, %v29, 0.0
  %67 = vadd.xlane.f32.xlu0 %v66
  %v68 = vpop.xlane.xlu0 %67
  %v69 = vsel %vm47, %v30, 0.0
  %70 = vadd.xlane.f32.xlu0 %v69
  %v71 = vpop.xlane.xlu0 %70
  %v72 = vsel %vm47, %v31, 0.0
  %73 = vadd.xlane.f32.xlu0 %v72
  %v74 = vpop.xlane.xlu0 %73
  %v75 = vsel %vm47, %v32, 0.0
  %76 = vadd.xlane.f32.xlu0 %v75
  %v77 = vpop.xlane.xlu0 %76
  %v78 = vsel %vm47, %v33, 0.0
  %79 = vadd.xlane.f32.xlu0 %v78
  %v80 = vpop.xlane.xlu0 %79
  %v81 = vsel %vm47, %v34, 0.0
  %82 = vadd.xlane.f32.xlu0 %v81
  %v83 = vpop.xlane.xlu0 %82
  %v84 = vsel %vm47, %v35, 0.0
  %85 = vadd.xlane.f32.xlu0 %v84
  %v86 = vpop.xlane.xlu0 %85
  %v87 = vsel %vm47, %v36, 0.0
  %88 = vadd.xlane.f32.xlu0 %v87
  %v89 = vpop.xlane.xlu0 %88
  %v90 = vsel %vm47, %v37, 0.0
  %91 = vadd.xlane.f32.xlu0 %v90
  %v92 = vpop.xlane.xlu0 %91
  %v93 = vsel %vm47, %v38, 0.0
  %94 = vadd.xlane.f32.xlu0 %v93
  %v95 = vpop.xlane.xlu0 %94
  %v96 = vrcp.pop 32.0
  %v97 = vmul.f32 32.0, %v96
  %v98 = vsub.f32 1.0, %v97
  %v99 = vmul.f32 %v96, %v98
  %v100 = vadd.f32 %v96, %v99
  %vm101 = vweird.f32 %v96
  %v102 = vsel %vm101, %v96, %v100
  %v103 = vmul.f32 %v50, %v102
  %v104 = vmul.f32 %v53, %v102
  %v105 = vmul.f32 %v56, %v102
  %v106 = vmul.f32 %v59, %v102
  %v107 = vmul.f32 %v62, %v102
  %v108 = vmul.f32 %v65, %v102
  %v109 = vmul.f32 %v68, %v102
  %v110 = vmul.f32 %v71, %v102
  %v111 = vmul.f32 %v74, %v102
  %v112 = vmul.f32 %v77, %v102
  %v113 = vmul.f32 %v80, %v102
  %v114 = vmul.f32 %v83, %v102
  %v115 = vmul.f32 %v86, %v102
  %v116 = vmul.f32 %v89, %v102
  %v117 = vmul.f32 %v92, %v102
  %v118 = vmul.f32 %v95, %v102
  %v119 = vsub.f32 %v23, %v103
  %v120 = vsub.f32 %v24, %v104
  %v121 = vsub.f32 %v25, %v105
  %v122 = vsub.f32 %v26, %v106
  %v123 = vsub.f32 %v27, %v107
  %v124 = vsub.f32 %v28, %v108
  %v125 = vsub.f32 %v29, %v109
  %v126 = vsub.f32 %v30, %v110
  %v127 = vsub.f32 %v31, %v111
  %v128 = vsub.f32 %v32, %v112
  %v129 = vsub.f32 %v33, %v113
  %v130 = vsub.f32 %v34, %v114
  %v131 = vsub.f32 %v35, %v115
  %v132 = vsub.f32 %v36, %v116
  %v133 = vsub.f32 %v37, %v117
  %v134 = vsub.f32 %v38, %v118
  %v135 = vmul.f32 %v119, %v119
  %v136 = vmul.f32 %v120, %v120
  %v137 = vmul.f32 %v121, %v121
  %v138 = vmul.f32 %v122, %v122
  %v139 = vmul.f32 %v123, %v123
  %v140 = vmul.f32 %v124, %v124
  %v141 = vmul.f32 %v125, %v125
  %v142 = vmul.f32 %v126, %v126
  %v143 = vmul.f32 %v127, %v127
  %v144 = vmul.f32 %v128, %v128
  %v145 = vmul.f32 %v129, %v129
  %v146 = vmul.f32 %v130, %v130
  %v147 = vmul.f32 %v131, %v131
  %v148 = vmul.f32 %v132, %v132
  %v149 = vmul.f32 %v133, %v133
  %v150 = vmul.f32 %v134, %v134
  %v151 = vsel %vm47, %v135, 0.0
  %152 = vadd.xlane.f32.xlu0 %v151
  %v153 = vpop.xlane.xlu0 %152
  %v154 = vsel %vm47, %v136, 0.0
  %155 = vadd.xlane.f32.xlu0 %v154
  %v156 = vpop.xlane.xlu0 %155
  %v157 = vsel %vm47, %v137, 0.0
  %158 = vadd.xlane.f32.xlu0 %v157
  %v159 = vpop.xlane.xlu0 %158
  %v160 = vsel %vm47, %v138, 0.0
  %161 = vadd.xlane.f32.xlu0 %v160
  %v162 = vpop.xlane.xlu0 %161
  %v163 = vsel %vm47, %v139, 0.0
  %164 = vadd.xlane.f32.xlu0 %v163
  %v165 = vpop.xlane.xlu0 %164
  %v166 = vsel %vm47, %v140, 0.0
  %167 = vadd.xlane.f32.xlu0 %v166
  %v168 = vpop.xlane.xlu0 %167
  %v169 = vsel %vm47, %v141, 0.0
  %170 = vadd.xlane.f32.xlu0 %v169
  %v171 = vpop.xlane.xlu0 %170
  %v172 = vsel %vm47, %v142, 0.0
  %173 = vadd.xlane.f32.xlu0 %v172
  %v174 = vpop.xlane.xlu0 %173
  %v175 = vsel %vm47, %v143, 0.0
  %176 = vadd.xlane.f32.xlu0 %v175
  %v177 = vpop.xlane.xlu0 %176
  %v178 = vsel %vm47, %v144, 0.0
  %179 = vadd.xlane.f32.xlu0 %v178
  %v180 = vpop.xlane.xlu0 %179
  %v181 = vsel %vm47, %v145, 0.0
  %182 = vadd.xlane.f32.xlu0 %v181
  %v183 = vpop.xlane.xlu0 %182
  %v184 = vsel %vm47, %v146, 0.0
  %185 = vadd.xlane.f32.xlu0 %v184
  %v186 = vpop.xlane.xlu0 %185
  %v187 = vsel %vm47, %v147, 0.0
  %188 = vadd.xlane.f32.xlu0 %v187
  %v189 = vpop.xlane.xlu0 %188
  %v190 = vsel %vm47, %v148, 0.0
  %191 = vadd.xlane.f32.xlu0 %v190
  %v192 = vpop.xlane.xlu0 %191
  %v193 = vsel %vm47, %v149, 0.0
  %194 = vadd.xlane.f32.xlu0 %v193
  %v195 = vpop.xlane.xlu0 %194
  %v196 = vsel %vm47, %v150, 0.0
  %197 = vadd.xlane.f32.xlu0 %v196
  %v198 = vpop.xlane.xlu0 %197
  %v199 = vmul.f32 %v153, %v102
  %v200 = vmul.f32 %v156, %v102
  %v201 = vmul.f32 %v159, %v102
  %v202 = vmul.f32 %v162, %v102
  %v203 = vmul.f32 %v165, %v102
  %v204 = vmul.f32 %v168, %v102
  %v205 = vmul.f32 %v171, %v102
  %v206 = vmul.f32 %v174, %v102
  %v207 = vmul.f32 %v177, %v102
  %v208 = vmul.f32 %v180, %v102
  %v209 = vmul.f32 %v183, %v102
  %v210 = vmul.f32 %v186, %v102
  %v211 = vmul.f32 %v189, %v102
  %v212 = vmul.f32 %v192, %v102
  %v213 = vmul.f32 %v195, %v102
  %v214 = vmul.f32 %v198, %v102
  %v215 = vadd.f32 %v199, 1e-05
  %v216 = vadd.f32 %v200, 1e-05
  %v217 = vadd.f32 %v201, 1e-05
  %v218 = vadd.f32 %v202, 1e-05
  %v219 = vadd.f32 %v203, 1e-05
  %v220 = vadd.f32 %v204, 1e-05
  %v221 = vadd.f32 %v205, 1e-05
  %v222 = vadd.f32 %v206, 1e-05
  %v223 = vadd.f32 %v207, 1e-05
  %v224 = vadd.f32 %v208, 1e-05
  %v225 = vadd.f32 %v209, 1e-05
  %v226 = vadd.f32 %v210, 1e-05
  %v227 = vadd.f32 %v211, 1e-05
  %v228 = vadd.f32 %v212, 1e-05
  %v229 = vadd.f32 %v213, 1e-05
  %v230 = vadd.f32 %v214, 1e-05
  %v231 = vrsqrt.pop %v215
  %v232 = vmul.f32 %v231, %v215
  %v233 = vmul.f32 %v232, %v231
  %v234 = vmul.f32 0.5, %v233
  %v235 = vsub.f32 1.5, %v234
  %v236 = vmul.f32 %v231, %v235
  %vm237 = vweird.f32 %v215
  %vm238 = vweird.f32 %v231
  %vm239 = vmor %vm237, %vm238
  %v240 = vsel %vm239, %v231, %v236
  %v241 = vrsqrt.pop %v216
  %v242 = vmul.f32 %v241, %v216
  %v243 = vmul.f32 %v242, %v241
  %v244 = vmul.f32 0.5, %v243
  %v245 = vsub.f32 1.5, %v244
  %v246 = vmul.f32 %v241, %v245
  %vm247 = vweird.f32 %v216
  %vm248 = vweird.f32 %v241
  %vm249 = vmor %vm247, %vm248
  %v250 = vsel %vm249, %v241, %v246
  %v251 = vrsqrt.pop %v217
  %v252 = vmul.f32 %v251, %v217
  %v253 = vmul.f32 %v252, %v251
  %v254 = vmul.f32 0.5, %v253
  %v255 = vsub.f32 1.5, %v254
  %v256 = vmul.f32 %v251, %v255
  %vm257 = vweird.f32 %v217
  %vm258 = vweird.f32 %v251
  %vm259 = vmor %vm257, %vm258
  %v260 = vsel %vm259, %v251, %v256
  %v261 = vrsqrt.pop %v218
  %v262 = vmul.f32 %v261, %v218
  %v263 = vmul.f32 %v262, %v261
  %v264 = vmul.f32 0.5, %v263
  %v265 = vsub.f32 1.5, %v264
  %v266 = vmul.f32 %v261, %v265
  %vm267 = vweird.f32 %v218
  %vm268 = vweird.f32 %v261
  %vm269 = vmor %vm267, %vm268
  %v270 = vsel %vm269, %v261, %v266
  %v271 = vrsqrt.pop %v219
  %v272 = vmul.f32 %v271, %v219
  %v273 = vmul.f32 %v272, %v271
  %v274 = vmul.f32 0.5, %v273
  %v275 = vsub.f32 1.5, %v274
  %v276 = vmul.f32 %v271, %v275
  %vm277 = vweird.f32 %v219
  %vm278 = vweird.f32 %v271
  %vm279 = vmor %vm277, %vm278
  %v280 = vsel %vm279, %v271, %v276
  %v281 = vrsqrt.pop %v220
  %v282 = vmul.f32 %v281, %v220
  %v283 = vmul.f32 %v282, %v281
  %v284 = vmul.f32 0.5, %v283
  %v285 = vsub.f32 1.5, %v284
  %v286 = vmul.f32 %v281, %v285
  %vm287 = vweird.f32 %v220
  %vm288 = vweird.f32 %v281
  %vm289 = vmor %vm287, %vm288
  %v290 = vsel %vm289, %v281, %v286
  %v291 = vrsqrt.pop %v221
  %v292 = vmul.f32 %v291, %v221
  %v293 = vmul.f32 %v292, %v291
  %v294 = vmul.f32 0.5, %v293
  %v295 = vsub.f32 1.5, %v294
  %v296 = vmul.f32 %v291, %v295
  %vm297 = vweird.f32 %v221
  %vm298 = vweird.f32 %v291
  %vm299 = vmor %vm297, %vm298
  %v300 = vsel %vm299, %v291, %v296
  %v301 = vrsqrt.pop %v222
  %v302 = vmul.f32 %v301, %v222
  %v303 = vmul.f32 %v302, %v301
  %v304 = vmul.f32 0.5, %v303
  %v305 = vsub.f32 1.5, %v304
  %v306 = vmul.f32 %v301, %v305
  %vm307 = vweird.f32 %v222
  %vm308 = vweird.f32 %v301
  %vm309 = vmor %vm307, %vm308
  %v310 = vsel %vm309, %v301, %v306
  %v311 = vrsqrt.pop %v223
  %v312 = vmul.f32 %v311, %v223
  %v313 = vmul.f32 %v312, %v311
  %v314 = vmul.f32 0.5, %v313
  %v315 = vsub.f32 1.5, %v314
  %v316 = vmul.f32 %v311, %v315
  %vm317 = vweird.f32 %v223
  %vm318 = vweird.f32 %v311
  %vm319 = vmor %vm317, %vm318
  %v320 = vsel %vm319, %v311, %v316
  %v321 = vrsqrt.pop %v224
  %v322 = vmul.f32 %v321, %v224
  %v323 = vmul.f32 %v322, %v321
  %v324 = vmul.f32 0.5, %v323
  %v325 = vsub.f32 1.5, %v324
  %v326 = vmul.f32 %v321, %v325
  %vm327 = vweird.f32 %v224
  %vm328 = vweird.f32 %v321
  %vm329 = vmor %vm327, %vm328
  %v330 = vsel %vm329, %v321, %v326
  %v331 = vrsqrt.pop %v225
  %v332 = vmul.f32 %v331, %v225
  %v333 = vmul.f32 %v332, %v331
  %v334 = vmul.f32 0.5, %v333
  %v335 = vsub.f32 1.5, %v334
  %v336 = vmul.f32 %v331, %v335
  %vm337 = vweird.f32 %v225
  %vm338 = vweird.f32 %v331
  %vm339 = vmor %vm337, %vm338
  %v340 = vsel %vm339, %v331, %v336
  %v341 = vrsqrt.pop %v226
  %v342 = vmul.f32 %v341, %v226
  %v343 = vmul.f32 %v342, %v341
  %v344 = vmul.f32 0.5, %v343
  %v345 = vsub.f32 1.5, %v344
  %v346 = vmul.f32 %v341, %v345
  %vm347 = vweird.f32 %v226
  %vm348 = vweird.f32 %v341
  %vm349 = vmor %vm347, %vm348
  %v350 = vsel %vm349, %v341, %v346
  %v351 = vrsqrt.pop %v227
  %v352 = vmul.f32 %v351, %v227
  %v353 = vmul.f32 %v352, %v351
  %v354 = vmul.f32 0.5, %v353
  %v355 = vsub.f32 1.5, %v354
  %v356 = vmul.f32 %v351, %v355
  %vm357 = vweird.f32 %v227
  %vm358 = vweird.f32 %v351
  %vm359 = vmor %vm357, %vm358
  %v360 = vsel %vm359, %v351, %v356
  %v361 = vrsqrt.pop %v228
  %v362 = vmul.f32 %v361, %v228
  %v363 = vmul.f32 %v362, %v361
  %v364 = vmul.f32 0.5, %v363
  %v365 = vsub.f32 1.5, %v364
  %v366 = vmul.f32 %v361, %v365
  %vm367 = vweird.f32 %v228
  %vm368 = vweird.f32 %v361
  %vm369 = vmor %vm367, %vm368
  %v370 = vsel %vm369, %v361, %v366
  %v371 = vrsqrt.pop %v229
  %v372 = vmul.f32 %v371, %v229
  %v373 = vmul.f32 %v372, %v371
  %v374 = vmul.f32 0.5, %v373
  %v375 = vsub.f32 1.5, %v374
  %v376 = vmul.f32 %v371, %v375
  %vm377 = vweird.f32 %v229
  %vm378 = vweird.f32 %v371
  %vm379 = vmor %vm377, %vm378
  %v380 = vsel %vm379, %v371, %v376
  %v381 = vrsqrt.pop %v230
  %v382 = vmul.f32 %v381, %v230
  %v383 = vmul.f32 %v382, %v381
  %v384 = vmul.f32 0.5, %v383
  %v385 = vsub.f32 1.5, %v384
  %v386 = vmul.f32 %v381, %v385
  %vm387 = vweird.f32 %v230
  %vm388 = vweird.f32 %v381
  %vm389 = vmor %vm387, %vm388
  %v390 = vsel %vm389, %v381, %v386
  %v391 = vmul.f32 %v119, %v240
  %v392 = vmul.f32 %v120, %v250
  %v393 = vmul.f32 %v121, %v260
  %v394 = vmul.f32 %v122, %v270
  %v395 = vmul.f32 %v123, %v280
  %v396 = vmul.f32 %v124, %v290
  %v397 = vmul.f32 %v125, %v300
  %v398 = vmul.f32 %v126, %v310
  %v399 = vmul.f32 %v127, %v320
  %v400 = vmul.f32 %v128, %v330
  %v401 = vmul.f32 %v129, %v340
  %v402 = vmul.f32 %v130, %v350
  %v403 = vmul.f32 %v131, %v360
  %v404 = vmul.f32 %v132, %v370
  %v405 = vmul.f32 %v133, %v380
  %v406 = vmul.f32 %v134, %v390
  %v407 = vperm.slane %v39, 0
  %v408 = vmul.f32 %v391, %v407
  %v409 = vmul.f32 %v392, %v407
  %v410 = vmul.f32 %v393, %v407
  %v411 = vmul.f32 %v394, %v407
  %v412 = vmul.f32 %v395, %v407
  %v413 = vmul.f32 %v396, %v407
  %v414 = vmul.f32 %v397, %v407
  %v415 = vmul.f32 %v398, %v407
  %v416 = vmul.f32 %v399, %v407
  %v417 = vmul.f32 %v400, %v407
  %v418 = vmul.f32 %v401, %v407
  %v419 = vmul.f32 %v402, %v407
  %v420 = vmul.f32 %v403, %v407
  %v421 = vmul.f32 %v404, %v407
  %v422 = vmul.f32 %v405, %v407
  %v423 = vmul.f32 %v406, %v407
  %v424 = vperm.slane %v40, 0
  %v425 = vadd.f32 %v408, %v424
  %v426 = vadd.f32 %v409, %v424
  %v427 = vadd.f32 %v410, %v424
  %v428 = vadd.f32 %v411, %v424
  %v429 = vadd.f32 %v412, %v424
  %v430 = vadd.f32 %v413, %v424
  %v431 = vadd.f32 %v414, %v424
  %v432 = vadd.f32 %v415, %v424
  %v433 = vadd.f32 %v416, %v424
  %v434 = vadd.f32 %v417, %v424
  %v435 = vadd.f32 %v418, %v424
  %v436 = vadd.f32 %v419, %v424
  %v437 = vadd.f32 %v420, %v424
  %v438 = vadd.f32 %v421, %v424
  %v439 = vadd.f32 %v422, %v424
  %v440 = vadd.f32 %v423, %v424
  %v441 = vld [vmem:[%s2] sm:$0xff]
  %v442 = vld [vmem:[%s2 + $0x8] sm:$0xff]
  %v443 = vld [vmem:[%s2 + $0x10] sm:$0xff]
  %v444 = vld [vmem:[%s2 + $0x18] sm:$0xff]
  %v445 = vperm.slane %v45, 0
  %v447 = vsel %vm47, %v425, 0
  %v450 = vsel %vm47, %v426, 0
  %v453 = vsel %vm47, %v427, 0
  %v456 = vsel %vm47, %v428, 0
  %v459 = vsel %vm47, %v429, 0
  %v462 = vsel %vm47, %v430, 0
  %v465 = vsel %vm47, %v431, 0
  %v468 = vsel %vm47, %v432, 0
  %v471 = vsel %vm47, %v433, 0
  %v474 = vsel %vm47, %v434, 0
  %v477 = vsel %vm47, %v435, 0
  %v480 = vsel %vm47, %v436, 0
  %v483 = vsel %vm47, %v437, 0
  %v486 = vsel %vm47, %v438, 0
  %v489 = vsel %vm47, %v439, 0
  %v492 = vsel %vm47, %v440, 0
  %494 = vmatpush.msra.mxu0 0.0
  %495 = vmatpush.msra.mxu0 0.0
  %496 = vmatpush.msra.mxu0 0.0
  %497 = vmatpush.msra.mxu0 0.0
  %498 = vmatpush.msra.mxu0 0.0
  %499 = vmatpush.msra.mxu0 0.0
  %500 = vmatpush.msra.mxu0 0.0
  %501 = vmatpush.msra.mxu0 0.0
  %502 = vmatpush.msra.mxu0 0.0
  %503 = vmatpush.msra.mxu0 0.0
  %504 = vmatpush.msra.mxu0 0.0
  %505 = vmatpush.msra.mxu0 0.0
  %506 = vmatpush.msra.mxu0 %v444
  %507 = vmatpush.msra.mxu0 %v443
  %508 = vmatpush.msra.mxu0 %v442
  %509 = vmatpush.msra.mxu0 %v441
  %510 = vmatmul.f32.gmra.mxu0 %v447
  %v511 = vpop.f32.mrf.mxu0
  %v512 = vadd.f32 %v445, %v511
  %513 = vmatmul.f32.gmra.mxu0 %v450
  %v514 = vpop.f32.mrf.mxu0
  %v515 = vadd.f32 %v445, %v514
  %516 = vmatmul.f32.gmra.mxu0 %v453
  %v517 = vpop.f32.mrf.mxu0
  %v518 = vadd.f32 %v445, %v517
  %519 = vmatmul.f32.gmra.mxu0 %v456
  %v520 = vpop.f32.mrf.mxu0
  %v521 = vadd.f32 %v445, %v520
  %522 = vmatmul.f32.gmra.mxu0 %v459
  %v523 = vpop.f32.mrf.mxu0
  %v524 = vadd.f32 %v445, %v523
  %525 = vmatmul.f32.gmra.mxu0 %v462
  %v526 = vpop.f32.mrf.mxu0
  %v527 = vadd.f32 %v445, %v526
  %528 = vmatmul.f32.gmra.mxu0 %v465
  %v529 = vpop.f32.mrf.mxu0
  %v530 = vadd.f32 %v445, %v529
  %531 = vmatmul.f32.gmra.mxu0 %v468
  %v532 = vpop.f32.mrf.mxu0
  %v533 = vadd.f32 %v445, %v532
  %534 = vmatmul.f32.gmra.mxu0 %v471
  %v535 = vpop.f32.mrf.mxu0
  %v536 = vadd.f32 %v445, %v535
  %537 = vmatmul.f32.gmra.mxu0 %v474
  %v538 = vpop.f32.mrf.mxu0
  %v539 = vadd.f32 %v445, %v538
  %540 = vmatmul.f32.gmra.mxu0 %v477
  %v541 = vpop.f32.mrf.mxu0
  %v542 = vadd.f32 %v445, %v541
  %543 = vmatmul.f32.gmra.mxu0 %v480
  %v544 = vpop.f32.mrf.mxu0
  %v545 = vadd.f32 %v445, %v544
  %546 = vmatmul.f32.gmra.mxu0 %v483
  %v547 = vpop.f32.mrf.mxu0
  %v548 = vadd.f32 %v445, %v547
  %549 = vmatmul.f32.gmra.mxu0 %v486
  %v550 = vpop.f32.mrf.mxu0
  %v551 = vadd.f32 %v445, %v550
  %552 = vmatmul.f32.gmra.mxu0 %v489
  %v553 = vpop.f32.mrf.mxu0
  %v554 = vadd.f32 %v445, %v553
  %555 = vmatmul.f32.gmra.mxu0 %v492
  %v556 = vpop.f32.mrf.mxu0
  %v557 = vadd.f32 %v445, %v556
  %558 = vdwg.mxu0
  %567 = vrot.lane.b32.xlu0 %v512, 96
  %v568 = vpop.permute.xlu0 %567
  %569 = vrot.lane.b32.xlu0 %v515, 96
  %v570 = vpop.permute.xlu0 %569
  %571 = vrot.lane.b32.xlu0 %v518, 96
  %v572 = vpop.permute.xlu0 %571
  %573 = vrot.lane.b32.xlu0 %v521, 96
  %v574 = vpop.permute.xlu0 %573
  %575 = vrot.lane.b32.xlu0 %v524, 96
  %v576 = vpop.permute.xlu0 %575
  %577 = vrot.lane.b32.xlu0 %v527, 96
  %v578 = vpop.permute.xlu0 %577
  %579 = vrot.lane.b32.xlu0 %v530, 96
  %v580 = vpop.permute.xlu0 %579
  %581 = vrot.lane.b32.xlu0 %v533, 96
  %v582 = vpop.permute.xlu0 %581
  %vm583 = vcmask 64512
  %v584 = vsel %vm583, %v512, 0
  %v586 = vsel %vm583, %v515, 0
  %v588 = vsel %vm583, %v518, 0
  %v590 = vsel %vm583, %v521, 0
  %v592 = vsel %vm583, %v524, 0
  %v594 = vsel %vm583, %v527, 0
  %v596 = vsel %vm583, %v530, 0
  %v598 = vsel %vm583, %v533, 0
  %v600 = vsel %vm583, %v568, 0
  %v602 = vsel %vm583, %v570, 0
  %v604 = vsel %vm583, %v572, 0
  %v606 = vsel %vm583, %v574, 0
  %v608 = vsel %vm583, %v576, 0
  %v610 = vsel %vm583, %v578, 0
  %v612 = vsel %vm583, %v580, 0
  %v614 = vsel %vm583, %v582, 0
  %616 = vmatpush.xpose.msra.mxu0 0.0
  %617 = vmatpush.xpose.msra.mxu0 0.0
  %618 = vmatpush.xpose.msra.mxu0 0.0
  %619 = vmatpush.xpose.msra.mxu0 0.0
  %620 = vmatpush.xpose.msra.mxu0 0.0
  %621 = vmatpush.xpose.msra.mxu0 0.0
  %622 = vmatpush.xpose.msra.mxu0 0.0
  %623 = vmatpush.xpose.msra.mxu0 0.0
  %624 = vmatpush.xpose.msra.mxu0 %v614
  %625 = vmatpush.xpose.msra.mxu0 %v612
  %626 = vmatpush.xpose.msra.mxu0 %v610
  %627 = vmatpush.xpose.msra.mxu0 %v608
  %628 = vmatpush.xpose.msra.mxu0 %v606
  %629 = vmatpush.xpose.msra.mxu0 %v604
  %630 = vmatpush.xpose.msra.mxu0 %v602
  %631 = vmatpush.xpose.msra.mxu0 %v600
  %632 = vmatmul.f32.gmra.mxu0 %v584
  %v633 = vpop.f32.mrf.mxu0
  %v634 = vadd.f32 0.0, %v633
  %635 = vmatmul.f32.gmra.mxu0 %v586
  %v636 = vpop.f32.mrf.mxu0
  %v637 = vadd.f32 0.0, %v636
  %638 = vmatmul.f32.gmra.mxu0 %v588
  %v639 = vpop.f32.mrf.mxu0
  %v640 = vadd.f32 0.0, %v639
  %641 = vmatmul.f32.gmra.mxu0 %v590
  %v642 = vpop.f32.mrf.mxu0
  %v643 = vadd.f32 0.0, %v642
  %644 = vmatmul.f32.gmra.mxu0 %v592
  %v645 = vpop.f32.mrf.mxu0
  %v646 = vadd.f32 0.0, %v645
  %647 = vmatmul.f32.gmra.mxu0 %v594
  %v648 = vpop.f32.mrf.mxu0
  %v649 = vadd.f32 0.0, %v648
  %650 = vmatmul.f32.gmra.mxu0 %v596
  %v651 = vpop.f32.mrf.mxu0
  %v652 = vadd.f32 0.0, %v651
  %653 = vmatmul.f32.gmra.mxu0 %v598
  %v654 = vpop.f32.mrf.mxu0
  %v655 = vadd.f32 0.0, %v654
  %656 = vdwg.mxu0
  %vm657 = vcmask 523264
  %v658 = vsel %vm657, %v634, -inf
  %659 = vmax.xlane.f32.xlu0 %v658
  %v660 = vpop.xlane.xlu0 %659
  %v661 = vsel %vm657, %v637, -inf
  %662 = vmax.xlane.f32.xlu0 %v661
  %v663 = vpop.xlane.xlu0 %662
  %v664 = vsel %vm657, %v640, -inf
  %665 = vmax.xlane.f32.xlu0 %v664
  %v666 = vpop.xlane.xlu0 %665
  %v667 = vsel %vm657, %v643, -inf
  %668 = vmax.xlane.f32.xlu0 %v667
  %v669 = vpop.xlane.xlu0 %668
  %v670 = vsel %vm657, %v646, -inf
  %671 = vmax.xlane.f32.xlu0 %v670
  %v672 = vpop.xlane.xlu0 %671
  %v673 = vsel %vm657, %v649, -inf
  %674 = vmax.xlane.f32.xlu0 %v673
  %v675 = vpop.xlane.xlu0 %674
  %v676 = vsel %vm657, %v652, -inf
  %677 = vmax.xlane.f32.xlu0 %v676
  %v678 = vpop.xlane.xlu0 %677
  %v679 = vsel %vm657, %v655, -inf
  %680 = vmax.xlane.f32.xlu0 %v679
  %v681 = vpop.xlane.xlu0 %680
  %v682 = vsub.f32 %v634, %v660
  %v683 = vsub.f32 %v637, %v663
  %v684 = vsub.f32 %v640, %v666
  %v685 = vsub.f32 %v643, %v669
  %v686 = vsub.f32 %v646, %v672
  %v687 = vsub.f32 %v649, %v675
  %v688 = vsub.f32 %v652, %v678
  %v689 = vsub.f32 %v655, %v681
  %v690 = vmul.f32 %v682, 1.442695
  %v691 = vpow.pop %v690
  %v692 = vmul.f32 %v683, 1.442695
  %v693 = vpow.pop %v692
  %v694 = vmul.f32 %v684, 1.442695
  %v695 = vpow.pop %v694
  %v696 = vmul.f32 %v685, 1.442695
  %v697 = vpow.pop %v696
  %v698 = vmul.f32 %v686, 1.442695
  %v699 = vpow.pop %v698
  %v700 = vmul.f32 %v687, 1.442695
  %v701 = vpow.pop %v700
  %v702 = vmul.f32 %v688, 1.442695
  %v703 = vpow.pop %v702
  %v704 = vmul.f32 %v689, 1.442695
  %v705 = vpow.pop %v704
  %v706 = vsel %vm657, %v691, 0.0
  %707 = vadd.xlane.f32.xlu0 %v706
  %v708 = vpop.xlane.xlu0 %707
  %v709 = vsel %vm657, %v693, 0.0
  %710 = vadd.xlane.f32.xlu0 %v709
  %v711 = vpop.xlane.xlu0 %710
  %v712 = vsel %vm657, %v695, 0.0
  %713 = vadd.xlane.f32.xlu0 %v712
  %v714 = vpop.xlane.xlu0 %713
  %v715 = vsel %vm657, %v697, 0.0
  %716 = vadd.xlane.f32.xlu0 %v715
  %v717 = vpop.xlane.xlu0 %716
  %v718 = vsel %vm657, %v699, 0.0
  %719 = vadd.xlane.f32.xlu0 %v718
  %v720 = vpop.xlane.xlu0 %719
  %v721 = vsel %vm657, %v701, 0.0
  %722 = vadd.xlane.f32.xlu0 %v721
  %v723 = vpop.xlane.xlu0 %722
  %v724 = vsel %vm657, %v703, 0.0
  %725 = vadd.xlane.f32.xlu0 %v724
  %v726 = vpop.xlane.xlu0 %725
  %v727 = vsel %vm657, %v705, 0.0
  %728 = vadd.xlane.f32.xlu0 %v727
  %v729 = vpop.xlane.xlu0 %728
  %v730 = vrcp.pop %v708
  %v731 = vmul.f32 %v708, %v730
  %v732 = vsub.f32 1.0, %v731
  %v733 = vmul.f32 %v730, %v732
  %v734 = vadd.f32 %v730, %v733
  %vm735 = vweird.f32 %v708
  %vm736 = vweird.f32 %v730
  %vm737 = vmor %vm735, %vm736
  %v738 = vsel %vm737, %v730, %v734
  %v739 = vand.u32 2147483647, %v708
  %vm740 = vcmp.eq.f32.partialorder %v739, 8.507059e+37
  %v741 = vand.u32 %v708, 2147483648
  %v742 = vor.u32 1.1754944e-38, %v741
  %v743 = vsel %vm740, %v742, %v738
  %v744 = vmul.f32 %v691, %v743
  %v745 = vrcp.pop %v711
  %v746 = vmul.f32 %v711, %v745
  %v747 = vsub.f32 1.0, %v746
  %v748 = vmul.f32 %v745, %v747
  %v749 = vadd.f32 %v745, %v748
  %vm750 = vweird.f32 %v711
  %vm751 = vweird.f32 %v745
  %vm752 = vmor %vm750, %vm751
  %v753 = vsel %vm752, %v745, %v749
  %v754 = vand.u32 2147483647, %v711
  %vm755 = vcmp.eq.f32.partialorder %v754, 8.507059e+37
  %v756 = vand.u32 %v711, 2147483648
  %v757 = vor.u32 1.1754944e-38, %v756
  %v758 = vsel %vm755, %v757, %v753
  %v759 = vmul.f32 %v693, %v758
  %v760 = vrcp.pop %v714
  %v761 = vmul.f32 %v714, %v760
  %v762 = vsub.f32 1.0, %v761
  %v763 = vmul.f32 %v760, %v762
  %v764 = vadd.f32 %v760, %v763
  %vm765 = vweird.f32 %v714
  %vm766 = vweird.f32 %v760
  %vm767 = vmor %vm765, %vm766
  %v768 = vsel %vm767, %v760, %v764
  %v769 = vand.u32 2147483647, %v714
  %vm770 = vcmp.eq.f32.partialorder %v769, 8.507059e+37
  %v771 = vand.u32 %v714, 2147483648
  %v772 = vor.u32 1.1754944e-38, %v771
  %v773 = vsel %vm770, %v772, %v768
  %v774 = vmul.f32 %v695, %v773
  %v775 = vrcp.pop %v717
  %v776 = vmul.f32 %v717, %v775
  %v777 = vsub.f32 1.0, %v776
  %v778 = vmul.f32 %v775, %v777
  %v779 = vadd.f32 %v775, %v778
  %vm780 = vweird.f32 %v717
  %vm781 = vweird.f32 %v775
  %vm782 = vmor %vm780, %vm781
  %v783 = vsel %vm782, %v775, %v779
  %v784 = vand.u32 2147483647, %v717
  %vm785 = vcmp.eq.f32.partialorder %v784, 8.507059e+37
  %v786 = vand.u32 %v717, 2147483648
  %v787 = vor.u32 1.1754944e-38, %v786
  %v788 = vsel %vm785, %v787, %v783
  %v789 = vmul.f32 %v697, %v788
  %v790 = vrcp.pop %v720
  %v791 = vmul.f32 %v720, %v790
  %v792 = vsub.f32 1.0, %v791
  %v793 = vmul.f32 %v790, %v792
  %v794 = vadd.f32 %v790, %v793
  %vm795 = vweird.f32 %v720
  %vm796 = vweird.f32 %v790
  %vm797 = vmor %vm795, %vm796
  %v798 = vsel %vm797, %v790, %v794
  %v799 = vand.u32 2147483647, %v720
  %vm800 = vcmp.eq.f32.partialorder %v799, 8.507059e+37
  %v801 = vand.u32 %v720, 2147483648
  %v802 = vor.u32 1.1754944e-38, %v801
  %v803 = vsel %vm800, %v802, %v798
  %v804 = vmul.f32 %v699, %v803
  %v805 = vrcp.pop %v723
  %v806 = vmul.f32 %v723, %v805
  %v807 = vsub.f32 1.0, %v806
  %v808 = vmul.f32 %v805, %v807
  %v809 = vadd.f32 %v805, %v808
  %vm810 = vweird.f32 %v723
  %vm811 = vweird.f32 %v805
  %vm812 = vmor %vm810, %vm811
  %v813 = vsel %vm812, %v805, %v809
  %v814 = vand.u32 2147483647, %v723
  %vm815 = vcmp.eq.f32.partialorder %v814, 8.507059e+37
  %v816 = vand.u32 %v723, 2147483648
  %v817 = vor.u32 1.1754944e-38, %v816
  %v818 = vsel %vm815, %v817, %v813
  %v819 = vmul.f32 %v701, %v818
  %v820 = vrcp.pop %v726
  %v821 = vmul.f32 %v726, %v820
  %v822 = vsub.f32 1.0, %v821
  %v823 = vmul.f32 %v820, %v822
  %v824 = vadd.f32 %v820, %v823
  %vm825 = vweird.f32 %v726
  %vm826 = vweird.f32 %v820
  %vm827 = vmor %vm825, %vm826
  %v828 = vsel %vm827, %v820, %v824
  %v829 = vand.u32 2147483647, %v726
  %vm830 = vcmp.eq.f32.partialorder %v829, 8.507059e+37
  %v831 = vand.u32 %v726, 2147483648
  %v832 = vor.u32 1.1754944e-38, %v831
  %v833 = vsel %vm830, %v832, %v828
  %v834 = vmul.f32 %v703, %v833
  %v835 = vrcp.pop %v729
  %v836 = vmul.f32 %v729, %v835
  %v837 = vsub.f32 1.0, %v836
  %v838 = vmul.f32 %v835, %v837
  %v839 = vadd.f32 %v835, %v838
  %vm840 = vweird.f32 %v729
  %vm841 = vweird.f32 %v835
  %vm842 = vmor %vm840, %vm841
  %v843 = vsel %vm842, %v835, %v839
  %v844 = vand.u32 2147483647, %v729
  %vm845 = vcmp.eq.f32.partialorder %v844, 8.507059e+37
  %v846 = vand.u32 %v729, 2147483648
  %v847 = vor.u32 1.1754944e-38, %v846
  %v848 = vsel %vm845, %v847, %v843
  %v849 = vmul.f32 %v705, %v848
  %850 = vrot.lane.b32.xlu0 %v512, 64
  %v851 = vpop.permute.xlu0 %850
  %852 = vrot.lane.b32.xlu0 %v515, 64
  %v853 = vpop.permute.xlu0 %852
  %854 = vrot.lane.b32.xlu0 %v518, 64
  %v855 = vpop.permute.xlu0 %854
  %856 = vrot.lane.b32.xlu0 %v521, 64
  %v857 = vpop.permute.xlu0 %856
  %858 = vrot.lane.b32.xlu0 %v524, 64
  %v859 = vpop.permute.xlu0 %858
  %860 = vrot.lane.b32.xlu0 %v527, 64
  %v861 = vpop.permute.xlu0 %860
  %862 = vrot.lane.b32.xlu0 %v530, 64
  %v863 = vpop.permute.xlu0 %862
  %864 = vrot.lane.b32.xlu0 %v533, 64
  %v865 = vpop.permute.xlu0 %864
  %v875 = vsel %vm657, %v744, 0
  %v878 = vsel %vm657, %v759, 0
  %v881 = vsel %vm657, %v774, 0
  %v884 = vsel %vm657, %v789, 0
  %v887 = vsel %vm657, %v804, 0
  %v890 = vsel %vm657, %v819, 0
  %v893 = vsel %vm657, %v834, 0
  %v896 = vsel %vm657, %v849, 0
  %898 = vmatpush.msra.mxu0 0.0
  %899 = vmatpush.msra.mxu0 0.0
  %900 = vmatpush.msra.mxu0 0.0
  %901 = vmatpush.msra.mxu0 0.0
  %902 = vmatpush.msra.mxu0 0.0
  %903 = vmatpush.msra.mxu0 0.0
  %904 = vmatpush.msra.mxu0 0.0
  %905 = vmatpush.msra.mxu0 0.0
  %906 = vmatpush.msra.mxu0 %v865
  %907 = vmatpush.msra.mxu0 %v863
  %908 = vmatpush.msra.mxu0 %v861
  %909 = vmatpush.msra.mxu0 %v859
  %910 = vmatpush.msra.mxu0 %v857
  %911 = vmatpush.msra.mxu0 %v855
  %912 = vmatpush.msra.mxu0 %v853
  %913 = vmatpush.msra.mxu0 %v851
  %914 = vmatmul.f32.gmra.mxu0 %v875
  %v915 = vpop.f32.mrf.mxu0
  %v916 = vadd.f32 0.0, %v915
  %917 = vmatmul.f32.gmra.mxu0 %v878
  %v918 = vpop.f32.mrf.mxu0
  %v919 = vadd.f32 0.0, %v918
  %920 = vmatmul.f32.gmra.mxu0 %v881
  %v921 = vpop.f32.mrf.mxu0
  %v922 = vadd.f32 0.0, %v921
  %923 = vmatmul.f32.gmra.mxu0 %v884
  %v924 = vpop.f32.mrf.mxu0
  %v925 = vadd.f32 0.0, %v924
  %926 = vmatmul.f32.gmra.mxu0 %v887
  %v927 = vpop.f32.mrf.mxu0
  %v928 = vadd.f32 0.0, %v927
  %929 = vmatmul.f32.gmra.mxu0 %v890
  %v930 = vpop.f32.mrf.mxu0
  %v931 = vadd.f32 0.0, %v930
  %932 = vmatmul.f32.gmra.mxu0 %v893
  %v933 = vpop.f32.mrf.mxu0
  %v934 = vadd.f32 0.0, %v933
  %935 = vmatmul.f32.gmra.mxu0 %v896
  %v936 = vpop.f32.mrf.mxu0
  %v937 = vadd.f32 0.0, %v936
  %938 = vdwg.mxu0
  %939 = vst.msk [vmem:[#allocation2] sm:$0xff] %vm583, %v916
  %940 = vst.msk [vmem:[#allocation2 + $0x8] sm:$0xff] %vm583, %v919
  %941 = vst.msk [vmem:[#allocation2 + $0x10] sm:$0xff] %vm583, %v922
  %942 = vst.msk [vmem:[#allocation2 + $0x18] sm:$0xff] %vm583, %v925
  %943 = vst.msk [vmem:[#allocation2 + $0x20] sm:$0xff] %vm583, %v928
  %944 = vst.msk [vmem:[#allocation2 + $0x28] sm:$0xff] %vm583, %v931
  %945 = vst.msk [vmem:[#allocation2 + $0x30] sm:$0xff] %vm583, %v934
  %946 = vst.msk [vmem:[#allocation2 + $0x38] sm:$0xff] %vm583, %v937
  %947 = vrot.lane.b32.xlu0 %v512, 120
  %v948 = vpop.permute.xlu0 %947
  %949 = vrot.lane.b32.xlu0 %v515, 120
  %v950 = vpop.permute.xlu0 %949
  %951 = vrot.lane.b32.xlu0 %v518, 120
  %v952 = vpop.permute.xlu0 %951
  %953 = vrot.lane.b32.xlu0 %v521, 120
  %v954 = vpop.permute.xlu0 %953
  %955 = vrot.lane.b32.xlu0 %v524, 120
  %v956 = vpop.permute.xlu0 %955
  %957 = vrot.lane.b32.xlu0 %v527, 120
  %v958 = vpop.permute.xlu0 %957
  %959 = vrot.lane.b32.xlu0 %v530, 120
  %v960 = vpop.permute.xlu0 %959
  %961 = vrot.lane.b32.xlu0 %v533, 120
  %v962 = vpop.permute.xlu0 %961
  %963 = vrot.lane.b32.xlu0 %v512, 88
  %v964 = vpop.permute.xlu0 %963
  %965 = vrot.lane.b32.xlu0 %v515, 88
  %v966 = vpop.permute.xlu0 %965
  %967 = vrot.lane.b32.xlu0 %v518, 88
  %v968 = vpop.permute.xlu0 %967
  %969 = vrot.lane.b32.xlu0 %v521, 88
  %v970 = vpop.permute.xlu0 %969
  %971 = vrot.lane.b32.xlu0 %v524, 88
  %v972 = vpop.permute.xlu0 %971
  %973 = vrot.lane.b32.xlu0 %v527, 88
  %v974 = vpop.permute.xlu0 %973
  %975 = vrot.lane.b32.xlu0 %v530, 88
  %v976 = vpop.permute.xlu0 %975
  %977 = vrot.lane.b32.xlu0 %v533, 88
  %v978 = vpop.permute.xlu0 %977
  %v979 = vsel %vm583, %v948, 0
  %v981 = vsel %vm583, %v950, 0
  %v983 = vsel %vm583, %v952, 0
  %v985 = vsel %vm583, %v954, 0
  %v987 = vsel %vm583, %v956, 0
  %v989 = vsel %vm583, %v958, 0
  %v991 = vsel %vm583, %v960, 0
  %v993 = vsel %vm583, %v962, 0
  %v995 = vsel %vm583, %v964, 0
  %v997 = vsel %vm583, %v966, 0
  %v999 = vsel %vm583, %v968, 0
  %v1001 = vsel %vm583, %v970, 0
  %v1003 = vsel %vm583, %v972, 0
  %v1005 = vsel %vm583, %v974, 0
  %v1007 = vsel %vm583, %v976, 0
  %v1009 = vsel %vm583, %v978, 0
  %1011 = vmatpush.xpose.msra.mxu0 0.0
  %1012 = vmatpush.xpose.msra.mxu0 0.0
  %1013 = vmatpush.xpose.msra.mxu0 0.0
  %1014 = vmatpush.xpose.msra.mxu0 0.0
  %1015 = vmatpush.xpose.msra.mxu0 0.0
  %1016 = vmatpush.xpose.msra.mxu0 0.0
  %1017 = vmatpush.xpose.msra.mxu0 0.0
  %1018 = vmatpush.xpose.msra.mxu0 0.0
  %1019 = vmatpush.xpose.msra.mxu0 %v1009
  %1020 = vmatpush.xpose.msra.mxu0 %v1007
  %1021 = vmatpush.xpose.msra.mxu0 %v1005
  %1022 = vmatpush.xpose.msra.mxu0 %v1003
  %1023 = vmatpush.xpose.msra.mxu0 %v1001
  %1024 = vmatpush.xpose.msra.mxu0 %v999
  %1025 = vmatpush.xpose.msra.mxu0 %v997
  %1026 = vmatpush.xpose.msra.mxu0 %v995
  %1027 = vmatmul.f32.gmra.mxu0 %v979
  %v1028 = vpop.f32.mrf.mxu0
  %v1029 = vadd.f32 0.0, %v1028
  %1030 = vmatmul.f32.gmra.mxu0 %v981
  %v1031 = vpop.f32.mrf.mxu0
  %v1032 = vadd.f32 0.0, %v1031
  %1033 = vmatmul.f32.gmra.mxu0 %v983
  %v1034 = vpop.f32.mrf.mxu0
  %v1035 = vadd.f32 0.0, %v1034
  %1036 = vmatmul.f32.gmra.mxu0 %v985
  %v1037 = vpop.f32.mrf.mxu0
  %v1038 = vadd.f32 0.0, %v1037
  %1039 = vmatmul.f32.gmra.mxu0 %v987
  %v1040 = vpop.f32.mrf.mxu0
  %v1041 = vadd.f32 0.0, %v1040
  %1042 = vmatmul.f32.gmra.mxu0 %v989
  %v1043 = vpop.f32.mrf.mxu0
  %v1044 = vadd.f32 0.0, %v1043
  %1045 = vmatmul.f32.gmra.mxu0 %v991
  %v1046 = vpop.f32.mrf.mxu0
  %v1047 = vadd.f32 0.0, %v1046
  %1048 = vmatmul.f32.gmra.mxu0 %v993
  %v1049 = vpop.f32.mrf.mxu0
  %v1050 = vadd.f32 0.0, %v1049
  %1051 = vdwg.mxu0
  %v1052 = vsel %vm657, %v1029, -inf
  %1053 = vmax.xlane.f32.xlu0 %v1052
  %v1054 = vpop.xlane.xlu0 %1053
  %v1055 = vsel %vm657, %v1032, -inf
  %1056 = vmax.xlane.f32.xlu0 %v1055
  %v1057 = vpop.xlane.xlu0 %1056
  %v1058 = vsel %vm657, %v1035, -inf
  %1059 = vmax.xlane.f32.xlu0 %v1058
  %v1060 = vpop.xlane.xlu0 %1059
  %v1061 = vsel %vm657, %v1038, -inf
  %1062 = vmax.xlane.f32.xlu0 %v1061
  %v1063 = vpop.xlane.xlu0 %1062
  %v1064 = vsel %vm657, %v1041, -inf
  %1065 = vmax.xlane.f32.xlu0 %v1064
  %v1066 = vpop.xlane.xlu0 %1065
  %v1067 = vsel %vm657, %v1044, -inf
  %1068 = vmax.xlane.f32.xlu0 %v1067
  %v1069 = vpop.xlane.xlu0 %1068
  %v1070 = vsel %vm657, %v1047, -inf
  %1071 = vmax.xlane.f32.xlu0 %v1070
  %v1072 = vpop.xlane.xlu0 %1071
  %v1073 = vsel %vm657, %v1050, -inf
  %1074 = vmax.xlane.f32.xlu0 %v1073
  %v1075 = vpop.xlane.xlu0 %1074
  %v1076 = vsub.f32 %v1029, %v1054
  %v1077 = vsub.f32 %v1032, %v1057
  %v1078 = vsub.f32 %v1035, %v1060
  %v1079 = vsub.f32 %v1038, %v1063
  %v1080 = vsub.f32 %v1041, %v1066
  %v1081 = vsub.f32 %v1044, %v1069
  %v1082 = vsub.f32 %v1047, %v1072
  %v1083 = vsub.f32 %v1050, %v1075
  %v1084 = vmul.f32 %v1076, 1.442695
  %v1085 = vpow.pop %v1084
  %v1086 = vmul.f32 %v1077, 1.442695
  %v1087 = vpow.pop %v1086
  %v1088 = vmul.f32 %v1078, 1.442695
  %v1089 = vpow.pop %v1088
  %v1090 = vmul.f32 %v1079, 1.442695
  %v1091 = vpow.pop %v1090
  %v1092 = vmul.f32 %v1080, 1.442695
  %v1093 = vpow.pop %v1092
  %v1094 = vmul.f32 %v1081, 1.442695
  %v1095 = vpow.pop %v1094
  %v1096 = vmul.f32 %v1082, 1.442695
  %v1097 = vpow.pop %v1096
  %v1098 = vmul.f32 %v1083, 1.442695
  %v1099 = vpow.pop %v1098
  %v1100 = vsel %vm657, %v1085, 0.0
  %1101 = vadd.xlane.f32.xlu0 %v1100
  %v1102 = vpop.xlane.xlu0 %1101
  %v1103 = vsel %vm657, %v1087, 0.0
  %1104 = vadd.xlane.f32.xlu0 %v1103
  %v1105 = vpop.xlane.xlu0 %1104
  %v1106 = vsel %vm657, %v1089, 0.0
  %1107 = vadd.xlane.f32.xlu0 %v1106
  %v1108 = vpop.xlane.xlu0 %1107
  %v1109 = vsel %vm657, %v1091, 0.0
  %1110 = vadd.xlane.f32.xlu0 %v1109
  %v1111 = vpop.xlane.xlu0 %1110
  %v1112 = vsel %vm657, %v1093, 0.0
  %1113 = vadd.xlane.f32.xlu0 %v1112
  %v1114 = vpop.xlane.xlu0 %1113
  %v1115 = vsel %vm657, %v1095, 0.0
  %1116 = vadd.xlane.f32.xlu0 %v1115
  %v1117 = vpop.xlane.xlu0 %1116
  %v1118 = vsel %vm657, %v1097, 0.0
  %1119 = vadd.xlane.f32.xlu0 %v1118
  %v1120 = vpop.xlane.xlu0 %1119
  %v1121 = vsel %vm657, %v1099, 0.0
  %1122 = vadd.xlane.f32.xlu0 %v1121
  %v1123 = vpop.xlane.xlu0 %1122
  %v1124 = vrcp.pop %v1102
  %v1125 = vmul.f32 %v1102, %v1124
  %v1126 = vsub.f32 1.0, %v1125
  %v1127 = vmul.f32 %v1124, %v1126
  %v1128 = vadd.f32 %v1124, %v1127
  %vm1129 = vweird.f32 %v1102
  %vm1130 = vweird.f32 %v1124
  %vm1131 = vmor %vm1129, %vm1130
  %v1132 = vsel %vm1131, %v1124, %v1128
  %v1133 = vand.u32 2147483647, %v1102
  %vm1134 = vcmp.eq.f32.partialorder %v1133, 8.507059e+37
  %v1135 = vand.u32 %v1102, 2147483648
  %v1136 = vor.u32 1.1754944e-38, %v1135
  %v1137 = vsel %vm1134, %v1136, %v1132
  %v1138 = vmul.f32 %v1085, %v1137
  %v1139 = vrcp.pop %v1105
  %v1140 = vmul.f32 %v1105, %v1139
  %v1141 = vsub.f32 1.0, %v1140
  %v1142 = vmul.f32 %v1139, %v1141
  %v1143 = vadd.f32 %v1139, %v1142
  %vm1144 = vweird.f32 %v1105
  %vm1145 = vweird.f32 %v1139
  %vm1146 = vmor %vm1144, %vm1145
  %v1147 = vsel %vm1146, %v1139, %v1143
  %v1148 = vand.u32 2147483647, %v1105
  %vm1149 = vcmp.eq.f32.partialorder %v1148, 8.507059e+37
  %v1150 = vand.u32 %v1105, 2147483648
  %v1151 = vor.u32 1.1754944e-38, %v1150
  %v1152 = vsel %vm1149, %v1151, %v1147
  %v1153 = vmul.f32 %v1087, %v1152
  %v1154 = vrcp.pop %v1108
  %v1155 = vmul.f32 %v1108, %v1154
  %v1156 = vsub.f32 1.0, %v1155
  %v1157 = vmul.f32 %v1154, %v1156
  %v1158 = vadd.f32 %v1154, %v1157
  %vm1159 = vweird.f32 %v1108
  %vm1160 = vweird.f32 %v1154
  %vm1161 = vmor %vm1159, %vm1160
  %v1162 = vsel %vm1161, %v1154, %v1158
  %v1163 = vand.u32 2147483647, %v1108
  %vm1164 = vcmp.eq.f32.partialorder %v1163, 8.507059e+37
  %v1165 = vand.u32 %v1108, 2147483648
  %v1166 = vor.u32 1.1754944e-38, %v1165
  %v1167 = vsel %vm1164, %v1166, %v1162
  %v1168 = vmul.f32 %v1089, %v1167
  %v1169 = vrcp.pop %v1111
  %v1170 = vmul.f32 %v1111, %v1169
  %v1171 = vsub.f32 1.0, %v1170
  %v1172 = vmul.f32 %v1169, %v1171
  %v1173 = vadd.f32 %v1169, %v1172
  %vm1174 = vweird.f32 %v1111
  %vm1175 = vweird.f32 %v1169
  %vm1176 = vmor %vm1174, %vm1175
  %v1177 = vsel %vm1176, %v1169, %v1173
  %v1178 = vand.u32 2147483647, %v1111
  %vm1179 = vcmp.eq.f32.partialorder %v1178, 8.507059e+37
  %v1180 = vand.u32 %v1111, 2147483648
  %v1181 = vor.u32 1.1754944e-38, %v1180
  %v1182 = vsel %vm1179, %v1181, %v1177
  %v1183 = vmul.f32 %v1091, %v1182
  %v1184 = vrcp.pop %v1114
  %v1185 = vmul.f32 %v1114, %v1184
  %v1186 = vsub.f32 1.0, %v1185
  %v1187 = vmul.f32 %v1184, %v1186
  %v1188 = vadd.f32 %v1184, %v1187
  %vm1189 = vweird.f32 %v1114
  %vm1190 = vweird.f32 %v1184
  %vm1191 = vmor %vm1189, %vm1190
  %v1192 = vsel %vm1191, %v1184, %v1188
  %v1193 = vand.u32 2147483647, %v1114
  %vm1194 = vcmp.eq.f32.partialorder %v1193, 8.507059e+37
  %v1195 = vand.u32 %v1114, 2147483648
  %v1196 = vor.u32 1.1754944e-38, %v1195
  %v1197 = vsel %vm1194, %v1196, %v1192
  %v1198 = vmul.f32 %v1093, %v1197
  %v1199 = vrcp.pop %v1117
  %v1200 = vmul.f32 %v1117, %v1199
  %v1201 = vsub.f32 1.0, %v1200
  %v1202 = vmul.f32 %v1199, %v1201
  %v1203 = vadd.f32 %v1199, %v1202
  %vm1204 = vweird.f32 %v1117
  %vm1205 = vweird.f32 %v1199
  %vm1206 = vmor %vm1204, %vm1205
  %v1207 = vsel %vm1206, %v1199, %v1203
  %v1208 = vand.u32 2147483647, %v1117
  %vm1209 = vcmp.eq.f32.partialorder %v1208, 8.507059e+37
  %v1210 = vand.u32 %v1117, 2147483648
  %v1211 = vor.u32 1.1754944e-38, %v1210
  %v1212 = vsel %vm1209, %v1211, %v1207
  %v1213 = vmul.f32 %v1095, %v1212
  %v1214 = vrcp.pop %v1120
  %v1215 = vmul.f32 %v1120, %v1214
  %v1216 = vsub.f32 1.0, %v1215
  %v1217 = vmul.f32 %v1214, %v1216
  %v1218 = vadd.f32 %v1214, %v1217
  %vm1219 = vweird.f32 %v1120
  %vm1220 = vweird.f32 %v1214
  %vm1221 = vmor %vm1219, %vm1220
  %v1222 = vsel %vm1221, %v1214, %v1218
  %v1223 = vand.u32 2147483647, %v1120
  %vm1224 = vcmp.eq.f32.partialorder %v1223, 8.507059e+37
  %v1225 = vand.u32 %v1120, 2147483648
  %v1226 = vor.u32 1.1754944e-38, %v1225
  %v1227 = vsel %vm1224, %v1226, %v1222
  %v1228 = vmul.f32 %v1097, %v1227
  %v1229 = vrcp.pop %v1123
  %v1230 = vmul.f32 %v1123, %v1229
  %v1231 = vsub.f32 1.0, %v1230
  %v1232 = vmul.f32 %v1229, %v1231
  %v1233 = vadd.f32 %v1229, %v1232
  %vm1234 = vweird.f32 %v1123
  %vm1235 = vweird.f32 %v1229
  %vm1236 = vmor %vm1234, %vm1235
  %v1237 = vsel %vm1236, %v1229, %v1233
  %v1238 = vand.u32 2147483647, %v1123
  %vm1239 = vcmp.eq.f32.partialorder %v1238, 8.507059e+37
  %v1240 = vand.u32 %v1123, 2147483648
  %v1241 = vor.u32 1.1754944e-38, %v1240
  %v1242 = vsel %vm1239, %v1241, %v1237
  %v1243 = vmul.f32 %v1099, %v1242
  %1244 = vrot.lane.b32.xlu0 %v512, 56
  %v1245 = vpop.permute.xlu0 %1244
  %1246 = vrot.lane.b32.xlu0 %v515, 56
  %v1247 = vpop.permute.xlu0 %1246
  %1248 = vrot.lane.b32.xlu0 %v518, 56
  %v1249 = vpop.permute.xlu0 %1248
  %1250 = vrot.lane.b32.xlu0 %v521, 56
  %v1251 = vpop.permute.xlu0 %1250
  %1252 = vrot.lane.b32.xlu0 %v524, 56
  %v1253 = vpop.permute.xlu0 %1252
  %1254 = vrot.lane.b32.xlu0 %v527, 56
  %v1255 = vpop.permute.xlu0 %1254
  %1256 = vrot.lane.b32.xlu0 %v530, 56
  %v1257 = vpop.permute.xlu0 %1256
  %1258 = vrot.lane.b32.xlu0 %v533, 56
  %v1259 = vpop.permute.xlu0 %1258
  %v1269 = vsel %vm657, %v1138, 0
  %v1272 = vsel %vm657, %v1153, 0
  %v1275 = vsel %vm657, %v1168, 0
  %v1278 = vsel %vm657, %v1183, 0
  %v1281 = vsel %vm657, %v1198, 0
  %v1284 = vsel %vm657, %v1213, 0
  %v1287 = vsel %vm657, %v1228, 0
  %v1290 = vsel %vm657, %v1243, 0
  %1292 = vmatpush.msra.mxu0 0.0
  %1293 = vmatpush.msra.mxu0 0.0
  %1294 = vmatpush.msra.mxu0 0.0
  %1295 = vmatpush.msra.mxu0 0.0
  %1296 = vmatpush.msra.mxu0 0.0
  %1297 = vmatpush.msra.mxu0 0.0
  %1298 = vmatpush.msra.mxu0 0.0
  %1299 = vmatpush.msra.mxu0 0.0
  %1300 = vmatpush.msra.mxu0 %v1259
  %1301 = vmatpush.msra.mxu0 %v1257
  %1302 = vmatpush.msra.mxu0 %v1255
  %1303 = vmatpush.msra.mxu0 %v1253
  %1304 = vmatpush.msra.mxu0 %v1251
  %1305 = vmatpush.msra.mxu0 %v1249
  %1306 = vmatpush.msra.mxu0 %v1247
  %1307 = vmatpush.msra.mxu0 %v1245
  %1308 = vmatmul.f32.gmra.mxu0 %v1269
  %v1309 = vpop.f32.mrf.mxu0
  %v1310 = vadd.f32 0.0, %v1309
  %1311 = vmatmul.f32.gmra.mxu0 %v1272
  %v1312 = vpop.f32.mrf.mxu0
  %v1313 = vadd.f32 0.0, %v1312
  %1314 = vmatmul.f32.gmra.mxu0 %v1275
  %v1315 = vpop.f32.mrf.mxu0
  %v1316 = vadd.f32 0.0, %v1315
  %1317 = vmatmul.f32.gmra.mxu0 %v1278
  %v1318 = vpop.f32.mrf.mxu0
  %v1319 = vadd.f32 0.0, %v1318
  %1320 = vmatmul.f32.gmra.mxu0 %v1281
  %v1321 = vpop.f32.mrf.mxu0
  %v1322 = vadd.f32 0.0, %v1321
  %1323 = vmatmul.f32.gmra.mxu0 %v1284
  %v1324 = vpop.f32.mrf.mxu0
  %v1325 = vadd.f32 0.0, %v1324
  %1326 = vmatmul.f32.gmra.mxu0 %v1287
  %v1327 = vpop.f32.mrf.mxu0
  %v1328 = vadd.f32 0.0, %v1327
  %1329 = vmatmul.f32.gmra.mxu0 %v1290
  %v1330 = vpop.f32.mrf.mxu0
  %v1331 = vadd.f32 0.0, %v1330
  %1332 = vdwg.mxu0
  %1341 = vrot.lane.b32.xlu0 %v1310, 8
  %v1342 = vpop.permute.xlu0 %1341
  %1343 = vrot.lane.b32.xlu0 %v1313, 8
  %v1344 = vpop.permute.xlu0 %1343
  %1345 = vrot.lane.b32.xlu0 %v1316, 8
  %v1346 = vpop.permute.xlu0 %1345
  %1347 = vrot.lane.b32.xlu0 %v1319, 8
  %v1348 = vpop.permute.xlu0 %1347
  %1349 = vrot.lane.b32.xlu0 %v1322, 8
  %v1350 = vpop.permute.xlu0 %1349
  %1351 = vrot.lane.b32.xlu0 %v1325, 8
  %v1352 = vpop.permute.xlu0 %1351
  %1353 = vrot.lane.b32.xlu0 %v1328, 8
  %v1354 = vpop.permute.xlu0 %1353
  %1355 = vrot.lane.b32.xlu0 %v1331, 8
  %v1356 = vpop.permute.xlu0 %1355
  %vm1365 = vcmask 130112
  %1366 = vst.msk [vmem:[#allocation2] sm:$0xff] %vm1365, %v1342
  %1367 = vst.msk [vmem:[#allocation2 + $0x8] sm:$0xff] %vm1365, %v1344
  %1368 = vst.msk [vmem:[#allocation2 + $0x10] sm:$0xff] %vm1365, %v1346
  %1369 = vst.msk [vmem:[#allocation2 + $0x18] sm:$0xff] %vm1365, %v1348
  %1370 = vst.msk [vmem:[#allocation2 + $0x20] sm:$0xff] %vm1365, %v1350
  %1371 = vst.msk [vmem:[#allocation2 + $0x28] sm:$0xff] %vm1365, %v1352
  %1372 = vst.msk [vmem:[#allocation2 + $0x30] sm:$0xff] %vm1365, %v1354
  %1373 = vst.msk [vmem:[#allocation2 + $0x38] sm:$0xff] %vm1365, %v1356
  %1374 = vrot.lane.b32.xlu0 %v512, 112
  %v1375 = vpop.permute.xlu0 %1374
  %1376 = vrot.lane.b32.xlu0 %v515, 112
  %v1377 = vpop.permute.xlu0 %1376
  %1378 = vrot.lane.b32.xlu0 %v518, 112
  %v1379 = vpop.permute.xlu0 %1378
  %1380 = vrot.lane.b32.xlu0 %v521, 112
  %v1381 = vpop.permute.xlu0 %1380
  %1382 = vrot.lane.b32.xlu0 %v524, 112
  %v1383 = vpop.permute.xlu0 %1382
  %1384 = vrot.lane.b32.xlu0 %v527, 112
  %v1385 = vpop.permute.xlu0 %1384
  %1386 = vrot.lane.b32.xlu0 %v530, 112
  %v1387 = vpop.permute.xlu0 %1386
  %1388 = vrot.lane.b32.xlu0 %v533, 112
  %v1389 = vpop.permute.xlu0 %1388
  %1390 = vrot.lane.b32.xlu0 %v512, 80
  %v1391 = vpop.permute.xlu0 %1390
  %1392 = vrot.lane.b32.xlu0 %v515, 80
  %v1393 = vpop.permute.xlu0 %1392
  %1394 = vrot.lane.b32.xlu0 %v518, 80
  %v1395 = vpop.permute.xlu0 %1394
  %1396 = vrot.lane.b32.xlu0 %v521, 80
  %v1397 = vpop.permute.xlu0 %1396
  %1398 = vrot.lane.b32.xlu0 %v524, 80
  %v1399 = vpop.permute.xlu0 %1398
  %1400 = vrot.lane.b32.xlu0 %v527, 80
  %v1401 = vpop.permute.xlu0 %1400
  %1402 = vrot.lane.b32.xlu0 %v530, 80
  %v1403 = vpop.permute.xlu0 %1402
  %1404 = vrot.lane.b32.xlu0 %v533, 80
  %v1405 = vpop.permute.xlu0 %1404
  %v1406 = vsel %vm583, %v1375, 0
  %v1408 = vsel %vm583, %v1377, 0
  %v1410 = vsel %vm583, %v1379, 0
  %v1412 = vsel %vm583, %v1381, 0
  %v1414 = vsel %vm583, %v1383, 0
  %v1416 = vsel %vm583, %v1385, 0
  %v1418 = vsel %vm583, %v1387, 0
  %v1420 = vsel %vm583, %v1389, 0
  %v1422 = vsel %vm583, %v1391, 0
  %v1424 = vsel %vm583, %v1393, 0
  %v1426 = vsel %vm583, %v1395, 0
  %v1428 = vsel %vm583, %v1397, 0
  %v1430 = vsel %vm583, %v1399, 0
  %v1432 = vsel %vm583, %v1401, 0
  %v1434 = vsel %vm583, %v1403, 0
  %v1436 = vsel %vm583, %v1405, 0
  %1438 = vmatpush.xpose.msra.mxu0 0.0
  %1439 = vmatpush.xpose.msra.mxu0 0.0
  %1440 = vmatpush.xpose.msra.mxu0 0.0
  %1441 = vmatpush.xpose.msra.mxu0 0.0
  %1442 = vmatpush.xpose.msra.mxu0 0.0
  %1443 = vmatpush.xpose.msra.mxu0 0.0
  %1444 = vmatpush.xpose.msra.mxu0 0.0
  %1445 = vmatpush.xpose.msra.mxu0 0.0
  %1446 = vmatpush.xpose.msra.mxu0 %v1436
  %1447 = vmatpush.xpose.msra.mxu0 %v1434
  %1448 = vmatpush.xpose.msra.mxu0 %v1432
  %1449 = vmatpush.xpose.msra.mxu0 %v1430
  %1450 = vmatpush.xpose.msra.mxu0 %v1428
  %1451 = vmatpush.xpose.msra.mxu0 %v1426
  %1452 = vmatpush.xpose.msra.mxu0 %v1424
  %1453 = vmatpush.xpose.msra.mxu0 %v1422
  %1454 = vmatmul.f32.gmra.mxu0 %v1406
  %v1455 = vpop.f32.mrf.mxu0
  %v1456 = vadd.f32 0.0, %v1455
  %1457 = vmatmul.f32.gmra.mxu0 %v1408
  %v1458 = vpop.f32.mrf.mxu0
  %v1459 = vadd.f32 0.0, %v1458
  %1460 = vmatmul.f32.gmra.mxu0 %v1410
  %v1461 = vpop.f32.mrf.mxu0
  %v1462 = vadd.f32 0.0, %v1461
  %1463 = vmatmul.f32.gmra.mxu0 %v1412
  %v1464 = vpop.f32.mrf.mxu0
  %v1465 = vadd.f32 0.0, %v1464
  %1466 = vmatmul.f32.gmra.mxu0 %v1414
  %v1467 = vpop.f32.mrf.mxu0
  %v1468 = vadd.f32 0.0, %v1467
  %1469 = vmatmul.f32.gmra.mxu0 %v1416
  %v1470 = vpop.f32.mrf.mxu0
  %v1471 = vadd.f32 0.0, %v1470
  %1472 = vmatmul.f32.gmra.mxu0 %v1418
  %v1473 = vpop.f32.mrf.mxu0
  %v1474 = vadd.f32 0.0, %v1473
  %1475 = vmatmul.f32.gmra.mxu0 %v1420
  %v1476 = vpop.f32.mrf.mxu0
  %v1477 = vadd.f32 0.0, %v1476
  %1478 = vdwg.mxu0
  %v1479 = vsel %vm657, %v1456, -inf
  %1480 = vmax.xlane.f32.xlu0 %v1479
  %v1481 = vpop.xlane.xlu0 %1480
  %v1482 = vsel %vm657, %v1459, -inf
  %1483 = vmax.xlane.f32.xlu0 %v1482
  %v1484 = vpop.xlane.xlu0 %1483
  %v1485 = vsel %vm657, %v1462, -inf
  %1486 = vmax.xlane.f32.xlu0 %v1485
  %v1487 = vpop.xlane.xlu0 %1486
  %v1488 = vsel %vm657, %v1465, -inf
  %1489 = vmax.xlane.f32.xlu0 %v1488
  %v1490 = vpop.xlane.xlu0 %1489
  %v1491 = vsel %vm657, %v1468, -inf
  %1492 = vmax.xlane.f32.xlu0 %v1491
  %v1493 = vpop.xlane.xlu0 %1492
  %v1494 = vsel %vm657, %v1471, -inf
  %1495 = vmax.xlane.f32.xlu0 %v1494
  %v1496 = vpop.xlane.xlu0 %1495
  %v1497 = vsel %vm657, %v1474, -inf
  %1498 = vmax.xlane.f32.xlu0 %v1497
  %v1499 = vpop.xlane.xlu0 %1498
  %v1500 = vsel %vm657, %v1477, -inf
  %1501 = vmax.xlane.f32.xlu0 %v1500
  %v1502 = vpop.xlane.xlu0 %1501
  %v1503 = vsub.f32 %v1456, %v1481
  %v1504 = vsub.f32 %v1459, %v1484
  %v1505 = vsub.f32 %v1462, %v1487
  %v1506 = vsub.f32 %v1465, %v1490
  %v1507 = vsub.f32 %v1468, %v1493
  %v1508 = vsub.f32 %v1471, %v1496
  %v1509 = vsub.f32 %v1474, %v1499
  %v1510 = vsub.f32 %v1477, %v1502
  %v1511 = vmul.f32 %v1503, 1.442695
  %v1512 = vpow.pop %v1511
  %v1513 = vmul.f32 %v1504, 1.442695
  %v1514 = vpow.pop %v1513
  %v1515 = vmul.f32 %v1505, 1.442695
  %v1516 = vpow.pop %v1515
  %v1517 = vmul.f32 %v1506, 1.442695
  %v1518 = vpow.pop %v1517
  %v1519 = vmul.f32 %v1507, 1.442695
  %v1520 = vpow.pop %v1519
  %v1521 = vmul.f32 %v1508, 1.442695
  %v1522 = vpow.pop %v1521
  %v1523 = vmul.f32 %v1509, 1.442695
  %v1524 = vpow.pop %v1523
  %v1525 = vmul.f32 %v1510, 1.442695
  %v1526 = vpow.pop %v1525
  %v1527 = vsel %vm657, %v1512, 0.0
  %1528 = vadd.xlane.f32.xlu0 %v1527
  %v1529 = vpop.xlane.xlu0 %1528
  %v1530 = vsel %vm657, %v1514, 0.0
  %1531 = vadd.xlane.f32.xlu0 %v1530
  %v1532 = vpop.xlane.xlu0 %1531
  %v1533 = vsel %vm657, %v1516, 0.0
  %1534 = vadd.xlane.f32.xlu0 %v1533
  %v1535 = vpop.xlane.xlu0 %1534
  %v1536 = vsel %vm657, %v1518, 0.0
  %1537 = vadd.xlane.f32.xlu0 %v1536
  %v1538 = vpop.xlane.xlu0 %1537
  %v1539 = vsel %vm657, %v1520, 0.0
  %1540 = vadd.xlane.f32.xlu0 %v1539
  %v1541 = vpop.xlane.xlu0 %1540
  %v1542 = vsel %vm657, %v1522, 0.0
  %1543 = vadd.xlane.f32.xlu0 %v1542
  %v1544 = vpop.xlane.xlu0 %1543
  %v1545 = vsel %vm657, %v1524, 0.0
  %1546 = vadd.xlane.f32.xlu0 %v1545
  %v1547 = vpop.xlane.xlu0 %1546
  %v1548 = vsel %vm657, %v1526, 0.0
  %1549 = vadd.xlane.f32.xlu0 %v1548
  %v1550 = vpop.xlane.xlu0 %1549
  %v1551 = vrcp.pop %v1529
  %v1552 = vmul.f32 %v1529, %v1551
  %v1553 = vsub.f32 1.0, %v1552
  %v1554 = vmul.f32 %v1551, %v1553
  %v1555 = vadd.f32 %v1551, %v1554
  %vm1556 = vweird.f32 %v1529
  %vm1557 = vweird.f32 %v1551
  %vm1558 = vmor %vm1556, %vm1557
  %v1559 = vsel %vm1558, %v1551, %v1555
  %v1560 = vand.u32 2147483647, %v1529
  %vm1561 = vcmp.eq.f32.partialorder %v1560, 8.507059e+37
  %v1562 = vand.u32 %v1529, 2147483648
  %v1563 = vor.u32 1.1754944e-38, %v1562
  %v1564 = vsel %vm1561, %v1563, %v1559
  %v1565 = vmul.f32 %v1512, %v1564
  %v1566 = vrcp.pop %v1532
  %v1567 = vmul.f32 %v1532, %v1566
  %v1568 = vsub.f32 1.0, %v1567
  %v1569 = vmul.f32 %v1566, %v1568
  %v1570 = vadd.f32 %v1566, %v1569
  %vm1571 = vweird.f32 %v1532
  %vm1572 = vweird.f32 %v1566
  %vm1573 = vmor %vm1571, %vm1572
  %v1574 = vsel %vm1573, %v1566, %v1570
  %v1575 = vand.u32 2147483647, %v1532
  %vm1576 = vcmp.eq.f32.partialorder %v1575, 8.507059e+37
  %v1577 = vand.u32 %v1532, 2147483648
  %v1578 = vor.u32 1.1754944e-38, %v1577
  %v1579 = vsel %vm1576, %v1578, %v1574
  %v1580 = vmul.f32 %v1514, %v1579
  %v1581 = vrcp.pop %v1535
  %v1582 = vmul.f32 %v1535, %v1581
  %v1583 = vsub.f32 1.0, %v1582
  %v1584 = vmul.f32 %v1581, %v1583
  %v1585 = vadd.f32 %v1581, %v1584
  %vm1586 = vweird.f32 %v1535
  %vm1587 = vweird.f32 %v1581
  %vm1588 = vmor %vm1586, %vm1587
  %v1589 = vsel %vm1588, %v1581, %v1585
  %v1590 = vand.u32 2147483647, %v1535
  %vm1591 = vcmp.eq.f32.partialorder %v1590, 8.507059e+37
  %v1592 = vand.u32 %v1535, 2147483648
  %v1593 = vor.u32 1.1754944e-38, %v1592
  %v1594 = vsel %vm1591, %v1593, %v1589
  %v1595 = vmul.f32 %v1516, %v1594
  %v1596 = vrcp.pop %v1538
  %v1597 = vmul.f32 %v1538, %v1596
  %v1598 = vsub.f32 1.0, %v1597
  %v1599 = vmul.f32 %v1596, %v1598
  %v1600 = vadd.f32 %v1596, %v1599
  %vm1601 = vweird.f32 %v1538
  %vm1602 = vweird.f32 %v1596
  %vm1603 = vmor %vm1601, %vm1602
  %v1604 = vsel %vm1603, %v1596, %v1600
  %v1605 = vand.u32 2147483647, %v1538
  %vm1606 = vcmp.eq.f32.partialorder %v1605, 8.507059e+37
  %v1607 = vand.u32 %v1538, 2147483648
  %v1608 = vor.u32 1.1754944e-38, %v1607
  %v1609 = vsel %vm1606, %v1608, %v1604
  %v1610 = vmul.f32 %v1518, %v1609
  %v1611 = vrcp.pop %v1541
  %v1612 = vmul.f32 %v1541, %v1611
  %v1613 = vsub.f32 1.0, %v1612
  %v1614 = vmul.f32 %v1611, %v1613
  %v1615 = vadd.f32 %v1611, %v1614
  %vm1616 = vweird.f32 %v1541
  %vm1617 = vweird.f32 %v1611
  %vm1618 = vmor %vm1616, %vm1617
  %v1619 = vsel %vm1618, %v1611, %v1615
  %v1620 = vand.u32 2147483647, %v1541
  %vm1621 = vcmp.eq.f32.partialorder %v1620, 8.507059e+37
  %v1622 = vand.u32 %v1541, 2147483648
  %v1623 = vor.u32 1.1754944e-38, %v1622
  %v1624 = vsel %vm1621, %v1623, %v1619
  %v1625 = vmul.f32 %v1520, %v1624
  %v1626 = vrcp.pop %v1544
  %v1627 = vmul.f32 %v1544, %v1626
  %v1628 = vsub.f32 1.0, %v1627
  %v1629 = vmul.f32 %v1626, %v1628
  %v1630 = vadd.f32 %v1626, %v1629
  %vm1631 = vweird.f32 %v1544
  %vm1632 = vweird.f32 %v1626
  %vm1633 = vmor %vm1631, %vm1632
  %v1634 = vsel %vm1633, %v1626, %v1630
  %v1635 = vand.u32 2147483647, %v1544
  %vm1636 = vcmp.eq.f32.partialorder %v1635, 8.507059e+37
  %v1637 = vand.u32 %v1544, 2147483648
  %v1638 = vor.u32 1.1754944e-38, %v1637
  %v1639 = vsel %vm1636, %v1638, %v1634
  %v1640 = vmul.f32 %v1522, %v1639
  %v1641 = vrcp.pop %v1547
  %v1642 = vmul.f32 %v1547, %v1641
  %v1643 = vsub.f32 1.0, %v1642
  %v1644 = vmul.f32 %v1641, %v1643
  %v1645 = vadd.f32 %v1641, %v1644
  %vm1646 = vweird.f32 %v1547
  %vm1647 = vweird.f32 %v1641
  %vm1648 = vmor %vm1646, %vm1647
  %v1649 = vsel %vm1648, %v1641, %v1645
  %v1650 = vand.u32 2147483647, %v1547
  %vm1651 = vcmp.eq.f32.partialorder %v1650, 8.507059e+37
  %v1652 = vand.u32 %v1547, 2147483648
  %v1653 = vor.u32 1.1754944e-38, %v1652
  %v1654 = vsel %vm1651, %v1653, %v1649
  %v1655 = vmul.f32 %v1524, %v1654
  %v1656 = vrcp.pop %v1550
  %v1657 = vmul.f32 %v1550, %v1656
  %v1658 = vsub.f32 1.0, %v1657
  %v1659 = vmul.f32 %v1656, %v1658
  %v1660 = vadd.f32 %v1656, %v1659
  %vm1661 = vweird.f32 %v1550
  %vm1662 = vweird.f32 %v1656
  %vm1663 = vmor %vm1661, %vm1662
  %v1664 = vsel %vm1663, %v1656, %v1660
  %v1665 = vand.u32 2147483647, %v1550
  %vm1666 = vcmp.eq.f32.partialorder %v1665, 8.507059e+37
  %v1667 = vand.u32 %v1550, 2147483648
  %v1668 = vor.u32 1.1754944e-38, %v1667
  %v1669 = vsel %vm1666, %v1668, %v1664
  %v1670 = vmul.f32 %v1526, %v1669
  %1671 = vrot.lane.b32.xlu0 %v512, 48
  %v1672 = vpop.permute.xlu0 %1671
  %1673 = vrot.lane.b32.xlu0 %v515, 48
  %v1674 = vpop.permute.xlu0 %1673
  %1675 = vrot.lane.b32.xlu0 %v518, 48
  %v1676 = vpop.permute.xlu0 %1675
  %1677 = vrot.lane.b32.xlu0 %v521, 48
  %v1678 = vpop.permute.xlu0 %1677
  %1679 = vrot.lane.b32.xlu0 %v524, 48
  %v1680 = vpop.permute.xlu0 %1679
  %1681 = vrot.lane.b32.xlu0 %v527, 48
  %v1682 = vpop.permute.xlu0 %1681
  %1683 = vrot.lane.b32.xlu0 %v530, 48
  %v1684 = vpop.permute.xlu0 %1683
  %1685 = vrot.lane.b32.xlu0 %v533, 48
  %v1686 = vpop.permute.xlu0 %1685
  %v1696 = vsel %vm657, %v1565, 0
  %v1699 = vsel %vm657, %v1580, 0
  %v1702 = vsel %vm657, %v1595, 0
  %v1705 = vsel %vm657, %v1610, 0
  %v1708 = vsel %vm657, %v1625, 0
  %v1711 = vsel %vm657, %v1640, 0
  %v1714 = vsel %vm657, %v1655, 0
  %v1717 = vsel %vm657, %v1670, 0
  %1719 = vmatpush.msra.mxu0 0.0
  %1720 = vmatpush.msra.mxu0 0.0
  %1721 = vmatpush.msra.mxu0 0.0
  %1722 = vmatpush.msra.mxu0 0.0
  %1723 = vmatpush.msra.mxu0 0.0
  %1724 = vmatpush.msra.mxu0 0.0
  %1725 = vmatpush.msra.mxu0 0.0
  %1726 = vmatpush.msra.mxu0 0.0
  %1727 = vmatpush.msra.mxu0 %v1686
  %1728 = vmatpush.msra.mxu0 %v1684
  %1729 = vmatpush.msra.mxu0 %v1682
  %1730 = vmatpush.msra.mxu0 %v1680
  %1731 = vmatpush.msra.mxu0 %v1678
  %1732 = vmatpush.msra.mxu0 %v1676
  %1733 = vmatpush.msra.mxu0 %v1674
  %1734 = vmatpush.msra.mxu0 %v1672
  %1735 = vmatmul.f32.gmra.mxu0 %v1696
  %v1736 = vpop.f32.mrf.mxu0
  %v1737 = vadd.f32 0.0, %v1736
  %1738 = vmatmul.f32.gmra.mxu0 %v1699
  %v1739 = vpop.f32.mrf.mxu0
  %v1740 = vadd.f32 0.0, %v1739
  %1741 = vmatmul.f32.gmra.mxu0 %v1702
  %v1742 = vpop.f32.mrf.mxu0
  %v1743 = vadd.f32 0.0, %v1742
  %1744 = vmatmul.f32.gmra.mxu0 %v1705
  %v1745 = vpop.f32.mrf.mxu0
  %v1746 = vadd.f32 0.0, %v1745
  %1747 = vmatmul.f32.gmra.mxu0 %v1708
  %v1748 = vpop.f32.mrf.mxu0
  %v1749 = vadd.f32 0.0, %v1748
  %1750 = vmatmul.f32.gmra.mxu0 %v1711
  %v1751 = vpop.f32.mrf.mxu0
  %v1752 = vadd.f32 0.0, %v1751
  %1753 = vmatmul.f32.gmra.mxu0 %v1714
  %v1754 = vpop.f32.mrf.mxu0
  %v1755 = vadd.f32 0.0, %v1754
  %1756 = vmatmul.f32.gmra.mxu0 %v1717
  %v1757 = vpop.f32.mrf.mxu0
  %v1758 = vadd.f32 0.0, %v1757
  %1759 = vdwg.mxu0
  %1768 = vrot.lane.b32.xlu0 %v1737, 16
  %v1769 = vpop.permute.xlu0 %1768
  %1770 = vrot.lane.b32.xlu0 %v1740, 16
  %v1771 = vpop.permute.xlu0 %1770
  %1772 = vrot.lane.b32.xlu0 %v1743, 16
  %v1773 = vpop.permute.xlu0 %1772
  %1774 = vrot.lane.b32.xlu0 %v1746, 16
  %v1775 = vpop.permute.xlu0 %1774
  %1776 = vrot.lane.b32.xlu0 %v1749, 16
  %v1777 = vpop.permute.xlu0 %1776
  %1778 = vrot.lane.b32.xlu0 %v1752, 16
  %v1779 = vpop.permute.xlu0 %1778
  %1780 = vrot.lane.b32.xlu0 %v1755, 16
  %v1781 = vpop.permute.xlu0 %1780
  %1782 = vrot.lane.b32.xlu0 %v1758, 16
  %v1783 = vpop.permute.xlu0 %1782
  %vm1792 = vcmask 195712
  %1793 = vst.msk [vmem:[#allocation2] sm:$0xff] %vm1792, %v1769
  %1794 = vst.msk [vmem:[#allocation2 + $0x8] sm:$0xff] %vm1792, %v1771
  %1795 = vst.msk [vmem:[#allocation2 + $0x10] sm:$0xff] %vm1792, %v1773
  %1796 = vst.msk [vmem:[#allocation2 + $0x18] sm:$0xff] %vm1792, %v1775
  %1797 = vst.msk [vmem:[#allocation2 + $0x20] sm:$0xff] %vm1792, %v1777
  %1798 = vst.msk [vmem:[#allocation2 + $0x28] sm:$0xff] %vm1792, %v1779
  %1799 = vst.msk [vmem:[#allocation2 + $0x30] sm:$0xff] %vm1792, %v1781
  %1800 = vst.msk [vmem:[#allocation2 + $0x38] sm:$0xff] %vm1792, %v1783
  %1801 = vrot.lane.b32.xlu0 %v512, 104
  %v1802 = vpop.permute.xlu0 %1801
  %1803 = vrot.lane.b32.xlu0 %v515, 104
  %v1804 = vpop.permute.xlu0 %1803
  %1805 = vrot.lane.b32.xlu0 %v518, 104
  %v1806 = vpop.permute.xlu0 %1805
  %1807 = vrot.lane.b32.xlu0 %v521, 104
  %v1808 = vpop.permute.xlu0 %1807
  %1809 = vrot.lane.b32.xlu0 %v524, 104
  %v1810 = vpop.permute.xlu0 %1809
  %1811 = vrot.lane.b32.xlu0 %v527, 104
  %v1812 = vpop.permute.xlu0 %1811
  %1813 = vrot.lane.b32.xlu0 %v530, 104
  %v1814 = vpop.permute.xlu0 %1813
  %1815 = vrot.lane.b32.xlu0 %v533, 104
  %v1816 = vpop.permute.xlu0 %1815
  %1817 = vrot.lane.b32.xlu0 %v512, 72
  %v1818 = vpop.permute.xlu0 %1817
  %1819 = vrot.lane.b32.xlu0 %v515, 72
  %v1820 = vpop.permute.xlu0 %1819
  %1821 = vrot.lane.b32.xlu0 %v518, 72
  %v1822 = vpop.permute.xlu0 %1821
  %1823 = vrot.lane.b32.xlu0 %v521, 72
  %v1824 = vpop.permute.xlu0 %1823
  %1825 = vrot.lane.b32.xlu0 %v524, 72
  %v1826 = vpop.permute.xlu0 %1825
  %1827 = vrot.lane.b32.xlu0 %v527, 72
  %v1828 = vpop.permute.xlu0 %1827
  %1829 = vrot.lane.b32.xlu0 %v530, 72
  %v1830 = vpop.permute.xlu0 %1829
  %1831 = vrot.lane.b32.xlu0 %v533, 72
  %v1832 = vpop.permute.xlu0 %1831
  %v1833 = vsel %vm583, %v1802, 0
  %v1835 = vsel %vm583, %v1804, 0
  %v1837 = vsel %vm583, %v1806, 0
  %v1839 = vsel %vm583, %v1808, 0
  %v1841 = vsel %vm583, %v1810, 0
  %v1843 = vsel %vm583, %v1812, 0
  %v1845 = vsel %vm583, %v1814, 0
  %v1847 = vsel %vm583, %v1816, 0
  %v1849 = vsel %vm583, %v1818, 0
  %v1851 = vsel %vm583, %v1820, 0
  %v1853 = vsel %vm583, %v1822, 0
  %v1855 = vsel %vm583, %v1824, 0
  %v1857 = vsel %vm583, %v1826, 0
  %v1859 = vsel %vm583, %v1828, 0
  %v1861 = vsel %vm583, %v1830, 0
  %v1863 = vsel %vm583, %v1832, 0
  %1865 = vmatpush.xpose.msra.mxu0 0.0
  %1866 = vmatpush.xpose.msra.mxu0 0.0
  %1867 = vmatpush.xpose.msra.mxu0 0.0
  %1868 = vmatpush.xpose.msra.mxu0 0.0
  %1869 = vmatpush.xpose.msra.mxu0 0.0
  %1870 = vmatpush.xpose.msra.mxu0 0.0
  %1871 = vmatpush.xpose.msra.mxu0 0.0
  %1872 = vmatpush.xpose.msra.mxu0 0.0
  %1873 = vmatpush.xpose.msra.mxu0 %v1863
  %1874 = vmatpush.xpose.msra.mxu0 %v1861
  %1875 = vmatpush.xpose.msra.mxu0 %v1859
  %1876 = vmatpush.xpose.msra.mxu0 %v1857
  %1877 = vmatpush.xpose.msra.mxu0 %v1855
  %1878 = vmatpush.xpose.msra.mxu0 %v1853
  %1879 = vmatpush.xpose.msra.mxu0 %v1851
  %1880 = vmatpush.xpose.msra.mxu0 %v1849
  %1881 = vmatmul.f32.gmra.mxu0 %v1833
  %v1882 = vpop.f32.mrf.mxu0
  %v1883 = vadd.f32 0.0, %v1882
  %1884 = vmatmul.f32.gmra.mxu0 %v1835
  %v1885 = vpop.f32.mrf.mxu0
  %v1886 = vadd.f32 0.0, %v1885
  %1887 = vmatmul.f32.gmra.mxu0 %v1837
  %v1888 = vpop.f32.mrf.mxu0
  %v1889 = vadd.f32 0.0, %v1888
  %1890 = vmatmul.f32.gmra.mxu0 %v1839
  %v1891 = vpop.f32.mrf.mxu0
  %v1892 = vadd.f32 0.0, %v1891
  %1893 = vmatmul.f32.gmra.mxu0 %v1841
  %v1894 = vpop.f32.mrf.mxu0
  %v1895 = vadd.f32 0.0, %v1894
  %1896 = vmatmul.f32.gmra.mxu0 %v1843
  %v1897 = vpop.f32.mrf.mxu0
  %v1898 = vadd.f32 0.0, %v1897
  %1899 = vmatmul.f32.gmra.mxu0 %v1845
  %v1900 = vpop.f32.mrf.mxu0
  %v1901 = vadd.f32 0.0, %v1900
  %1902 = vmatmul.f32.gmra.mxu0 %v1847
  %v1903 = vpop.f32.mrf.mxu0
  %v1904 = vadd.f32 0.0, %v1903
  %1905 = vdwg.mxu0
  %v1906 = vsel %vm657, %v1883, -inf
  %1907 = vmax.xlane.f32.xlu0 %v1906
  %v1908 = vpop.xlane.xlu0 %1907
  %v1909 = vsel %vm657, %v1886, -inf
  %1910 = vmax.xlane.f32.xlu0 %v1909
  %v1911 = vpop.xlane.xlu0 %1910
  %v1912 = vsel %vm657, %v1889, -inf
  %1913 = vmax.xlane.f32.xlu0 %v1912
  %v1914 = vpop.xlane.xlu0 %1913
  %v1915 = vsel %vm657, %v1892, -inf
  %1916 = vmax.xlane.f32.xlu0 %v1915
  %v1917 = vpop.xlane.xlu0 %1916
  %v1918 = vsel %vm657, %v1895, -inf
  %1919 = vmax.xlane.f32.xlu0 %v1918
  %v1920 = vpop.xlane.xlu0 %1919
  %v1921 = vsel %vm657, %v1898, -inf
  %1922 = vmax.xlane.f32.xlu0 %v1921
  %v1923 = vpop.xlane.xlu0 %1922
  %v1924 = vsel %vm657, %v1901, -inf
  %1925 = vmax.xlane.f32.xlu0 %v1924
  %v1926 = vpop.xlane.xlu0 %1925
  %v1927 = vsel %vm657, %v1904, -inf
  %1928 = vmax.xlane.f32.xlu0 %v1927
  %v1929 = vpop.xlane.xlu0 %1928
  %v1930 = vsub.f32 %v1883, %v1908
  %v1931 = vsub.f32 %v1886, %v1911
  %v1932 = vsub.f32 %v1889, %v1914
  %v1933 = vsub.f32 %v1892, %v1917
  %v1934 = vsub.f32 %v1895, %v1920
  %v1935 = vsub.f32 %v1898, %v1923
  %v1936 = vsub.f32 %v1901, %v1926
  %v1937 = vsub.f32 %v1904, %v1929
  %v1938 = vmul.f32 %v1930, 1.442695
  %v1939 = vpow.pop %v1938
  %v1940 = vmul.f32 %v1931, 1.442695
  %v1941 = vpow.pop %v1940
  %v1942 = vmul.f32 %v1932, 1.442695
  %v1943 = vpow.pop %v1942
  %v1944 = vmul.f32 %v1933, 1.442695
  %v1945 = vpow.pop %v1944
  %v1946 = vmul.f32 %v1934, 1.442695
  %v1947 = vpow.pop %v1946
  %v1948 = vmul.f32 %v1935, 1.442695
  %v1949 = vpow.pop %v1948
  %v1950 = vmul.f32 %v1936, 1.442695
  %v1951 = vpow.pop %v1950
  %v1952 = vmul.f32 %v1937, 1.442695
  %v1953 = vpow.pop %v1952
  %v1954 = vsel %vm657, %v1939, 0.0
  %1955 = vadd.xlane.f32.xlu0 %v1954
  %v1956 = vpop.xlane.xlu0 %1955
  %v1957 = vsel %vm657, %v1941, 0.0
  %1958 = vadd.xlane.f32.xlu0 %v1957
  %v1959 = vpop.xlane.xlu0 %1958
  %v1960 = vsel %vm657, %v1943, 0.0
  %1961 = vadd.xlane.f32.xlu0 %v1960
  %v1962 = vpop.xlane.xlu0 %1961
  %v1963 = vsel %vm657, %v1945, 0.0
  %1964 = vadd.xlane.f32.xlu0 %v1963
  %v1965 = vpop.xlane.xlu0 %1964
  %v1966 = vsel %vm657, %v1947, 0.0
  %1967 = vadd.xlane.f32.xlu0 %v1966
  %v1968 = vpop.xlane.xlu0 %1967
  %v1969 = vsel %vm657, %v1949, 0.0
  %1970 = vadd.xlane.f32.xlu0 %v1969
  %v1971 = vpop.xlane.xlu0 %1970
  %v1972 = vsel %vm657, %v1951, 0.0
  %1973 = vadd.xlane.f32.xlu0 %v1972
  %v1974 = vpop.xlane.xlu0 %1973
  %v1975 = vsel %vm657, %v1953, 0.0
  %1976 = vadd.xlane.f32.xlu0 %v1975
  %v1977 = vpop.xlane.xlu0 %1976
  %v1978 = vrcp.pop %v1956
  %v1979 = vmul.f32 %v1956, %v1978
  %v1980 = vsub.f32 1.0, %v1979
  %v1981 = vmul.f32 %v1978, %v1980
  %v1982 = vadd.f32 %v1978, %v1981
  %vm1983 = vweird.f32 %v1956
  %vm1984 = vweird.f32 %v1978
  %vm1985 = vmor %vm1983, %vm1984
  %v1986 = vsel %vm1985, %v1978, %v1982
  %v1987 = vand.u32 2147483647, %v1956
  %vm1988 = vcmp.eq.f32.partialorder %v1987, 8.507059e+37
  %v1989 = vand.u32 %v1956, 2147483648
  %v1990 = vor.u32 1.1754944e-38, %v1989
  %v1991 = vsel %vm1988, %v1990, %v1986
  %v1992 = vmul.f32 %v1939, %v1991
  %v1993 = vrcp.pop %v1959
  %v1994 = vmul.f32 %v1959, %v1993
  %v1995 = vsub.f32 1.0, %v1994
  %v1996 = vmul.f32 %v1993, %v1995
  %v1997 = vadd.f32 %v1993, %v1996
  %vm1998 = vweird.f32 %v1959
  %vm1999 = vweird.f32 %v1993
  %vm2000 = vmor %vm1998, %vm1999
  %v2001 = vsel %vm2000, %v1993, %v1997
  %v2002 = vand.u32 2147483647, %v1959
  %vm2003 = vcmp.eq.f32.partialorder %v2002, 8.507059e+37
  %v2004 = vand.u32 %v1959, 2147483648
  %v2005 = vor.u32 1.1754944e-38, %v2004
  %v2006 = vsel %vm2003, %v2005, %v2001
  %v2007 = vmul.f32 %v1941, %v2006
  %v2008 = vrcp.pop %v1962
  %v2009 = vmul.f32 %v1962, %v2008
  %v2010 = vsub.f32 1.0, %v2009
  %v2011 = vmul.f32 %v2008, %v2010
  %v2012 = vadd.f32 %v2008, %v2011
  %vm2013 = vweird.f32 %v1962
  %vm2014 = vweird.f32 %v2008
  %vm2015 = vmor %vm2013, %vm2014
  %v2016 = vsel %vm2015, %v2008, %v2012
  %v2017 = vand.u32 2147483647, %v1962
  %vm2018 = vcmp.eq.f32.partialorder %v2017, 8.507059e+37
  %v2019 = vand.u32 %v1962, 2147483648
  %v2020 = vor.u32 1.1754944e-38, %v2019
  %v2021 = vsel %vm2018, %v2020, %v2016
  %v2022 = vmul.f32 %v1943, %v2021
  %v2023 = vrcp.pop %v1965
  %v2024 = vmul.f32 %v1965, %v2023
  %v2025 = vsub.f32 1.0, %v2024
  %v2026 = vmul.f32 %v2023, %v2025
  %v2027 = vadd.f32 %v2023, %v2026
  %vm2028 = vweird.f32 %v1965
  %vm2029 = vweird.f32 %v2023
  %vm2030 = vmor %vm2028, %vm2029
  %v2031 = vsel %vm2030, %v2023, %v2027
  %v2032 = vand.u32 2147483647, %v1965
  %vm2033 = vcmp.eq.f32.partialorder %v2032, 8.507059e+37
  %v2034 = vand.u32 %v1965, 2147483648
  %v2035 = vor.u32 1.1754944e-38, %v2034
  %v2036 = vsel %vm2033, %v2035, %v2031
  %v2037 = vmul.f32 %v1945, %v2036
  %v2038 = vrcp.pop %v1968
  %v2039 = vmul.f32 %v1968, %v2038
  %v2040 = vsub.f32 1.0, %v2039
  %v2041 = vmul.f32 %v2038, %v2040
  %v2042 = vadd.f32 %v2038, %v2041
  %vm2043 = vweird.f32 %v1968
  %vm2044 = vweird.f32 %v2038
  %vm2045 = vmor %vm2043, %vm2044
  %v2046 = vsel %vm2045, %v2038, %v2042
  %v2047 = vand.u32 2147483647, %v1968
  %vm2048 = vcmp.eq.f32.partialorder %v2047, 8.507059e+37
  %v2049 = vand.u32 %v1968, 2147483648
  %v2050 = vor.u32 1.1754944e-38, %v2049
  %v2051 = vsel %vm2048, %v2050, %v2046
  %v2052 = vmul.f32 %v1947, %v2051
  %v2053 = vrcp.pop %v1971
  %v2054 = vmul.f32 %v1971, %v2053
  %v2055 = vsub.f32 1.0, %v2054
  %v2056 = vmul.f32 %v2053, %v2055
  %v2057 = vadd.f32 %v2053, %v2056
  %vm2058 = vweird.f32 %v1971
  %vm2059 = vweird.f32 %v2053
  %vm2060 = vmor %vm2058, %vm2059
  %v2061 = vsel %vm2060, %v2053, %v2057
  %v2062 = vand.u32 2147483647, %v1971
  %vm2063 = vcmp.eq.f32.partialorder %v2062, 8.507059e+37
  %v2064 = vand.u32 %v1971, 2147483648
  %v2065 = vor.u32 1.1754944e-38, %v2064
  %v2066 = vsel %vm2063, %v2065, %v2061
  %v2067 = vmul.f32 %v1949, %v2066
  %v2068 = vrcp.pop %v1974
  %v2069 = vmul.f32 %v1974, %v2068
  %v2070 = vsub.f32 1.0, %v2069
  %v2071 = vmul.f32 %v2068, %v2070
  %v2072 = vadd.f32 %v2068, %v2071
  %vm2073 = vweird.f32 %v1974
  %vm2074 = vweird.f32 %v2068
  %vm2075 = vmor %vm2073, %vm2074
  %v2076 = vsel %vm2075, %v2068, %v2072
  %v2077 = vand.u32 2147483647, %v1974
  %vm2078 = vcmp.eq.f32.partialorder %v2077, 8.507059e+37
  %v2079 = vand.u32 %v1974, 2147483648
  %v2080 = vor.u32 1.1754944e-38, %v2079
  %v2081 = vsel %vm2078, %v2080, %v2076
  %v2082 = vmul.f32 %v1951, %v2081
  %v2083 = vrcp.pop %v1977
  %v2084 = vmul.f32 %v1977, %v2083
  %v2085 = vsub.f32 1.0, %v2084
  %v2086 = vmul.f32 %v2083, %v2085
  %v2087 = vadd.f32 %v2083, %v2086
  %vm2088 = vweird.f32 %v1977
  %vm2089 = vweird.f32 %v2083
  %vm2090 = vmor %vm2088, %vm2089
  %v2091 = vsel %vm2090, %v2083, %v2087
  %v2092 = vand.u32 2147483647, %v1977
  %vm2093 = vcmp.eq.f32.partialorder %v2092, 8.507059e+37
  %v2094 = vand.u32 %v1977, 2147483648
  %v2095 = vor.u32 1.1754944e-38, %v2094
  %v2096 = vsel %vm2093, %v2095, %v2091
  %v2097 = vmul.f32 %v1953, %v2096
  %2098 = vrot.lane.b32.xlu0 %v512, 40
  %v2099 = vpop.permute.xlu0 %2098
  %2100 = vrot.lane.b32.xlu0 %v515, 40
  %v2101 = vpop.permute.xlu0 %2100
  %2102 = vrot.lane.b32.xlu0 %v518, 40
  %v2103 = vpop.permute.xlu0 %2102
  %2104 = vrot.lane.b32.xlu0 %v521, 40
  %v2105 = vpop.permute.xlu0 %2104
  %2106 = vrot.lane.b32.xlu0 %v524, 40
  %v2107 = vpop.permute.xlu0 %2106
  %2108 = vrot.lane.b32.xlu0 %v527, 40
  %v2109 = vpop.permute.xlu0 %2108
  %2110 = vrot.lane.b32.xlu0 %v530, 40
  %v2111 = vpop.permute.xlu0 %2110
  %2112 = vrot.lane.b32.xlu0 %v533, 40
  %v2113 = vpop.permute.xlu0 %2112
  %v2123 = vsel %vm657, %v1992, 0
  %v2126 = vsel %vm657, %v2007, 0
  %v2129 = vsel %vm657, %v2022, 0
  %v2132 = vsel %vm657, %v2037, 0
  %v2135 = vsel %vm657, %v2052, 0
  %v2138 = vsel %vm657, %v2067, 0
  %v2141 = vsel %vm657, %v2082, 0
  %v2144 = vsel %vm657, %v2097, 0
  %2146 = vmatpush.msra.mxu0 0.0
  %2147 = vmatpush.msra.mxu0 0.0
  %2148 = vmatpush.msra.mxu0 0.0
  %2149 = vmatpush.msra.mxu0 0.0
  %2150 = vmatpush.msra.mxu0 0.0
  %2151 = vmatpush.msra.mxu0 0.0
  %2152 = vmatpush.msra.mxu0 0.0
  %2153 = vmatpush.msra.mxu0 0.0
  %2154 = vmatpush.msra.mxu0 %v2113
  %2155 = vmatpush.msra.mxu0 %v2111
  %2156 = vmatpush.msra.mxu0 %v2109
  %2157 = vmatpush.msra.mxu0 %v2107
  %2158 = vmatpush.msra.mxu0 %v2105
  %2159 = vmatpush.msra.mxu0 %v2103
  %2160 = vmatpush.msra.mxu0 %v2101
  %2161 = vmatpush.msra.mxu0 %v2099
  %2162 = vmatmul.f32.gmra.mxu0 %v2123
  %v2163 = vpop.f32.mrf.mxu0
  %v2164 = vadd.f32 0.0, %v2163
  %2165 = vmatmul.f32.gmra.mxu0 %v2126
  %v2166 = vpop.f32.mrf.mxu0
  %v2167 = vadd.f32 0.0, %v2166
  %2168 = vmatmul.f32.gmra.mxu0 %v2129
  %v2169 = vpop.f32.mrf.mxu0
  %v2170 = vadd.f32 0.0, %v2169
  %2171 = vmatmul.f32.gmra.mxu0 %v2132
  %v2172 = vpop.f32.mrf.mxu0
  %v2173 = vadd.f32 0.0, %v2172
  %2174 = vmatmul.f32.gmra.mxu0 %v2135
  %v2175 = vpop.f32.mrf.mxu0
  %v2176 = vadd.f32 0.0, %v2175
  %2177 = vmatmul.f32.gmra.mxu0 %v2138
  %v2178 = vpop.f32.mrf.mxu0
  %v2179 = vadd.f32 0.0, %v2178
  %2180 = vmatmul.f32.gmra.mxu0 %v2141
  %v2181 = vpop.f32.mrf.mxu0
  %v2182 = vadd.f32 0.0, %v2181
  %2183 = vmatmul.f32.gmra.mxu0 %v2144
  %v2184 = vpop.f32.mrf.mxu0
  %v2185 = vadd.f32 0.0, %v2184
  %2186 = vdwg.mxu0
  %2195 = vrot.lane.b32.xlu0 %v2164, 24
  %v2196 = vpop.permute.xlu0 %2195
  %2197 = vrot.lane.b32.xlu0 %v2167, 24
  %v2198 = vpop.permute.xlu0 %2197
  %2199 = vrot.lane.b32.xlu0 %v2170, 24
  %v2200 = vpop.permute.xlu0 %2199
  %2201 = vrot.lane.b32.xlu0 %v2173, 24
  %v2202 = vpop.permute.xlu0 %2201
  %2203 = vrot.lane.b32.xlu0 %v2176, 24
  %v2204 = vpop.permute.xlu0 %2203
  %2205 = vrot.lane.b32.xlu0 %v2179, 24
  %v2206 = vpop.permute.xlu0 %2205
  %2207 = vrot.lane.b32.xlu0 %v2182, 24
  %v2208 = vpop.permute.xlu0 %2207
  %2209 = vrot.lane.b32.xlu0 %v2185, 24
  %v2210 = vpop.permute.xlu0 %2209
  %vm2219 = vcmask 261312
  %2220 = vst.msk [vmem:[#allocation2] sm:$0xff] %vm2219, %v2196
  %2221 = vst.msk [vmem:[#allocation2 + $0x8] sm:$0xff] %vm2219, %v2198
  %2222 = vst.msk [vmem:[#allocation2 + $0x10] sm:$0xff] %vm2219, %v2200
  %2223 = vst.msk [vmem:[#allocation2 + $0x18] sm:$0xff] %vm2219, %v2202
  %2224 = vst.msk [vmem:[#allocation2 + $0x20] sm:$0xff] %vm2219, %v2204
  %2225 = vst.msk [vmem:[#allocation2 + $0x28] sm:$0xff] %vm2219, %v2206
  %2226 = vst.msk [vmem:[#allocation2 + $0x30] sm:$0xff] %vm2219, %v2208
  %2227 = vst.msk [vmem:[#allocation2 + $0x38] sm:$0xff] %vm2219, %v2210
  %2236 = vrot.lane.b32.xlu0 %v536, 96
  %v2237 = vpop.permute.xlu0 %2236
  %2238 = vrot.lane.b32.xlu0 %v539, 96
  %v2239 = vpop.permute.xlu0 %2238
  %2240 = vrot.lane.b32.xlu0 %v542, 96
  %v2241 = vpop.permute.xlu0 %2240
  %2242 = vrot.lane.b32.xlu0 %v545, 96
  %v2243 = vpop.permute.xlu0 %2242
  %2244 = vrot.lane.b32.xlu0 %v548, 96
  %v2245 = vpop.permute.xlu0 %2244
  %2246 = vrot.lane.b32.xlu0 %v551, 96
  %v2247 = vpop.permute.xlu0 %2246
  %2248 = vrot.lane.b32.xlu0 %v554, 96
  %v2249 = vpop.permute.xlu0 %2248
  %2250 = vrot.lane.b32.xlu0 %v557, 96
  %v2251 = vpop.permute.xlu0 %2250
  %v2252 = vsel %vm583, %v536, 0
  %v2254 = vsel %vm583, %v539, 0
  %v2256 = vsel %vm583, %v542, 0
  %v2258 = vsel %vm583, %v545, 0
  %v2260 = vsel %vm583, %v548, 0
  %v2262 = vsel %vm583, %v551, 0
  %v2264 = vsel %vm583, %v554, 0
  %v2266 = vsel %vm583, %v557, 0
  %v2268 = vsel %vm583, %v2237, 0
  %v2270 = vsel %vm583, %v2239, 0
  %v2272 = vsel %vm583, %v2241, 0
  %v2274 = vsel %vm583, %v2243, 0
  %v2276 = vsel %vm583, %v2245, 0
  %v2278 = vsel %vm583, %v2247, 0
  %v2280 = vsel %vm583, %v2249, 0
  %v2282 = vsel %vm583, %v2251, 0
  %2284 = vmatpush.xpose.msra.mxu0 0.0
  %2285 = vmatpush.xpose.msra.mxu0 0.0
  %2286 = vmatpush.xpose.msra.mxu0 0.0
  %2287 = vmatpush.xpose.msra.mxu0 0.0
  %2288 = vmatpush.xpose.msra.mxu0 0.0
  %2289 = vmatpush.xpose.msra.mxu0 0.0
  %2290 = vmatpush.xpose.msra.mxu0 0.0
  %2291 = vmatpush.xpose.msra.mxu0 0.0
  %2292 = vmatpush.xpose.msra.mxu0 %v2282
  %2293 = vmatpush.xpose.msra.mxu0 %v2280
  %2294 = vmatpush.xpose.msra.mxu0 %v2278
  %2295 = vmatpush.xpose.msra.mxu0 %v2276
  %2296 = vmatpush.xpose.msra.mxu0 %v2274
  %2297 = vmatpush.xpose.msra.mxu0 %v2272
  %2298 = vmatpush.xpose.msra.mxu0 %v2270
  %2299 = vmatpush.xpose.msra.mxu0 %v2268
  %2300 = vmatmul.f32.gmra.mxu0 %v2252
  %v2301 = vpop.f32.mrf.mxu0
  %v2302 = vadd.f32 0.0, %v2301
  %2303 = vmatmul.f32.gmra.mxu0 %v2254
  %v2304 = vpop.f32.mrf.mxu0
  %v2305 = vadd.f32 0.0, %v2304
  %2306 = vmatmul.f32.gmra.mxu0 %v2256
  %v2307 = vpop.f32.mrf.mxu0
  %v2308 = vadd.f32 0.0, %v2307
  %2309 = vmatmul.f32.gmra.mxu0 %v2258
  %v2310 = vpop.f32.mrf.mxu0
  %v2311 = vadd.f32 0.0, %v2310
  %2312 = vmatmul.f32.gmra.mxu0 %v2260
  %v2313 = vpop.f32.mrf.mxu0
  %v2314 = vadd.f32 0.0, %v2313
  %2315 = vmatmul.f32.gmra.mxu0 %v2262
  %v2316 = vpop.f32.mrf.mxu0
  %v2317 = vadd.f32 0.0, %v2316
  %2318 = vmatmul.f32.gmra.mxu0 %v2264
  %v2319 = vpop.f32.mrf.mxu0
  %v2320 = vadd.f32 0.0, %v2319
  %2321 = vmatmul.f32.gmra.mxu0 %v2266
  %v2322 = vpop.f32.mrf.mxu0
  %v2323 = vadd.f32 0.0, %v2322
  %2324 = vdwg.mxu0
  %v2325 = vsel %vm657, %v2302, -inf
  %2326 = vmax.xlane.f32.xlu0 %v2325
  %v2327 = vpop.xlane.xlu0 %2326
  %v2328 = vsel %vm657, %v2305, -inf
  %2329 = vmax.xlane.f32.xlu0 %v2328
  %v2330 = vpop.xlane.xlu0 %2329
  %v2331 = vsel %vm657, %v2308, -inf
  %2332 = vmax.xlane.f32.xlu0 %v2331
  %v2333 = vpop.xlane.xlu0 %2332
  %v2334 = vsel %vm657, %v2311, -inf
  %2335 = vmax.xlane.f32.xlu0 %v2334
  %v2336 = vpop.xlane.xlu0 %2335
  %v2337 = vsel %vm657, %v2314, -inf
  %2338 = vmax.xlane.f32.xlu0 %v2337
  %v2339 = vpop.xlane.xlu0 %2338
  %v2340 = vsel %vm657, %v2317, -inf
  %2341 = vmax.xlane.f32.xlu0 %v2340
  %v2342 = vpop.xlane.xlu0 %2341
  %v2343 = vsel %vm657, %v2320, -inf
  %2344 = vmax.xlane.f32.xlu0 %v2343
  %v2345 = vpop.xlane.xlu0 %2344
  %v2346 = vsel %vm657, %v2323, -inf
  %2347 = vmax.xlane.f32.xlu0 %v2346
  %v2348 = vpop.xlane.xlu0 %2347
  %v2349 = vsub.f32 %v2302, %v2327
  %v2350 = vsub.f32 %v2305, %v2330
  %v2351 = vsub.f32 %v2308, %v2333
  %v2352 = vsub.f32 %v2311, %v2336
  %v2353 = vsub.f32 %v2314, %v2339
  %v2354 = vsub.f32 %v2317, %v2342
  %v2355 = vsub.f32 %v2320, %v2345
  %v2356 = vsub.f32 %v2323, %v2348
  %v2357 = vmul.f32 %v2349, 1.442695
  %v2358 = vpow.pop %v2357
  %v2359 = vmul.f32 %v2350, 1.442695
  %v2360 = vpow.pop %v2359
  %v2361 = vmul.f32 %v2351, 1.442695
  %v2362 = vpow.pop %v2361
  %v2363 = vmul.f32 %v2352, 1.442695
  %v2364 = vpow.pop %v2363
  %v2365 = vmul.f32 %v2353, 1.442695
  %v2366 = vpow.pop %v2365
  %v2367 = vmul.f32 %v2354, 1.442695
  %v2368 = vpow.pop %v2367
  %v2369 = vmul.f32 %v2355, 1.442695
  %v2370 = vpow.pop %v2369
  %v2371 = vmul.f32 %v2356, 1.442695
  %v2372 = vpow.pop %v2371
  %v2373 = vsel %vm657, %v2358, 0.0
  %2374 = vadd.xlane.f32.xlu0 %v2373
  %v2375 = vpop.xlane.xlu0 %2374
  %v2376 = vsel %vm657, %v2360, 0.0
  %2377 = vadd.xlane.f32.xlu0 %v2376
  %v2378 = vpop.xlane.xlu0 %2377
  %v2379 = vsel %vm657, %v2362, 0.0
  %2380 = vadd.xlane.f32.xlu0 %v2379
  %v2381 = vpop.xlane.xlu0 %2380
  %v2382 = vsel %vm657, %v2364, 0.0
  %2383 = vadd.xlane.f32.xlu0 %v2382
  %v2384 = vpop.xlane.xlu0 %2383
  %v2385 = vsel %vm657, %v2366, 0.0
  %2386 = vadd.xlane.f32.xlu0 %v2385
  %v2387 = vpop.xlane.xlu0 %2386
  %v2388 = vsel %vm657, %v2368, 0.0
  %2389 = vadd.xlane.f32.xlu0 %v2388
  %v2390 = vpop.xlane.xlu0 %2389
  %v2391 = vsel %vm657, %v2370, 0.0
  %2392 = vadd.xlane.f32.xlu0 %v2391
  %v2393 = vpop.xlane.xlu0 %2392
  %v2394 = vsel %vm657, %v2372, 0.0
  %2395 = vadd.xlane.f32.xlu0 %v2394
  %v2396 = vpop.xlane.xlu0 %2395
  %v2397 = vrcp.pop %v2375
  %v2398 = vmul.f32 %v2375, %v2397
  %v2399 = vsub.f32 1.0, %v2398
  %v2400 = vmul.f32 %v2397, %v2399
  %v2401 = vadd.f32 %v2397, %v2400
  %vm2402 = vweird.f32 %v2375
  %vm2403 = vweird.f32 %v2397
  %vm2404 = vmor %vm2402, %vm2403
  %v2405 = vsel %vm2404, %v2397, %v2401
  %v2406 = vand.u32 2147483647, %v2375
  %vm2407 = vcmp.eq.f32.partialorder %v2406, 8.507059e+37
  %v2408 = vand.u32 %v2375, 2147483648
  %v2409 = vor.u32 1.1754944e-38, %v2408
  %v2410 = vsel %vm2407, %v2409, %v2405
  %v2411 = vmul.f32 %v2358, %v2410
  %v2412 = vrcp.pop %v2378
  %v2413 = vmul.f32 %v2378, %v2412
  %v2414 = vsub.f32 1.0, %v2413
  %v2415 = vmul.f32 %v2412, %v2414
  %v2416 = vadd.f32 %v2412, %v2415
  %vm2417 = vweird.f32 %v2378
  %vm2418 = vweird.f32 %v2412
  %vm2419 = vmor %vm2417, %vm2418
  %v2420 = vsel %vm2419, %v2412, %v2416
  %v2421 = vand.u32 2147483647, %v2378
  %vm2422 = vcmp.eq.f32.partialorder %v2421, 8.507059e+37
  %v2423 = vand.u32 %v2378, 2147483648
  %v2424 = vor.u32 1.1754944e-38, %v2423
  %v2425 = vsel %vm2422, %v2424, %v2420
  %v2426 = vmul.f32 %v2360, %v2425
  %v2427 = vrcp.pop %v2381
  %v2428 = vmul.f32 %v2381, %v2427
  %v2429 = vsub.f32 1.0, %v2428
  %v2430 = vmul.f32 %v2427, %v2429
  %v2431 = vadd.f32 %v2427, %v2430
  %vm2432 = vweird.f32 %v2381
  %vm2433 = vweird.f32 %v2427
  %vm2434 = vmor %vm2432, %vm2433
  %v2435 = vsel %vm2434, %v2427, %v2431
  %v2436 = vand.u32 2147483647, %v2381
  %vm2437 = vcmp.eq.f32.partialorder %v2436, 8.507059e+37
  %v2438 = vand.u32 %v2381, 2147483648
  %v2439 = vor.u32 1.1754944e-38, %v2438
  %v2440 = vsel %vm2437, %v2439, %v2435
  %v2441 = vmul.f32 %v2362, %v2440
  %v2442 = vrcp.pop %v2384
  %v2443 = vmul.f32 %v2384, %v2442
  %v2444 = vsub.f32 1.0, %v2443
  %v2445 = vmul.f32 %v2442, %v2444
  %v2446 = vadd.f32 %v2442, %v2445
  %vm2447 = vweird.f32 %v2384
  %vm2448 = vweird.f32 %v2442
  %vm2449 = vmor %vm2447, %vm2448
  %v2450 = vsel %vm2449, %v2442, %v2446
  %v2451 = vand.u32 2147483647, %v2384
  %vm2452 = vcmp.eq.f32.partialorder %v2451, 8.507059e+37
  %v2453 = vand.u32 %v2384, 2147483648
  %v2454 = vor.u32 1.1754944e-38, %v2453
  %v2455 = vsel %vm2452, %v2454, %v2450
  %v2456 = vmul.f32 %v2364, %v2455
  %v2457 = vrcp.pop %v2387
  %v2458 = vmul.f32 %v2387, %v2457
  %v2459 = vsub.f32 1.0, %v2458
  %v2460 = vmul.f32 %v2457, %v2459
  %v2461 = vadd.f32 %v2457, %v2460
  %vm2462 = vweird.f32 %v2387
  %vm2463 = vweird.f32 %v2457
  %vm2464 = vmor %vm2462, %vm2463
  %v2465 = vsel %vm2464, %v2457, %v2461
  %v2466 = vand.u32 2147483647, %v2387
  %vm2467 = vcmp.eq.f32.partialorder %v2466, 8.507059e+37
  %v2468 = vand.u32 %v2387, 2147483648
  %v2469 = vor.u32 1.1754944e-38, %v2468
  %v2470 = vsel %vm2467, %v2469, %v2465
  %v2471 = vmul.f32 %v2366, %v2470
  %v2472 = vrcp.pop %v2390
  %v2473 = vmul.f32 %v2390, %v2472
  %v2474 = vsub.f32 1.0, %v2473
  %v2475 = vmul.f32 %v2472, %v2474
  %v2476 = vadd.f32 %v2472, %v2475
  %vm2477 = vweird.f32 %v2390
  %vm2478 = vweird.f32 %v2472
  %vm2479 = vmor %vm2477, %vm2478
  %v2480 = vsel %vm2479, %v2472, %v2476
  %v2481 = vand.u32 2147483647, %v2390
  %vm2482 = vcmp.eq.f32.partialorder %v2481, 8.507059e+37
  %v2483 = vand.u32 %v2390, 2147483648
  %v2484 = vor.u32 1.1754944e-38, %v2483
  %v2485 = vsel %vm2482, %v2484, %v2480
  %v2486 = vmul.f32 %v2368, %v2485
  %v2487 = vrcp.pop %v2393
  %v2488 = vmul.f32 %v2393, %v2487
  %v2489 = vsub.f32 1.0, %v2488
  %v2490 = vmul.f32 %v2487, %v2489
  %v2491 = vadd.f32 %v2487, %v2490
  %vm2492 = vweird.f32 %v2393
  %vm2493 = vweird.f32 %v2487
  %vm2494 = vmor %vm2492, %vm2493
  %v2495 = vsel %vm2494, %v2487, %v2491
  %v2496 = vand.u32 2147483647, %v2393
  %vm2497 = vcmp.eq.f32.partialorder %v2496, 8.507059e+37
  %v2498 = vand.u32 %v2393, 2147483648
  %v2499 = vor.u32 1.1754944e-38, %v2498
  %v2500 = vsel %vm2497, %v2499, %v2495
  %v2501 = vmul.f32 %v2370, %v2500
  %v2502 = vrcp.pop %v2396
  %v2503 = vmul.f32 %v2396, %v2502
  %v2504 = vsub.f32 1.0, %v2503
  %v2505 = vmul.f32 %v2502, %v2504
  %v2506 = vadd.f32 %v2502, %v2505
  %vm2507 = vweird.f32 %v2396
  %vm2508 = vweird.f32 %v2502
  %vm2509 = vmor %vm2507, %vm2508
  %v2510 = vsel %vm2509, %v2502, %v2506
  %v2511 = vand.u32 2147483647, %v2396
  %vm2512 = vcmp.eq.f32.partialorder %v2511, 8.507059e+37
  %v2513 = vand.u32 %v2396, 2147483648
  %v2514 = vor.u32 1.1754944e-38, %v2513
  %v2515 = vsel %vm2512, %v2514, %v2510
  %v2516 = vmul.f32 %v2372, %v2515
  %2517 = vrot.lane.b32.xlu0 %v536, 64
  %v2518 = vpop.permute.xlu0 %2517
  %2519 = vrot.lane.b32.xlu0 %v539, 64
  %v2520 = vpop.permute.xlu0 %2519
  %2521 = vrot.lane.b32.xlu0 %v542, 64
  %v2522 = vpop.permute.xlu0 %2521
  %2523 = vrot.lane.b32.xlu0 %v545, 64
  %v2524 = vpop.permute.xlu0 %2523
  %2525 = vrot.lane.b32.xlu0 %v548, 64
  %v2526 = vpop.permute.xlu0 %2525
  %2527 = vrot.lane.b32.xlu0 %v551, 64
  %v2528 = vpop.permute.xlu0 %2527
  %2529 = vrot.lane.b32.xlu0 %v554, 64
  %v2530 = vpop.permute.xlu0 %2529
  %2531 = vrot.lane.b32.xlu0 %v557, 64
  %v2532 = vpop.permute.xlu0 %2531
  %v2542 = vsel %vm657, %v2411, 0
  %v2545 = vsel %vm657, %v2426, 0
  %v2548 = vsel %vm657, %v2441, 0
  %v2551 = vsel %vm657, %v2456, 0
  %v2554 = vsel %vm657, %v2471, 0
  %v2557 = vsel %vm657, %v2486, 0
  %v2560 = vsel %vm657, %v2501, 0
  %v2563 = vsel %vm657, %v2516, 0
  %2565 = vmatpush.msra.mxu0 0.0
  %2566 = vmatpush.msra.mxu0 0.0
  %2567 = vmatpush.msra.mxu0 0.0
  %2568 = vmatpush.msra.mxu0 0.0
  %2569 = vmatpush.msra.mxu0 0.0
  %2570 = vmatpush.msra.mxu0 0.0
  %2571 = vmatpush.msra.mxu0 0.0
  %2572 = vmatpush.msra.mxu0 0.0
  %2573 = vmatpush.msra.mxu0 %v2532
  %2574 = vmatpush.msra.mxu0 %v2530
  %2575 = vmatpush.msra.mxu0 %v2528
  %2576 = vmatpush.msra.mxu0 %v2526
  %2577 = vmatpush.msra.mxu0 %v2524
  %2578 = vmatpush.msra.mxu0 %v2522
  %2579 = vmatpush.msra.mxu0 %v2520
  %2580 = vmatpush.msra.mxu0 %v2518
  %2581 = vmatmul.f32.gmra.mxu0 %v2542
  %v2582 = vpop.f32.mrf.mxu0
  %v2583 = vadd.f32 0.0, %v2582
  %2584 = vmatmul.f32.gmra.mxu0 %v2545
  %v2585 = vpop.f32.mrf.mxu0
  %v2586 = vadd.f32 0.0, %v2585
  %2587 = vmatmul.f32.gmra.mxu0 %v2548
  %v2588 = vpop.f32.mrf.mxu0
  %v2589 = vadd.f32 0.0, %v2588
  %2590 = vmatmul.f32.gmra.mxu0 %v2551
  %v2591 = vpop.f32.mrf.mxu0
  %v2592 = vadd.f32 0.0, %v2591
  %2593 = vmatmul.f32.gmra.mxu0 %v2554
  %v2594 = vpop.f32.mrf.mxu0
  %v2595 = vadd.f32 0.0, %v2594
  %2596 = vmatmul.f32.gmra.mxu0 %v2557
  %v2597 = vpop.f32.mrf.mxu0
  %v2598 = vadd.f32 0.0, %v2597
  %2599 = vmatmul.f32.gmra.mxu0 %v2560
  %v2600 = vpop.f32.mrf.mxu0
  %v2601 = vadd.f32 0.0, %v2600
  %2602 = vmatmul.f32.gmra.mxu0 %v2563
  %v2603 = vpop.f32.mrf.mxu0
  %v2604 = vadd.f32 0.0, %v2603
  %2605 = vdwg.mxu0
  %2606 = vst.msk [vmem:[#allocation2 + $0x40] sm:$0xff] %vm583, %v2583
  %2607 = vst.msk [vmem:[#allocation2 + $0x48] sm:$0xff] %vm583, %v2586
  %2608 = vst.msk [vmem:[#allocation2 + $0x50] sm:$0xff] %vm583, %v2589
  %2609 = vst.msk [vmem:[#allocation2 + $0x58] sm:$0xff] %vm583, %v2592
  %2610 = vst.msk [vmem:[#allocation2 + $0x60] sm:$0xff] %vm583, %v2595
  %2611 = vst.msk [vmem:[#allocation2 + $0x68] sm:$0xff] %vm583, %v2598
  %2612 = vst.msk [vmem:[#allocation2 + $0x70] sm:$0xff] %vm583, %v2601
  %2613 = vst.msk [vmem:[#allocation2 + $0x78] sm:$0xff] %vm583, %v2604
  %2614 = vrot.lane.b32.xlu0 %v536, 120
  %v2615 = vpop.permute.xlu0 %2614
  %2616 = vrot.lane.b32.xlu0 %v539, 120
  %v2617 = vpop.permute.xlu0 %2616
  %2618 = vrot.lane.b32.xlu0 %v542, 120
  %v2619 = vpop.permute.xlu0 %2618
  %2620 = vrot.lane.b32.xlu0 %v545, 120
  %v2621 = vpop.permute.xlu0 %2620
  %2622 = vrot.lane.b32.xlu0 %v548, 120
  %v2623 = vpop.permute.xlu0 %2622
  %2624 = vrot.lane.b32.xlu0 %v551, 120
  %v2625 = vpop.permute.xlu0 %2624
  %2626 = vrot.lane.b32.xlu0 %v554, 120
  %v2627 = vpop.permute.xlu0 %2626
  %2628 = vrot.lane.b32.xlu0 %v557, 120
  %v2629 = vpop.permute.xlu0 %2628
  %2630 = vrot.lane.b32.xlu0 %v536, 88
  %v2631 = vpop.permute.xlu0 %2630
  %2632 = vrot.lane.b32.xlu0 %v539, 88
  %v2633 = vpop.permute.xlu0 %2632
  %2634 = vrot.lane.b32.xlu0 %v542, 88
  %v2635 = vpop.permute.xlu0 %2634
  %2636 = vrot.lane.b32.xlu0 %v545, 88
  %v2637 = vpop.permute.xlu0 %2636
  %2638 = vrot.lane.b32.xlu0 %v548, 88
  %v2639 = vpop.permute.xlu0 %2638
  %2640 = vrot.lane.b32.xlu0 %v551, 88
  %v2641 = vpop.permute.xlu0 %2640
  %2642 = vrot.lane.b32.xlu0 %v554, 88
  %v2643 = vpop.permute.xlu0 %2642
  %2644 = vrot.lane.b32.xlu0 %v557, 88
  %v2645 = vpop.permute.xlu0 %2644
  %v2646 = vsel %vm583, %v2615, 0
  %v2648 = vsel %vm583, %v2617, 0
  %v2650 = vsel %vm583, %v2619, 0
  %v2652 = vsel %vm583, %v2621, 0
  %v2654 = vsel %vm583, %v2623, 0
  %v2656 = vsel %vm583, %v2625, 0
  %v2658 = vsel %vm583, %v2627, 0
  %v2660 = vsel %vm583, %v2629, 0
  %v2662 = vsel %vm583, %v2631, 0
  %v2664 = vsel %vm583, %v2633, 0
  %v2666 = vsel %vm583, %v2635, 0
  %v2668 = vsel %vm583, %v2637, 0
  %v2670 = vsel %vm583, %v2639, 0
  %v2672 = vsel %vm583, %v2641, 0
  %v2674 = vsel %vm583, %v2643, 0
  %v2676 = vsel %vm583, %v2645, 0
  %2678 = vmatpush.xpose.msra.mxu0 0.0
  %2679 = vmatpush.xpose.msra.mxu0 0.0
  %2680 = vmatpush.xpose.msra.mxu0 0.0
  %2681 = vmatpush.xpose.msra.mxu0 0.0
  %2682 = vmatpush.xpose.msra.mxu0 0.0
  %2683 = vmatpush.xpose.msra.mxu0 0.0
  %2684 = vmatpush.xpose.msra.mxu0 0.0
  %2685 = vmatpush.xpose.msra.mxu0 0.0
  %2686 = vmatpush.xpose.msra.mxu0 %v2676
  %2687 = vmatpush.xpose.msra.mxu0 %v2674
  %2688 = vmatpush.xpose.msra.mxu0 %v2672
  %2689 = vmatpush.xpose.msra.mxu0 %v2670
  %2690 = vmatpush.xpose.msra.mxu0 %v2668
  %2691 = vmatpush.xpose.msra.mxu0 %v2666
  %2692 = vmatpush.xpose.msra.mxu0 %v2664
  %2693 = vmatpush.xpose.msra.mxu0 %v2662
  %2694 = vmatmul.f32.gmra.mxu0 %v2646
  %v2695 = vpop.f32.mrf.mxu0
  %v2696 = vadd.f32 0.0, %v2695
  %2697 = vmatmul.f32.gmra.mxu0 %v2648
  %v2698 = vpop.f32.mrf.mxu0
  %v2699 = vadd.f32 0.0, %v2698
  %2700 = vmatmul.f32.gmra.mxu0 %v2650
  %v2701 = vpop.f32.mrf.mxu0
  %v2702 = vadd.f32 0.0, %v2701
  %2703 = vmatmul.f32.gmra.mxu0 %v2652
  %v2704 = vpop.f32.mrf.mxu0
  %v2705 = vadd.f32 0.0, %v2704
  %2706 = vmatmul.f32.gmra.mxu0 %v2654
  %v2707 = vpop.f32.mrf.mxu0
  %v2708 = vadd.f32 0.0, %v2707
  %2709 = vmatmul.f32.gmra.mxu0 %v2656
  %v2710 = vpop.f32.mrf.mxu0
  %v2711 = vadd.f32 0.0, %v2710
  %2712 = vmatmul.f32.gmra.mxu0 %v2658
  %v2713 = vpop.f32.mrf.mxu0
  %v2714 = vadd.f32 0.0, %v2713
  %2715 = vmatmul.f32.gmra.mxu0 %v2660
  %v2716 = vpop.f32.mrf.mxu0
  %v2717 = vadd.f32 0.0, %v2716
  %2718 = vdwg.mxu0
  %v2719 = vsel %vm657, %v2696, -inf
  %2720 = vmax.xlane.f32.xlu0 %v2719
  %v2721 = vpop.xlane.xlu0 %2720
  %v2722 = vsel %vm657, %v2699, -inf
  %2723 = vmax.xlane.f32.xlu0 %v2722
  %v2724 = vpop.xlane.xlu0 %2723
  %v2725 = vsel %vm657, %v2702, -inf
  %2726 = vmax.xlane.f32.xlu0 %v2725
  %v2727 = vpop.xlane.xlu0 %2726
  %v2728 = vsel %vm657, %v2705, -inf
  %2729 = vmax.xlane.f32.xlu0 %v2728
  %v2730 = vpop.xlane.xlu0 %2729
  %v2731 = vsel %vm657, %v2708, -inf
  %2732 = vmax.xlane.f32.xlu0 %v2731
  %v2733 = vpop.xlane.xlu0 %2732
  %v2734 = vsel %vm657, %v2711, -inf
  %2735 = vmax.xlane.f32.xlu0 %v2734
  %v2736 = vpop.xlane.xlu0 %2735
  %v2737 = vsel %vm657, %v2714, -inf
  %2738 = vmax.xlane.f32.xlu0 %v2737
  %v2739 = vpop.xlane.xlu0 %2738
  %v2740 = vsel %vm657, %v2717, -inf
  %2741 = vmax.xlane.f32.xlu0 %v2740
  %v2742 = vpop.xlane.xlu0 %2741
  %v2743 = vsub.f32 %v2696, %v2721
  %v2744 = vsub.f32 %v2699, %v2724
  %v2745 = vsub.f32 %v2702, %v2727
  %v2746 = vsub.f32 %v2705, %v2730
  %v2747 = vsub.f32 %v2708, %v2733
  %v2748 = vsub.f32 %v2711, %v2736
  %v2749 = vsub.f32 %v2714, %v2739
  %v2750 = vsub.f32 %v2717, %v2742
  %v2751 = vmul.f32 %v2743, 1.442695
  %v2752 = vpow.pop %v2751
  %v2753 = vmul.f32 %v2744, 1.442695
  %v2754 = vpow.pop %v2753
  %v2755 = vmul.f32 %v2745, 1.442695
  %v2756 = vpow.pop %v2755
  %v2757 = vmul.f32 %v2746, 1.442695
  %v2758 = vpow.pop %v2757
  %v2759 = vmul.f32 %v2747, 1.442695
  %v2760 = vpow.pop %v2759
  %v2761 = vmul.f32 %v2748, 1.442695
  %v2762 = vpow.pop %v2761
  %v2763 = vmul.f32 %v2749, 1.442695
  %v2764 = vpow.pop %v2763
  %v2765 = vmul.f32 %v2750, 1.442695
  %v2766 = vpow.pop %v2765
  %v2767 = vsel %vm657, %v2752, 0.0
  %2768 = vadd.xlane.f32.xlu0 %v2767
  %v2769 = vpop.xlane.xlu0 %2768
  %v2770 = vsel %vm657, %v2754, 0.0
  %2771 = vadd.xlane.f32.xlu0 %v2770
  %v2772 = vpop.xlane.xlu0 %2771
  %v2773 = vsel %vm657, %v2756, 0.0
  %2774 = vadd.xlane.f32.xlu0 %v2773
  %v2775 = vpop.xlane.xlu0 %2774
  %v2776 = vsel %vm657, %v2758, 0.0
  %2777 = vadd.xlane.f32.xlu0 %v2776
  %v2778 = vpop.xlane.xlu0 %2777
  %v2779 = vsel %vm657, %v2760, 0.0
  %2780 = vadd.xlane.f32.xlu0 %v2779
  %v2781 = vpop.xlane.xlu0 %2780
  %v2782 = vsel %vm657, %v2762, 0.0
  %2783 = vadd.xlane.f32.xlu0 %v2782
  %v2784 = vpop.xlane.xlu0 %2783
  %v2785 = vsel %vm657, %v2764, 0.0
  %2786 = vadd.xlane.f32.xlu0 %v2785
  %v2787 = vpop.xlane.xlu0 %2786
  %v2788 = vsel %vm657, %v2766, 0.0
  %2789 = vadd.xlane.f32.xlu0 %v2788
  %v2790 = vpop.xlane.xlu0 %2789
  %v2791 = vrcp.pop %v2769
  %v2792 = vmul.f32 %v2769, %v2791
  %v2793 = vsub.f32 1.0, %v2792
  %v2794 = vmul.f32 %v2791, %v2793
  %v2795 = vadd.f32 %v2791, %v2794
  %vm2796 = vweird.f32 %v2769
  %vm2797 = vweird.f32 %v2791
  %vm2798 = vmor %vm2796, %vm2797
  %v2799 = vsel %vm2798, %v2791, %v2795
  %v2800 = vand.u32 2147483647, %v2769
  %vm2801 = vcmp.eq.f32.partialorder %v2800, 8.507059e+37
  %v2802 = vand.u32 %v2769, 2147483648
  %v2803 = vor.u32 1.1754944e-38, %v2802
  %v2804 = vsel %vm2801, %v2803, %v2799
  %v2805 = vmul.f32 %v2752, %v2804
  %v2806 = vrcp.pop %v2772
  %v2807 = vmul.f32 %v2772, %v2806
  %v2808 = vsub.f32 1.0, %v2807
  %v2809 = vmul.f32 %v2806, %v2808
  %v2810 = vadd.f32 %v2806, %v2809
  %vm2811 = vweird.f32 %v2772
  %vm2812 = vweird.f32 %v2806
  %vm2813 = vmor %vm2811, %vm2812
  %v2814 = vsel %vm2813, %v2806, %v2810
  %v2815 = vand.u32 2147483647, %v2772
  %vm2816 = vcmp.eq.f32.partialorder %v2815, 8.507059e+37
  %v2817 = vand.u32 %v2772, 2147483648
  %v2818 = vor.u32 1.1754944e-38, %v2817
  %v2819 = vsel %vm2816, %v2818, %v2814
  %v2820 = vmul.f32 %v2754, %v2819
  %v2821 = vrcp.pop %v2775
  %v2822 = vmul.f32 %v2775, %v2821
  %v2823 = vsub.f32 1.0, %v2822
  %v2824 = vmul.f32 %v2821, %v2823
  %v2825 = vadd.f32 %v2821, %v2824
  %vm2826 = vweird.f32 %v2775
  %vm2827 = vweird.f32 %v2821
  %vm2828 = vmor %vm2826, %vm2827
  %v2829 = vsel %vm2828, %v2821, %v2825
  %v2830 = vand.u32 2147483647, %v2775
  %vm2831 = vcmp.eq.f32.partialorder %v2830, 8.507059e+37
  %v2832 = vand.u32 %v2775, 2147483648
  %v2833 = vor.u32 1.1754944e-38, %v2832
  %v2834 = vsel %vm2831, %v2833, %v2829
  %v2835 = vmul.f32 %v2756, %v2834
  %v2836 = vrcp.pop %v2778
  %v2837 = vmul.f32 %v2778, %v2836
  %v2838 = vsub.f32 1.0, %v2837
  %v2839 = vmul.f32 %v2836, %v2838
  %v2840 = vadd.f32 %v2836, %v2839
  %vm2841 = vweird.f32 %v2778
  %vm2842 = vweird.f32 %v2836
  %vm2843 = vmor %vm2841, %vm2842
  %v2844 = vsel %vm2843, %v2836, %v2840
  %v2845 = vand.u32 2147483647, %v2778
  %vm2846 = vcmp.eq.f32.partialorder %v2845, 8.507059e+37
  %v2847 = vand.u32 %v2778, 2147483648
  %v2848 = vor.u32 1.1754944e-38, %v2847
  %v2849 = vsel %vm2846, %v2848, %v2844
  %v2850 = vmul.f32 %v2758, %v2849
  %v2851 = vrcp.pop %v2781
  %v2852 = vmul.f32 %v2781, %v2851
  %v2853 = vsub.f32 1.0, %v2852
  %v2854 = vmul.f32 %v2851, %v2853
  %v2855 = vadd.f32 %v2851, %v2854
  %vm2856 = vweird.f32 %v2781
  %vm2857 = vweird.f32 %v2851
  %vm2858 = vmor %vm2856, %vm2857
  %v2859 = vsel %vm2858, %v2851, %v2855
  %v2860 = vand.u32 2147483647, %v2781
  %vm2861 = vcmp.eq.f32.partialorder %v2860, 8.507059e+37
  %v2862 = vand.u32 %v2781, 2147483648
  %v2863 = vor.u32 1.1754944e-38, %v2862
  %v2864 = vsel %vm2861, %v2863, %v2859
  %v2865 = vmul.f32 %v2760, %v2864
  %v2866 = vrcp.pop %v2784
  %v2867 = vmul.f32 %v2784, %v2866
  %v2868 = vsub.f32 1.0, %v2867
  %v2869 = vmul.f32 %v2866, %v2868
  %v2870 = vadd.f32 %v2866, %v2869
  %vm2871 = vweird.f32 %v2784
  %vm2872 = vweird.f32 %v2866
  %vm2873 = vmor %vm2871, %vm2872
  %v2874 = vsel %vm2873, %v2866, %v2870
  %v2875 = vand.u32 2147483647, %v2784
  %vm2876 = vcmp.eq.f32.partialorder %v2875, 8.507059e+37
  %v2877 = vand.u32 %v2784, 2147483648
  %v2878 = vor.u32 1.1754944e-38, %v2877
  %v2879 = vsel %vm2876, %v2878, %v2874
  %v2880 = vmul.f32 %v2762, %v2879
  %v2881 = vrcp.pop %v2787
  %v2882 = vmul.f32 %v2787, %v2881
  %v2883 = vsub.f32 1.0, %v2882
  %v2884 = vmul.f32 %v2881, %v2883
  %v2885 = vadd.f32 %v2881, %v2884
  %vm2886 = vweird.f32 %v2787
  %vm2887 = vweird.f32 %v2881
  %vm2888 = vmor %vm2886, %vm2887
  %v2889 = vsel %vm2888, %v2881, %v2885
  %v2890 = vand.u32 2147483647, %v2787
  %vm2891 = vcmp.eq.f32.partialorder %v2890, 8.507059e+37
  %v2892 = vand.u32 %v2787, 2147483648
  %v2893 = vor.u32 1.1754944e-38, %v2892
  %v2894 = vsel %vm2891, %v2893, %v2889
  %v2895 = vmul.f32 %v2764, %v2894
  %v2896 = vrcp.pop %v2790
  %v2897 = vmul.f32 %v2790, %v2896
  %v2898 = vsub.f32 1.0, %v2897
  %v2899 = vmul.f32 %v2896, %v2898
  %v2900 = vadd.f32 %v2896, %v2899
  %vm2901 = vweird.f32 %v2790
  %vm2902 = vweird.f32 %v2896
  %vm2903 = vmor %vm2901, %vm2902
  %v2904 = vsel %vm2903, %v2896, %v2900
  %v2905 = vand.u32 2147483647, %v2790
  %vm2906 = vcmp.eq.f32.partialorder %v2905, 8.507059e+37
  %v2907 = vand.u32 %v2790, 2147483648
  %v2908 = vor.u32 1.1754944e-38, %v2907
  %v2909 = vsel %vm2906, %v2908, %v2904
  %v2910 = vmul.f32 %v2766, %v2909
  %2911 = vrot.lane.b32.xlu0 %v536, 56
  %v2912 = vpop.permute.xlu0 %2911
  %2913 = vrot.lane.b32.xlu0 %v539, 56
  %v2914 = vpop.permute.xlu0 %2913
  %2915 = vrot.lane.b32.xlu0 %v542, 56
  %v2916 = vpop.permute.xlu0 %2915
  %2917 = vrot.lane.b32.xlu0 %v545, 56
  %v2918 = vpop.permute.xlu0 %2917
  %2919 = vrot.lane.b32.xlu0 %v548, 56
  %v2920 = vpop.permute.xlu0 %2919
  %2921 = vrot.lane.b32.xlu0 %v551, 56
  %v2922 = vpop.permute.xlu0 %2921
  %2923 = vrot.lane.b32.xlu0 %v554, 56
  %v2924 = vpop.permute.xlu0 %2923
  %2925 = vrot.lane.b32.xlu0 %v557, 56
  %v2926 = vpop.permute.xlu0 %2925
  %v2936 = vsel %vm657, %v2805, 0
  %v2939 = vsel %vm657, %v2820, 0
  %v2942 = vsel %vm657, %v2835, 0
  %v2945 = vsel %vm657, %v2850, 0
  %v2948 = vsel %vm657, %v2865, 0
  %v2951 = vsel %vm657, %v2880, 0
  %v2954 = vsel %vm657, %v2895, 0
  %v2957 = vsel %vm657, %v2910, 0
  %2959 = vmatpush.msra.mxu0 0.0
  %2960 = vmatpush.msra.mxu0 0.0
  %2961 = vmatpush.msra.mxu0 0.0
  %2962 = vmatpush.msra.mxu0 0.0
  %2963 = vmatpush.msra.mxu0 0.0
  %2964 = vmatpush.msra.mxu0 0.0
  %2965 = vmatpush.msra.mxu0 0.0
  %2966 = vmatpush.msra.mxu0 0.0
  %2967 = vmatpush.msra.mxu0 %v2926
  %2968 = vmatpush.msra.mxu0 %v2924
  %2969 = vmatpush.msra.mxu0 %v2922
  %2970 = vmatpush.msra.mxu0 %v2920
  %2971 = vmatpush.msra.mxu0 %v2918
  %2972 = vmatpush.msra.mxu0 %v2916
  %2973 = vmatpush.msra.mxu0 %v2914
  %2974 = vmatpush.msra.mxu0 %v2912
  %2975 = vmatmul.f32.gmra.mxu0 %v2936
  %v2976 = vpop.f32.mrf.mxu0
  %v2977 = vadd.f32 0.0, %v2976
  %2978 = vmatmul.f32.gmra.mxu0 %v2939
  %v2979 = vpop.f32.mrf.mxu0
  %v2980 = vadd.f32 0.0, %v2979
  %2981 = vmatmul.f32.gmra.mxu0 %v2942
  %v2982 = vpop.f32.mrf.mxu0
  %v2983 = vadd.f32 0.0, %v2982
  %2984 = vmatmul.f32.gmra.mxu0 %v2945
  %v2985 = vpop.f32.mrf.mxu0
  %v2986 = vadd.f32 0.0, %v2985
  %2987 = vmatmul.f32.gmra.mxu0 %v2948
  %v2988 = vpop.f32.mrf.mxu0
  %v2989 = vadd.f32 0.0, %v2988
  %2990 = vmatmul.f32.gmra.mxu0 %v2951
  %v2991 = vpop.f32.mrf.mxu0
  %v2992 = vadd.f32 0.0, %v2991
  %2993 = vmatmul.f32.gmra.mxu0 %v2954
  %v2994 = vpop.f32.mrf.mxu0
  %v2995 = vadd.f32 0.0, %v2994
  %2996 = vmatmul.f32.gmra.mxu0 %v2957
  %v2997 = vpop.f32.mrf.mxu0
  %v2998 = vadd.f32 0.0, %v2997
  %2999 = vdwg.mxu0
  %3008 = vrot.lane.b32.xlu0 %v2977, 8
  %v3009 = vpop.permute.xlu0 %3008
  %3010 = vrot.lane.b32.xlu0 %v2980, 8
  %v3011 = vpop.permute.xlu0 %3010
  %3012 = vrot.lane.b32.xlu0 %v2983, 8
  %v3013 = vpop.permute.xlu0 %3012
  %3014 = vrot.lane.b32.xlu0 %v2986, 8
  %v3015 = vpop.permute.xlu0 %3014
  %3016 = vrot.lane.b32.xlu0 %v2989, 8
  %v3017 = vpop.permute.xlu0 %3016
  %3018 = vrot.lane.b32.xlu0 %v2992, 8
  %v3019 = vpop.permute.xlu0 %3018
  %3020 = vrot.lane.b32.xlu0 %v2995, 8
  %v3021 = vpop.permute.xlu0 %3020
  %3022 = vrot.lane.b32.xlu0 %v2998, 8
  %v3023 = vpop.permute.xlu0 %3022
  %3032 = vst.msk [vmem:[#allocation2 + $0x40] sm:$0xff] %vm1365, %v3009
  %3033 = vst.msk [vmem:[#allocation2 + $0x48] sm:$0xff] %vm1365, %v3011
  %3034 = vst.msk [vmem:[#allocation2 + $0x50] sm:$0xff] %vm1365, %v3013
  %3035 = vst.msk [vmem:[#allocation2 + $0x58] sm:$0xff] %vm1365, %v3015
  %3036 = vst.msk [vmem:[#allocation2 + $0x60] sm:$0xff] %vm1365, %v3017
  %3037 = vst.msk [vmem:[#allocation2 + $0x68] sm:$0xff] %vm1365, %v3019
  %3038 = vst.msk [vmem:[#allocation2 + $0x70] sm:$0xff] %vm1365, %v3021
  %3039 = vst.msk [vmem:[#allocation2 + $0x78] sm:$0xff] %vm1365, %v3023
  %3040 = vrot.lane.b32.xlu0 %v536, 112
  %v3041 = vpop.permute.xlu0 %3040
  %3042 = vrot.lane.b32.xlu0 %v539, 112
  %v3043 = vpop.permute.xlu0 %3042
  %3044 = vrot.lane.b32.xlu0 %v542, 112
  %v3045 = vpop.permute.xlu0 %3044
  %3046 = vrot.lane.b32.xlu0 %v545, 112
  %v3047 = vpop.permute.xlu0 %3046
  %3048 = vrot.lane.b32.xlu0 %v548, 112
  %v3049 = vpop.permute.xlu0 %3048
  %3050 = vrot.lane.b32.xlu0 %v551, 112
  %v3051 = vpop.permute.xlu0 %3050
  %3052 = vrot.lane.b32.xlu0 %v554, 112
  %v3053 = vpop.permute.xlu0 %3052
  %3054 = vrot.lane.b32.xlu0 %v557, 112
  %v3055 = vpop.permute.xlu0 %3054
  %3056 = vrot.lane.b32.xlu0 %v536, 80
  %v3057 = vpop.permute.xlu0 %3056
  %3058 = vrot.lane.b32.xlu0 %v539, 80
  %v3059 = vpop.permute.xlu0 %3058
  %3060 = vrot.lane.b32.xlu0 %v542, 80
  %v3061 = vpop.permute.xlu0 %3060
  %3062 = vrot.lane.b32.xlu0 %v545, 80
  %v3063 = vpop.permute.xlu0 %3062
  %3064 = vrot.lane.b32.xlu0 %v548, 80
  %v3065 = vpop.permute.xlu0 %3064
  %3066 = vrot.lane.b32.xlu0 %v551, 80
  %v3067 = vpop.permute.xlu0 %3066
  %3068 = vrot.lane.b32.xlu0 %v554, 80
  %v3069 = vpop.permute.xlu0 %3068
  %3070 = vrot.lane.b32.xlu0 %v557, 80
  %v3071 = vpop.permute.xlu0 %3070
  %v3072 = vsel %vm583, %v3041, 0
  %v3074 = vsel %vm583, %v3043, 0
  %v3076 = vsel %vm583, %v3045, 0
  %v3078 = vsel %vm583, %v3047, 0
  %v3080 = vsel %vm583, %v3049, 0
  %v3082 = vsel %vm583, %v3051, 0
  %v3084 = vsel %vm583, %v3053, 0
  %v3086 = vsel %vm583, %v3055, 0
  %v3088 = vsel %vm583, %v3057, 0
  %v3090 = vsel %vm583, %v3059, 0
  %v3092 = vsel %vm583, %v3061, 0
  %v3094 = vsel %vm583, %v3063, 0
  %v3096 = vsel %vm583, %v3065, 0
  %v3098 = vsel %vm583, %v3067, 0
  %v3100 = vsel %vm583, %v3069, 0
  %v3102 = vsel %vm583, %v3071, 0
  %3104 = vmatpush.xpose.msra.mxu0 0.0
  %3105 = vmatpush.xpose.msra.mxu0 0.0
  %3106 = vmatpush.xpose.msra.mxu0 0.0
  %3107 = vmatpush.xpose.msra.mxu0 0.0
  %3108 = vmatpush.xpose.msra.mxu0 0.0
  %3109 = vmatpush.xpose.msra.mxu0 0.0
  %3110 = vmatpush.xpose.msra.mxu0 0.0
  %3111 = vmatpush.xpose.msra.mxu0 0.0
  %3112 = vmatpush.xpose.msra.mxu0 %v3102
  %3113 = vmatpush.xpose.msra.mxu0 %v3100
  %3114 = vmatpush.xpose.msra.mxu0 %v3098
  %3115 = vmatpush.xpose.msra.mxu0 %v3096
  %3116 = vmatpush.xpose.msra.mxu0 %v3094
  %3117 = vmatpush.xpose.msra.mxu0 %v3092
  %3118 = vmatpush.xpose.msra.mxu0 %v3090
  %3119 = vmatpush.xpose.msra.mxu0 %v3088
  %3120 = vmatmul.f32.gmra.mxu0 %v3072
  %v3121 = vpop.f32.mrf.mxu0
  %v3122 = vadd.f32 0.0, %v3121
  %3123 = vmatmul.f32.gmra.mxu0 %v3074
  %v3124 = vpop.f32.mrf.mxu0
  %v3125 = vadd.f32 0.0, %v3124
  %3126 = vmatmul.f32.gmra.mxu0 %v3076
  %v3127 = vpop.f32.mrf.mxu0
  %v3128 = vadd.f32 0.0, %v3127
  %3129 = vmatmul.f32.gmra.mxu0 %v3078
  %v3130 = vpop.f32.mrf.mxu0
  %v3131 = vadd.f32 0.0, %v3130
  %3132 = vmatmul.f32.gmra.mxu0 %v3080
  %v3133 = vpop.f32.mrf.mxu0
  %v3134 = vadd.f32 0.0, %v3133
  %3135 = vmatmul.f32.gmra.mxu0 %v3082
  %v3136 = vpop.f32.mrf.mxu0
  %v3137 = vadd.f32 0.0, %v3136
  %3138 = vmatmul.f32.gmra.mxu0 %v3084
  %v3139 = vpop.f32.mrf.mxu0
  %v3140 = vadd.f32 0.0, %v3139
  %3141 = vmatmul.f32.gmra.mxu0 %v3086
  %v3142 = vpop.f32.mrf.mxu0
  %v3143 = vadd.f32 0.0, %v3142
  %3144 = vdwg.mxu0
  %v3145 = vsel %vm657, %v3122, -inf
  %3146 = vmax.xlane.f32.xlu0 %v3145
  %v3147 = vpop.xlane.xlu0 %3146
  %v3148 = vsel %vm657, %v3125, -inf
  %3149 = vmax.xlane.f32.xlu0 %v3148
  %v3150 = vpop.xlane.xlu0 %3149
  %v3151 = vsel %vm657, %v3128, -inf
  %3152 = vmax.xlane.f32.xlu0 %v3151
  %v3153 = vpop.xlane.xlu0 %3152
  %v3154 = vsel %vm657, %v3131, -inf
  %3155 = vmax.xlane.f32.xlu0 %v3154
  %v3156 = vpop.xlane.xlu0 %3155
  %v3157 = vsel %vm657, %v3134, -inf
  %3158 = vmax.xlane.f32.xlu0 %v3157
  %v3159 = vpop.xlane.xlu0 %3158
  %v3160 = vsel %vm657, %v3137, -inf
  %3161 = vmax.xlane.f32.xlu0 %v3160
  %v3162 = vpop.xlane.xlu0 %3161
  %v3163 = vsel %vm657, %v3140, -inf
  %3164 = vmax.xlane.f32.xlu0 %v3163
  %v3165 = vpop.xlane.xlu0 %3164
  %v3166 = vsel %vm657, %v3143, -inf
  %3167 = vmax.xlane.f32.xlu0 %v3166
  %v3168 = vpop.xlane.xlu0 %3167
  %v3169 = vsub.f32 %v3122, %v3147
  %v3170 = vsub.f32 %v3125, %v3150
  %v3171 = vsub.f32 %v3128, %v3153
  %v3172 = vsub.f32 %v3131, %v3156
  %v3173 = vsub.f32 %v3134, %v3159
  %v3174 = vsub.f32 %v3137, %v3162
  %v3175 = vsub.f32 %v3140, %v3165
  %v3176 = vsub.f32 %v3143, %v3168
  %v3177 = vmul.f32 %v3169, 1.442695
  %v3178 = vpow.pop %v3177
  %v3179 = vmul.f32 %v3170, 1.442695
  %v3180 = vpow.pop %v3179
  %v3181 = vmul.f32 %v3171, 1.442695
  %v3182 = vpow.pop %v3181
  %v3183 = vmul.f32 %v3172, 1.442695
  %v3184 = vpow.pop %v3183
  %v3185 = vmul.f32 %v3173, 1.442695
  %v3186 = vpow.pop %v3185
  %v3187 = vmul.f32 %v3174, 1.442695
  %v3188 = vpow.pop %v3187
  %v3189 = vmul.f32 %v3175, 1.442695
  %v3190 = vpow.pop %v3189
  %v3191 = vmul.f32 %v3176, 1.442695
  %v3192 = vpow.pop %v3191
  %v3193 = vsel %vm657, %v3178, 0.0
  %3194 = vadd.xlane.f32.xlu0 %v3193
  %v3195 = vpop.xlane.xlu0 %3194
  %v3196 = vsel %vm657, %v3180, 0.0
  %3197 = vadd.xlane.f32.xlu0 %v3196
  %v3198 = vpop.xlane.xlu0 %3197
  %v3199 = vsel %vm657, %v3182, 0.0
  %3200 = vadd.xlane.f32.xlu0 %v3199
  %v3201 = vpop.xlane.xlu0 %3200
  %v3202 = vsel %vm657, %v3184, 0.0
  %3203 = vadd.xlane.f32.xlu0 %v3202
  %v3204 = vpop.xlane.xlu0 %3203
  %v3205 = vsel %vm657, %v3186, 0.0
  %3206 = vadd.xlane.f32.xlu0 %v3205
  %v3207 = vpop.xlane.xlu0 %3206
  %v3208 = vsel %vm657, %v3188, 0.0
  %3209 = vadd.xlane.f32.xlu0 %v3208
  %v3210 = vpop.xlane.xlu0 %3209
  %v3211 = vsel %vm657, %v3190, 0.0
  %3212 = vadd.xlane.f32.xlu0 %v3211
  %v3213 = vpop.xlane.xlu0 %3212
  %v3214 = vsel %vm657, %v3192, 0.0
  %3215 = vadd.xlane.f32.xlu0 %v3214
  %v3216 = vpop.xlane.xlu0 %3215
  %v3217 = vrcp.pop %v3195
  %v3218 = vmul.f32 %v3195, %v3217
  %v3219 = vsub.f32 1.0, %v3218
  %v3220 = vmul.f32 %v3217, %v3219
  %v3221 = vadd.f32 %v3217, %v3220
  %vm3222 = vweird.f32 %v3195
  %vm3223 = vweird.f32 %v3217
  %vm3224 = vmor %vm3222, %vm3223
  %v3225 = vsel %vm3224, %v3217, %v3221
  %v3226 = vand.u32 2147483647, %v3195
  %vm3227 = vcmp.eq.f32.partialorder %v3226, 8.507059e+37
  %v3228 = vand.u32 %v3195, 2147483648
  %v3229 = vor.u32 1.1754944e-38, %v3228
  %v3230 = vsel %vm3227, %v3229, %v3225
  %v3231 = vmul.f32 %v3178, %v3230
  %v3232 = vrcp.pop %v3198
  %v3233 = vmul.f32 %v3198, %v3232
  %v3234 = vsub.f32 1.0, %v3233
  %v3235 = vmul.f32 %v3232, %v3234
  %v3236 = vadd.f32 %v3232, %v3235
  %vm3237 = vweird.f32 %v3198
  %vm3238 = vweird.f32 %v3232
  %vm3239 = vmor %vm3237, %vm3238
  %v3240 = vsel %vm3239, %v3232, %v3236
  %v3241 = vand.u32 2147483647, %v3198
  %vm3242 = vcmp.eq.f32.partialorder %v3241, 8.507059e+37
  %v3243 = vand.u32 %v3198, 2147483648
  %v3244 = vor.u32 1.1754944e-38, %v3243
  %v3245 = vsel %vm3242, %v3244, %v3240
  %v3246 = vmul.f32 %v3180, %v3245
  %v3247 = vrcp.pop %v3201
  %v3248 = vmul.f32 %v3201, %v3247
  %v3249 = vsub.f32 1.0, %v3248
  %v3250 = vmul.f32 %v3247, %v3249
  %v3251 = vadd.f32 %v3247, %v3250
  %vm3252 = vweird.f32 %v3201
  %vm3253 = vweird.f32 %v3247
  %vm3254 = vmor %vm3252, %vm3253
  %v3255 = vsel %vm3254, %v3247, %v3251
  %v3256 = vand.u32 2147483647, %v3201
  %vm3257 = vcmp.eq.f32.partialorder %v3256, 8.507059e+37
  %v3258 = vand.u32 %v3201, 2147483648
  %v3259 = vor.u32 1.1754944e-38, %v3258
  %v3260 = vsel %vm3257, %v3259, %v3255
  %v3261 = vmul.f32 %v3182, %v3260
  %v3262 = vrcp.pop %v3204
  %v3263 = vmul.f32 %v3204, %v3262
  %v3264 = vsub.f32 1.0, %v3263
  %v3265 = vmul.f32 %v3262, %v3264
  %v3266 = vadd.f32 %v3262, %v3265
  %vm3267 = vweird.f32 %v3204
  %vm3268 = vweird.f32 %v3262
  %vm3269 = vmor %vm3267, %vm3268
  %v3270 = vsel %vm3269, %v3262, %v3266
  %v3271 = vand.u32 2147483647, %v3204
  %vm3272 = vcmp.eq.f32.partialorder %v3271, 8.507059e+37
  %v3273 = vand.u32 %v3204, 2147483648
  %v3274 = vor.u32 1.1754944e-38, %v3273
  %v3275 = vsel %vm3272, %v3274, %v3270
  %v3276 = vmul.f32 %v3184, %v3275
  %v3277 = vrcp.pop %v3207
  %v3278 = vmul.f32 %v3207, %v3277
  %v3279 = vsub.f32 1.0, %v3278
  %v3280 = vmul.f32 %v3277, %v3279
  %v3281 = vadd.f32 %v3277, %v3280
  %vm3282 = vweird.f32 %v3207
  %vm3283 = vweird.f32 %v3277
  %vm3284 = vmor %vm3282, %vm3283
  %v3285 = vsel %vm3284, %v3277, %v3281
  %v3286 = vand.u32 2147483647, %v3207
  %vm3287 = vcmp.eq.f32.partialorder %v3286, 8.507059e+37
  %v3288 = vand.u32 %v3207, 2147483648
  %v3289 = vor.u32 1.1754944e-38, %v3288
  %v3290 = vsel %vm3287, %v3289, %v3285
  %v3291 = vmul.f32 %v3186, %v3290
  %v3292 = vrcp.pop %v3210
  %v3293 = vmul.f32 %v3210, %v3292
  %v3294 = vsub.f32 1.0, %v3293
  %v3295 = vmul.f32 %v3292, %v3294
  %v3296 = vadd.f32 %v3292, %v3295
  %vm3297 = vweird.f32 %v3210
  %vm3298 = vweird.f32 %v3292
  %vm3299 = vmor %vm3297, %vm3298
  %v3300 = vsel %vm3299, %v3292, %v3296
  %v3301 = vand.u32 2147483647, %v3210
  %vm3302 = vcmp.eq.f32.partialorder %v3301, 8.507059e+37
  %v3303 = vand.u32 %v3210, 2147483648
  %v3304 = vor.u32 1.1754944e-38, %v3303
  %v3305 = vsel %vm3302, %v3304, %v3300
  %v3306 = vmul.f32 %v3188, %v3305
  %v3307 = vrcp.pop %v3213
  %v3308 = vmul.f32 %v3213, %v3307
  %v3309 = vsub.f32 1.0, %v3308
  %v3310 = vmul.f32 %v3307, %v3309
  %v3311 = vadd.f32 %v3307, %v3310
  %vm3312 = vweird.f32 %v3213
  %vm3313 = vweird.f32 %v3307
  %vm3314 = vmor %vm3312, %vm3313
  %v3315 = vsel %vm3314, %v3307, %v3311
  %v3316 = vand.u32 2147483647, %v3213
  %vm3317 = vcmp.eq.f32.partialorder %v3316, 8.507059e+37
  %v3318 = vand.u32 %v3213, 2147483648
  %v3319 = vor.u32 1.1754944e-38, %v3318
  %v3320 = vsel %vm3317, %v3319, %v3315
  %v3321 = vmul.f32 %v3190, %v3320
  %v3322 = vrcp.pop %v3216
  %v3323 = vmul.f32 %v3216, %v3322
  %v3324 = vsub.f32 1.0, %v3323
  %v3325 = vmul.f32 %v3322, %v3324
  %v3326 = vadd.f32 %v3322, %v3325
  %vm3327 = vweird.f32 %v3216
  %vm3328 = vweird.f32 %v3322
  %vm3329 = vmor %vm3327, %vm3328
  %v3330 = vsel %vm3329, %v3322, %v3326
  %v3331 = vand.u32 2147483647, %v3216
  %vm3332 = vcmp.eq.f32.partialorder %v3331, 8.507059e+37
  %v3333 = vand.u32 %v3216, 2147483648
  %v3334 = vor.u32 1.1754944e-38, %v3333
  %v3335 = vsel %vm3332, %v3334, %v3330
  %v3336 = vmul.f32 %v3192, %v3335
  %3337 = vrot.lane.b32.xlu0 %v536, 48
  %v3338 = vpop.permute.xlu0 %3337
  %3339 = vrot.lane.b32.xlu0 %v539, 48
  %v3340 = vpop.permute.xlu0 %3339
  %3341 = vrot.lane.b32.xlu0 %v542, 48
  %v3342 = vpop.permute.xlu0 %3341
  %3343 = vrot.lane.b32.xlu0 %v545, 48
  %v3344 = vpop.permute.xlu0 %3343
  %3345 = vrot.lane.b32.xlu0 %v548, 48
  %v3346 = vpop.permute.xlu0 %3345
  %3347 = vrot.lane.b32.xlu0 %v551, 48
  %v3348 = vpop.permute.xlu0 %3347
  %3349 = vrot.lane.b32.xlu0 %v554, 48
  %v3350 = vpop.permute.xlu0 %3349
  %3351 = vrot.lane.b32.xlu0 %v557, 48
  %v3352 = vpop.permute.xlu0 %3351
  %v3362 = vsel %vm657, %v3231, 0
  %v3365 = vsel %vm657, %v3246, 0
  %v3368 = vsel %vm657, %v3261, 0
  %v3371 = vsel %vm657, %v3276, 0
  %v3374 = vsel %vm657, %v3291, 0
  %v3377 = vsel %vm657, %v3306, 0
  %v3380 = vsel %vm657, %v3321, 0
  %v3383 = vsel %vm657, %v3336, 0
  %3385 = vmatpush.msra.mxu0 0.0
  %3386 = vmatpush.msra.mxu0 0.0
  %3387 = vmatpush.msra.mxu0 0.0
  %3388 = vmatpush.msra.mxu0 0.0
  %3389 = vmatpush.msra.mxu0 0.0
  %3390 = vmatpush.msra.mxu0 0.0
  %3391 = vmatpush.msra.mxu0 0.0
  %3392 = vmatpush.msra.mxu0 0.0
  %3393 = vmatpush.msra.mxu0 %v3352
  %3394 = vmatpush.msra.mxu0 %v3350
  %3395 = vmatpush.msra.mxu0 %v3348
  %3396 = vmatpush.msra.mxu0 %v3346
  %3397 = vmatpush.msra.mxu0 %v3344
  %3398 = vmatpush.msra.mxu0 %v3342
  %3399 = vmatpush.msra.mxu0 %v3340
  %3400 = vmatpush.msra.mxu0 %v3338
  %3401 = vmatmul.f32.gmra.mxu0 %v3362
  %v3402 = vpop.f32.mrf.mxu0
  %v3403 = vadd.f32 0.0, %v3402
  %3404 = vmatmul.f32.gmra.mxu0 %v3365
  %v3405 = vpop.f32.mrf.mxu0
  %v3406 = vadd.f32 0.0, %v3405
  %3407 = vmatmul.f32.gmra.mxu0 %v3368
  %v3408 = vpop.f32.mrf.mxu0
  %v3409 = vadd.f32 0.0, %v3408
  %3410 = vmatmul.f32.gmra.mxu0 %v3371
  %v3411 = vpop.f32.mrf.mxu0
  %v3412 = vadd.f32 0.0, %v3411
  %3413 = vmatmul.f32.gmra.mxu0 %v3374
  %v3414 = vpop.f32.mrf.mxu0
  %v3415 = vadd.f32 0.0, %v3414
  %3416 = vmatmul.f32.gmra.mxu0 %v3377
  %v3417 = vpop.f32.mrf.mxu0
  %v3418 = vadd.f32 0.0, %v3417
  %3419 = vmatmul.f32.gmra.mxu0 %v3380
  %v3420 = vpop.f32.mrf.mxu0
  %v3421 = vadd.f32 0.0, %v3420
  %3422 = vmatmul.f32.gmra.mxu0 %v3383
  %v3423 = vpop.f32.mrf.mxu0
  %v3424 = vadd.f32 0.0, %v3423
  %3425 = vdwg.mxu0
  %3434 = vrot.lane.b32.xlu0 %v3403, 16
  %v3435 = vpop.permute.xlu0 %3434
  %3436 = vrot.lane.b32.xlu0 %v3406, 16
  %v3437 = vpop.permute.xlu0 %3436
  %3438 = vrot.lane.b32.xlu0 %v3409, 16
  %v3439 = vpop.permute.xlu0 %3438
  %3440 = vrot.lane.b32.xlu0 %v3412, 16
  %v3441 = vpop.permute.xlu0 %3440
  %3442 = vrot.lane.b32.xlu0 %v3415, 16
  %v3443 = vpop.permute.xlu0 %3442
  %3444 = vrot.lane.b32.xlu0 %v3418, 16
  %v3445 = vpop.permute.xlu0 %3444
  %3446 = vrot.lane.b32.xlu0 %v3421, 16
  %v3447 = vpop.permute.xlu0 %3446
  %3448 = vrot.lane.b32.xlu0 %v3424, 16
  %v3449 = vpop.permute.xlu0 %3448
  %3458 = vst.msk [vmem:[#allocation2 + $0x40] sm:$0xff] %vm1792, %v3435
  %3459 = vst.msk [vmem:[#allocation2 + $0x48] sm:$0xff] %vm1792, %v3437
  %3460 = vst.msk [vmem:[#allocation2 + $0x50] sm:$0xff] %vm1792, %v3439
  %3461 = vst.msk [vmem:[#allocation2 + $0x58] sm:$0xff] %vm1792, %v3441
  %3462 = vst.msk [vmem:[#allocation2 + $0x60] sm:$0xff] %vm1792, %v3443
  %3463 = vst.msk [vmem:[#allocation2 + $0x68] sm:$0xff] %vm1792, %v3445
  %3464 = vst.msk [vmem:[#allocation2 + $0x70] sm:$0xff] %vm1792, %v3447
  %3465 = vst.msk [vmem:[#allocation2 + $0x78] sm:$0xff] %vm1792, %v3449
  %3466 = vrot.lane.b32.xlu0 %v536, 104
  %v3467 = vpop.permute.xlu0 %3466
  %3468 = vrot.lane.b32.xlu0 %v539, 104
  %v3469 = vpop.permute.xlu0 %3468
  %3470 = vrot.lane.b32.xlu0 %v542, 104
  %v3471 = vpop.permute.xlu0 %3470
  %3472 = vrot.lane.b32.xlu0 %v545, 104
  %v3473 = vpop.permute.xlu0 %3472
  %3474 = vrot.lane.b32.xlu0 %v548, 104
  %v3475 = vpop.permute.xlu0 %3474
  %3476 = vrot.lane.b32.xlu0 %v551, 104
  %v3477 = vpop.permute.xlu0 %3476
  %3478 = vrot.lane.b32.xlu0 %v554, 104
  %v3479 = vpop.permute.xlu0 %3478
  %3480 = vrot.lane.b32.xlu0 %v557, 104
  %v3481 = vpop.permute.xlu0 %3480
  %3482 = vrot.lane.b32.xlu0 %v536, 72
  %v3483 = vpop.permute.xlu0 %3482
  %3484 = vrot.lane.b32.xlu0 %v539, 72
  %v3485 = vpop.permute.xlu0 %3484
  %3486 = vrot.lane.b32.xlu0 %v542, 72
  %v3487 = vpop.permute.xlu0 %3486
  %3488 = vrot.lane.b32.xlu0 %v545, 72
  %v3489 = vpop.permute.xlu0 %3488
  %3490 = vrot.lane.b32.xlu0 %v548, 72
  %v3491 = vpop.permute.xlu0 %3490
  %3492 = vrot.lane.b32.xlu0 %v551, 72
  %v3493 = vpop.permute.xlu0 %3492
  %3494 = vrot.lane.b32.xlu0 %v554, 72
  %v3495 = vpop.permute.xlu0 %3494
  %3496 = vrot.lane.b32.xlu0 %v557, 72
  %v3497 = vpop.permute.xlu0 %3496
  %v3498 = vsel %vm583, %v3467, 0
  %v3500 = vsel %vm583, %v3469, 0
  %v3502 = vsel %vm583, %v3471, 0
  %v3504 = vsel %vm583, %v3473, 0
  %v3506 = vsel %vm583, %v3475, 0
  %v3508 = vsel %vm583, %v3477, 0
  %v3510 = vsel %vm583, %v3479, 0
  %v3512 = vsel %vm583, %v3481, 0
  %v3514 = vsel %vm583, %v3483, 0
  %v3516 = vsel %vm583, %v3485, 0
  %v3518 = vsel %vm583, %v3487, 0
  %v3520 = vsel %vm583, %v3489, 0
  %v3522 = vsel %vm583, %v3491, 0
  %v3524 = vsel %vm583, %v3493, 0
  %v3526 = vsel %vm583, %v3495, 0
  %v3528 = vsel %vm583, %v3497, 0
  %3530 = vmatpush.xpose.msra.mxu0 0.0
  %3531 = vmatpush.xpose.msra.mxu0 0.0
  %3532 = vmatpush.xpose.msra.mxu0 0.0
  %3533 = vmatpush.xpose.msra.mxu0 0.0
  %3534 = vmatpush.xpose.msra.mxu0 0.0
  %3535 = vmatpush.xpose.msra.mxu0 0.0
  %3536 = vmatpush.xpose.msra.mxu0 0.0
  %3537 = vmatpush.xpose.msra.mxu0 0.0
  %3538 = vmatpush.xpose.msra.mxu0 %v3528
  %3539 = vmatpush.xpose.msra.mxu0 %v3526
  %3540 = vmatpush.xpose.msra.mxu0 %v3524
  %3541 = vmatpush.xpose.msra.mxu0 %v3522
  %3542 = vmatpush.xpose.msra.mxu0 %v3520
  %3543 = vmatpush.xpose.msra.mxu0 %v3518
  %3544 = vmatpush.xpose.msra.mxu0 %v3516
  %3545 = vmatpush.xpose.msra.mxu0 %v3514
  %3546 = vmatmul.f32.gmra.mxu0 %v3498
  %v3547 = vpop.f32.mrf.mxu0
  %v3548 = vadd.f32 0.0, %v3547
  %3549 = vmatmul.f32.gmra.mxu0 %v3500
  %v3550 = vpop.f32.mrf.mxu0
  %v3551 = vadd.f32 0.0, %v3550
  %3552 = vmatmul.f32.gmra.mxu0 %v3502
  %v3553 = vpop.f32.mrf.mxu0
  %v3554 = vadd.f32 0.0, %v3553
  %3555 = vmatmul.f32.gmra.mxu0 %v3504
  %v3556 = vpop.f32.mrf.mxu0
  %v3557 = vadd.f32 0.0, %v3556
  %3558 = vmatmul.f32.gmra.mxu0 %v3506
  %v3559 = vpop.f32.mrf.mxu0
  %v3560 = vadd.f32 0.0, %v3559
  %3561 = vmatmul.f32.gmra.mxu0 %v3508
  %v3562 = vpop.f32.mrf.mxu0
  %v3563 = vadd.f32 0.0, %v3562
  %3564 = vmatmul.f32.gmra.mxu0 %v3510
  %v3565 = vpop.f32.mrf.mxu0
  %v3566 = vadd.f32 0.0, %v3565
  %3567 = vmatmul.f32.gmra.mxu0 %v3512
  %v3568 = vpop.f32.mrf.mxu0
  %v3569 = vadd.f32 0.0, %v3568
  %3570 = vdwg.mxu0
  %v3571 = vsel %vm657, %v3548, -inf
  %3572 = vmax.xlane.f32.xlu0 %v3571
  %v3573 = vpop.xlane.xlu0 %3572
  %v3574 = vsel %vm657, %v3551, -inf
  %3575 = vmax.xlane.f32.xlu0 %v3574
  %v3576 = vpop.xlane.xlu0 %3575
  %v3577 = vsel %vm657, %v3554, -inf
  %3578 = vmax.xlane.f32.xlu0 %v3577
  %v3579 = vpop.xlane.xlu0 %3578
  %v3580 = vsel %vm657, %v3557, -inf
  %3581 = vmax.xlane.f32.xlu0 %v3580
  %v3582 = vpop.xlane.xlu0 %3581
  %v3583 = vsel %vm657, %v3560, -inf
  %3584 = vmax.xlane.f32.xlu0 %v3583
  %v3585 = vpop.xlane.xlu0 %3584
  %v3586 = vsel %vm657, %v3563, -inf
  %3587 = vmax.xlane.f32.xlu0 %v3586
  %v3588 = vpop.xlane.xlu0 %3587
  %v3589 = vsel %vm657, %v3566, -inf
  %3590 = vmax.xlane.f32.xlu0 %v3589
  %v3591 = vpop.xlane.xlu0 %3590
  %v3592 = vsel %vm657, %v3569, -inf
  %3593 = vmax.xlane.f32.xlu0 %v3592
  %v3594 = vpop.xlane.xlu0 %3593
  %v3595 = vsub.f32 %v3548, %v3573
  %v3596 = vsub.f32 %v3551, %v3576
  %v3597 = vsub.f32 %v3554, %v3579
  %v3598 = vsub.f32 %v3557, %v3582
  %v3599 = vsub.f32 %v3560, %v3585
  %v3600 = vsub.f32 %v3563, %v3588
  %v3601 = vsub.f32 %v3566, %v3591
  %v3602 = vsub.f32 %v3569, %v3594
  %v3603 = vmul.f32 %v3595, 1.442695
  %v3604 = vpow.pop %v3603
  %v3605 = vmul.f32 %v3596, 1.442695
  %v3606 = vpow.pop %v3605
  %v3607 = vmul.f32 %v3597, 1.442695
  %v3608 = vpow.pop %v3607
  %v3609 = vmul.f32 %v3598, 1.442695
  %v3610 = vpow.pop %v3609
  %v3611 = vmul.f32 %v3599, 1.442695
  %v3612 = vpow.pop %v3611
  %v3613 = vmul.f32 %v3600, 1.442695
  %v3614 = vpow.pop %v3613
  %v3615 = vmul.f32 %v3601, 1.442695
  %v3616 = vpow.pop %v3615
  %v3617 = vmul.f32 %v3602, 1.442695
  %v3618 = vpow.pop %v3617
  %v3619 = vsel %vm657, %v3604, 0.0
  %3620 = vadd.xlane.f32.xlu0 %v3619
  %v3621 = vpop.xlane.xlu0 %3620
  %v3622 = vsel %vm657, %v3606, 0.0
  %3623 = vadd.xlane.f32.xlu0 %v3622
  %v3624 = vpop.xlane.xlu0 %3623
  %v3625 = vsel %vm657, %v3608, 0.0
  %3626 = vadd.xlane.f32.xlu0 %v3625
  %v3627 = vpop.xlane.xlu0 %3626
  %v3628 = vsel %vm657, %v3610, 0.0
  %3629 = vadd.xlane.f32.xlu0 %v3628
  %v3630 = vpop.xlane.xlu0 %3629
  %v3631 = vsel %vm657, %v3612, 0.0
  %3632 = vadd.xlane.f32.xlu0 %v3631
  %v3633 = vpop.xlane.xlu0 %3632
  %v3634 = vsel %vm657, %v3614, 0.0
  %3635 = vadd.xlane.f32.xlu0 %v3634
  %v3636 = vpop.xlane.xlu0 %3635
  %v3637 = vsel %vm657, %v3616, 0.0
  %3638 = vadd.xlane.f32.xlu0 %v3637
  %v3639 = vpop.xlane.xlu0 %3638
  %v3640 = vsel %vm657, %v3618, 0.0
  %3641 = vadd.xlane.f32.xlu0 %v3640
  %v3642 = vpop.xlane.xlu0 %3641
  %v3643 = vrcp.pop %v3621
  %v3644 = vmul.f32 %v3621, %v3643
  %v3645 = vsub.f32 1.0, %v3644
  %v3646 = vmul.f32 %v3643, %v3645
  %v3647 = vadd.f32 %v3643, %v3646
  %vm3648 = vweird.f32 %v3621
  %vm3649 = vweird.f32 %v3643
  %vm3650 = vmor %vm3648, %vm3649
  %v3651 = vsel %vm3650, %v3643, %v3647
  %v3652 = vand.u32 2147483647, %v3621
  %vm3653 = vcmp.eq.f32.partialorder %v3652, 8.507059e+37
  %v3654 = vand.u32 %v3621, 2147483648
  %v3655 = vor.u32 1.1754944e-38, %v3654
  %v3656 = vsel %vm3653, %v3655, %v3651
  %v3657 = vmul.f32 %v3604, %v3656
  %v3658 = vrcp.pop %v3624
  %v3659 = vmul.f32 %v3624, %v3658
  %v3660 = vsub.f32 1.0, %v3659
  %v3661 = vmul.f32 %v3658, %v3660
  %v3662 = vadd.f32 %v3658, %v3661
  %vm3663 = vweird.f32 %v3624
  %vm3664 = vweird.f32 %v3658
  %vm3665 = vmor %vm3663, %vm3664
  %v3666 = vsel %vm3665, %v3658, %v3662
  %v3667 = vand.u32 2147483647, %v3624
  %vm3668 = vcmp.eq.f32.partialorder %v3667, 8.507059e+37
  %v3669 = vand.u32 %v3624, 2147483648
  %v3670 = vor.u32 1.1754944e-38, %v3669
  %v3671 = vsel %vm3668, %v3670, %v3666
  %v3672 = vmul.f32 %v3606, %v3671
  %v3673 = vrcp.pop %v3627
  %v3674 = vmul.f32 %v3627, %v3673
  %v3675 = vsub.f32 1.0, %v3674
  %v3676 = vmul.f32 %v3673, %v3675
  %v3677 = vadd.f32 %v3673, %v3676
  %vm3678 = vweird.f32 %v3627
  %vm3679 = vweird.f32 %v3673
  %vm3680 = vmor %vm3678, %vm3679
  %v3681 = vsel %vm3680, %v3673, %v3677
  %v3682 = vand.u32 2147483647, %v3627
  %vm3683 = vcmp.eq.f32.partialorder %v3682, 8.507059e+37
  %v3684 = vand.u32 %v3627, 2147483648
  %v3685 = vor.u32 1.1754944e-38, %v3684
  %v3686 = vsel %vm3683, %v3685, %v3681
  %v3687 = vmul.f32 %v3608, %v3686
  %v3688 = vrcp.pop %v3630
  %v3689 = vmul.f32 %v3630, %v3688
  %v3690 = vsub.f32 1.0, %v3689
  %v3691 = vmul.f32 %v3688, %v3690
  %v3692 = vadd.f32 %v3688, %v3691
  %vm3693 = vweird.f32 %v3630
  %vm3694 = vweird.f32 %v3688
  %vm3695 = vmor %vm3693, %vm3694
  %v3696 = vsel %vm3695, %v3688, %v3692
  %v3697 = vand.u32 2147483647, %v3630
  %vm3698 = vcmp.eq.f32.partialorder %v3697, 8.507059e+37
  %v3699 = vand.u32 %v3630, 2147483648
  %v3700 = vor.u32 1.1754944e-38, %v3699
  %v3701 = vsel %vm3698, %v3700, %v3696
  %v3702 = vmul.f32 %v3610, %v3701
  %v3703 = vrcp.pop %v3633
  %v3704 = vmul.f32 %v3633, %v3703
  %v3705 = vsub.f32 1.0, %v3704
  %v3706 = vmul.f32 %v3703, %v3705
  %v3707 = vadd.f32 %v3703, %v3706
  %vm3708 = vweird.f32 %v3633
  %vm3709 = vweird.f32 %v3703
  %vm3710 = vmor %vm3708, %vm3709
  %v3711 = vsel %vm3710, %v3703, %v3707
  %v3712 = vand.u32 2147483647, %v3633
  %vm3713 = vcmp.eq.f32.partialorder %v3712, 8.507059e+37
  %v3714 = vand.u32 %v3633, 2147483648
  %v3715 = vor.u32 1.1754944e-38, %v3714
  %v3716 = vsel %vm3713, %v3715, %v3711
  %v3717 = vmul.f32 %v3612, %v3716
  %v3718 = vrcp.pop %v3636
  %v3719 = vmul.f32 %v3636, %v3718
  %v3720 = vsub.f32 1.0, %v3719
  %v3721 = vmul.f32 %v3718, %v3720
  %v3722 = vadd.f32 %v3718, %v3721
  %vm3723 = vweird.f32 %v3636
  %vm3724 = vweird.f32 %v3718
  %vm3725 = vmor %vm3723, %vm3724
  %v3726 = vsel %vm3725, %v3718, %v3722
  %v3727 = vand.u32 2147483647, %v3636
  %vm3728 = vcmp.eq.f32.partialorder %v3727, 8.507059e+37
  %v3729 = vand.u32 %v3636, 2147483648
  %v3730 = vor.u32 1.1754944e-38, %v3729
  %v3731 = vsel %vm3728, %v3730, %v3726
  %v3732 = vmul.f32 %v3614, %v3731
  %v3733 = vrcp.pop %v3639
  %v3734 = vmul.f32 %v3639, %v3733
  %v3735 = vsub.f32 1.0, %v3734
  %v3736 = vmul.f32 %v3733, %v3735
  %v3737 = vadd.f32 %v3733, %v3736
  %vm3738 = vweird.f32 %v3639
  %vm3739 = vweird.f32 %v3733
  %vm3740 = vmor %vm3738, %vm3739
  %v3741 = vsel %vm3740, %v3733, %v3737
  %v3742 = vand.u32 2147483647, %v3639
  %vm3743 = vcmp.eq.f32.partialorder %v3742, 8.507059e+37
  %v3744 = vand.u32 %v3639, 2147483648
  %v3745 = vor.u32 1.1754944e-38, %v3744
  %v3746 = vsel %vm3743, %v3745, %v3741
  %v3747 = vmul.f32 %v3616, %v3746
  %v3748 = vrcp.pop %v3642
  %v3749 = vmul.f32 %v3642, %v3748
  %v3750 = vsub.f32 1.0, %v3749
  %v3751 = vmul.f32 %v3748, %v3750
  %v3752 = vadd.f32 %v3748, %v3751
  %vm3753 = vweird.f32 %v3642
  %vm3754 = vweird.f32 %v3748
  %vm3755 = vmor %vm3753, %vm3754
  %v3756 = vsel %vm3755, %v3748, %v3752
  %v3757 = vand.u32 2147483647, %v3642
  %vm3758 = vcmp.eq.f32.partialorder %v3757, 8.507059e+37
  %v3759 = vand.u32 %v3642, 2147483648
  %v3760 = vor.u32 1.1754944e-38, %v3759
  %v3761 = vsel %vm3758, %v3760, %v3756
  %v3762 = vmul.f32 %v3618, %v3761
  %3763 = vrot.lane.b32.xlu0 %v536, 40
  %v3764 = vpop.permute.xlu0 %3763
  %3765 = vrot.lane.b32.xlu0 %v539, 40
  %v3766 = vpop.permute.xlu0 %3765
  %3767 = vrot.lane.b32.xlu0 %v542, 40
  %v3768 = vpop.permute.xlu0 %3767
  %3769 = vrot.lane.b32.xlu0 %v545, 40
  %v3770 = vpop.permute.xlu0 %3769
  %3771 = vrot.lane.b32.xlu0 %v548, 40
  %v3772 = vpop.permute.xlu0 %3771
  %3773 = vrot.lane.b32.xlu0 %v551, 40
  %v3774 = vpop.permute.xlu0 %3773
  %3775 = vrot.lane.b32.xlu0 %v554, 40
  %v3776 = vpop.permute.xlu0 %3775
  %3777 = vrot.lane.b32.xlu0 %v557, 40
  %v3778 = vpop.permute.xlu0 %3777
  %v3788 = vsel %vm657, %v3657, 0
  %v3791 = vsel %vm657, %v3672, 0
  %v3794 = vsel %vm657, %v3687, 0
  %v3797 = vsel %vm657, %v3702, 0
  %v3800 = vsel %vm657, %v3717, 0
  %v3803 = vsel %vm657, %v3732, 0
  %v3806 = vsel %vm657, %v3747, 0
  %v3809 = vsel %vm657, %v3762, 0
  %3811 = vmatpush.msra.mxu0 0.0
  %3812 = vmatpush.msra.mxu0 0.0
  %3813 = vmatpush.msra.mxu0 0.0
  %3814 = vmatpush.msra.mxu0 0.0
  %3815 = vmatpush.msra.mxu0 0.0
  %3816 = vmatpush.msra.mxu0 0.0
  %3817 = vmatpush.msra.mxu0 0.0
  %3818 = vmatpush.msra.mxu0 0.0
  %3819 = vmatpush.msra.mxu0 %v3778
  %3820 = vmatpush.msra.mxu0 %v3776
  %3821 = vmatpush.msra.mxu0 %v3774
  %3822 = vmatpush.msra.mxu0 %v3772
  %3823 = vmatpush.msra.mxu0 %v3770
  %3824 = vmatpush.msra.mxu0 %v3768
  %3825 = vmatpush.msra.mxu0 %v3766
  %3826 = vmatpush.msra.mxu0 %v3764
  %3827 = vmatmul.f32.gmra.mxu0 %v3788
  %v3828 = vpop.f32.mrf.mxu0
  %v3829 = vadd.f32 0.0, %v3828
  %3830 = vmatmul.f32.gmra.mxu0 %v3791
  %v3831 = vpop.f32.mrf.mxu0
  %v3832 = vadd.f32 0.0, %v3831
  %3833 = vmatmul.f32.gmra.mxu0 %v3794
  %v3834 = vpop.f32.mrf.mxu0
  %v3835 = vadd.f32 0.0, %v3834
  %3836 = vmatmul.f32.gmra.mxu0 %v3797
  %v3837 = vpop.f32.mrf.mxu0
  %v3838 = vadd.f32 0.0, %v3837
  %3839 = vmatmul.f32.gmra.mxu0 %v3800
  %v3840 = vpop.f32.mrf.mxu0
  %v3841 = vadd.f32 0.0, %v3840
  %3842 = vmatmul.f32.gmra.mxu0 %v3803
  %v3843 = vpop.f32.mrf.mxu0
  %v3844 = vadd.f32 0.0, %v3843
  %3845 = vmatmul.f32.gmra.mxu0 %v3806
  %v3846 = vpop.f32.mrf.mxu0
  %v3847 = vadd.f32 0.0, %v3846
  %3848 = vmatmul.f32.gmra.mxu0 %v3809
  %v3849 = vpop.f32.mrf.mxu0
  %v3850 = vadd.f32 0.0, %v3849
  %3851 = vdwg.mxu0
  %3860 = vrot.lane.b32.xlu0 %v3829, 24
  %v3861 = vpop.permute.xlu0 %3860
  %3862 = vrot.lane.b32.xlu0 %v3832, 24
  %v3863 = vpop.permute.xlu0 %3862
  %3864 = vrot.lane.b32.xlu0 %v3835, 24
  %v3865 = vpop.permute.xlu0 %3864
  %3866 = vrot.lane.b32.xlu0 %v3838, 24
  %v3867 = vpop.permute.xlu0 %3866
  %3868 = vrot.lane.b32.xlu0 %v3841, 24
  %v3869 = vpop.permute.xlu0 %3868
  %3870 = vrot.lane.b32.xlu0 %v3844, 24
  %v3871 = vpop.permute.xlu0 %3870
  %3872 = vrot.lane.b32.xlu0 %v3847, 24
  %v3873 = vpop.permute.xlu0 %3872
  %3874 = vrot.lane.b32.xlu0 %v3850, 24
  %v3875 = vpop.permute.xlu0 %3874
  %3884 = vst.msk [vmem:[#allocation2 + $0x40] sm:$0xff] %vm2219, %v3861
  %3885 = vst.msk [vmem:[#allocation2 + $0x48] sm:$0xff] %vm2219, %v3863
  %3886 = vst.msk [vmem:[#allocation2 + $0x50] sm:$0xff] %vm2219, %v3865
  %3887 = vst.msk [vmem:[#allocation2 + $0x58] sm:$0xff] %vm2219, %v3867
  %3888 = vst.msk [vmem:[#allocation2 + $0x60] sm:$0xff] %vm2219, %v3869
  %3889 = vst.msk [vmem:[#allocation2 + $0x68] sm:$0xff] %vm2219, %v3871
  %3890 = vst.msk [vmem:[#allocation2 + $0x70] sm:$0xff] %vm2219, %v3873
  %3891 = vst.msk [vmem:[#allocation2 + $0x78] sm:$0xff] %vm2219, %v3875
  %v3892 = vld [vmem:[#allocation2] sm:$0xff]
  %v3893 = vld [vmem:[#allocation2 + $0x8] sm:$0xff]
  %v3894 = vld [vmem:[#allocation2 + $0x10] sm:$0xff]
  %v3895 = vld [vmem:[#allocation2 + $0x18] sm:$0xff]
  %v3896 = vld [vmem:[#allocation2 + $0x20] sm:$0xff]
  %v3897 = vld [vmem:[#allocation2 + $0x28] sm:$0xff]
  %v3898 = vld [vmem:[#allocation2 + $0x30] sm:$0xff]
  %v3899 = vld [vmem:[#allocation2 + $0x38] sm:$0xff]
  %v3900 = vld [vmem:[#allocation2 + $0x40] sm:$0xff]
  %v3901 = vld [vmem:[#allocation2 + $0x48] sm:$0xff]
  %v3902 = vld [vmem:[#allocation2 + $0x50] sm:$0xff]
  %v3903 = vld [vmem:[#allocation2 + $0x58] sm:$0xff]
  %v3904 = vld [vmem:[#allocation2 + $0x60] sm:$0xff]
  %v3905 = vld [vmem:[#allocation2 + $0x68] sm:$0xff]
  %v3906 = vld [vmem:[#allocation2 + $0x70] sm:$0xff]
  %v3907 = vld [vmem:[#allocation2 + $0x78] sm:$0xff]
  %v3908 = vld [vmem:[%s3] sm:$0xff]
  %v3909 = vld [vmem:[%s3 + $0x8] sm:$0xff]
  %v3910 = vld [vmem:[%s3 + $0x10] sm:$0xff]
  %v3911 = vld [vmem:[%s3 + $0x18] sm:$0xff]
  %v3912 = vperm.slane %v43, 0
  %v3914 = vsel %vm47, %v3892, 0
  %v3917 = vsel %vm47, %v3893, 0
  %v3920 = vsel %vm47, %v3894, 0
  %v3923 = vsel %vm47, %v3895, 0
  %v3926 = vsel %vm47, %v3896, 0
  %v3929 = vsel %vm47, %v3897, 0
  %v3932 = vsel %vm47, %v3898, 0
  %v3935 = vsel %vm47, %v3899, 0
  %v3938 = vsel %vm47, %v3900, 0
  %v3941 = vsel %vm47, %v3901, 0
  %v3944 = vsel %vm47, %v3902, 0
  %v3947 = vsel %vm47, %v3903, 0
  %v3950 = vsel %vm47, %v3904, 0
  %v3953 = vsel %vm47, %v3905, 0
  %v3956 = vsel %vm47, %v3906, 0
  %v3959 = vsel %vm47, %v3907, 0
  %3961 = vmatpush.msra.mxu0 0.0
  %3962 = vmatpush.msra.mxu0 0.0
  %3963 = vmatpush.msra.mxu0 0.0
  %3964 = vmatpush.msra.mxu0 0.0
  %3965 = vmatpush.msra.mxu0 0.0
  %3966 = vmatpush.msra.mxu0 0.0
  %3967 = vmatpush.msra.mxu0 0.0
  %3968 = vmatpush.msra.mxu0 0.0
  %3969 = vmatpush.msra.mxu0 0.0
  %3970 = vmatpush.msra.mxu0 0.0
  %3971 = vmatpush.msra.mxu0 0.0
  %3972 = vmatpush.msra.mxu0 0.0
  %3973 = vmatpush.msra.mxu0 %v3911
  %3974 = vmatpush.msra.mxu0 %v3910
  %3975 = vmatpush.msra.mxu0 %v3909
  %3976 = vmatpush.msra.mxu0 %v3908
  %3977 = vmatmul.f32.gmra.mxu0 %v3914
  %v3978 = vpop.f32.mrf.mxu0
  %v3979 = vadd.f32 %v3912, %v3978
  %3980 = vmatmul.f32.gmra.mxu0 %v3917
  %v3981 = vpop.f32.mrf.mxu0
  %v3982 = vadd.f32 %v3912, %v3981
  %3983 = vmatmul.f32.gmra.mxu0 %v3920
  %v3984 = vpop.f32.mrf.mxu0
  %v3985 = vadd.f32 %v3912, %v3984
  %3986 = vmatmul.f32.gmra.mxu0 %v3923
  %v3987 = vpop.f32.mrf.mxu0
  %v3988 = vadd.f32 %v3912, %v3987
  %3989 = vmatmul.f32.gmra.mxu0 %v3926
  %v3990 = vpop.f32.mrf.mxu0
  %v3991 = vadd.f32 %v3912, %v3990
  %3992 = vmatmul.f32.gmra.mxu0 %v3929
  %v3993 = vpop.f32.mrf.mxu0
  %v3994 = vadd.f32 %v3912, %v3993
  %3995 = vmatmul.f32.gmra.mxu0 %v3932
  %v3996 = vpop.f32.mrf.mxu0
  %v3997 = vadd.f32 %v3912, %v3996
  %3998 = vmatmul.f32.gmra.mxu0 %v3935
  %v3999 = vpop.f32.mrf.mxu0
  %v4000 = vadd.f32 %v3912, %v3999
  %4001 = vmatmul.f32.gmra.mxu0 %v3938
  %v4002 = vpop.f32.mrf.mxu0
  %v4003 = vadd.f32 %v3912, %v4002
  %4004 = vmatmul.f32.gmra.mxu0 %v3941
  %v4005 = vpop.f32.mrf.mxu0
  %v4006 = vadd.f32 %v3912, %v4005
  %4007 = vmatmul.f32.gmra.mxu0 %v3944
  %v4008 = vpop.f32.mrf.mxu0
  %v4009 = vadd.f32 %v3912, %v4008
  %4010 = vmatmul.f32.gmra.mxu0 %v3947
  %v4011 = vpop.f32.mrf.mxu0
  %v4012 = vadd.f32 %v3912, %v4011
  %4013 = vmatmul.f32.gmra.mxu0 %v3950
  %v4014 = vpop.f32.mrf.mxu0
  %v4015 = vadd.f32 %v3912, %v4014
  %4016 = vmatmul.f32.gmra.mxu0 %v3953
  %v4017 = vpop.f32.mrf.mxu0
  %v4018 = vadd.f32 %v3912, %v4017
  %4019 = vmatmul.f32.gmra.mxu0 %v3956
  %v4020 = vpop.f32.mrf.mxu0
  %v4021 = vadd.f32 %v3912, %v4020
  %4022 = vmatmul.f32.gmra.mxu0 %v3959
  %v4023 = vpop.f32.mrf.mxu0
  %v4024 = vadd.f32 %v3912, %v4023
  %4025 = vdwg.mxu0
  %v4026 = vadd.f32 %v23, %v3979
  %v4027 = vadd.f32 %v24, %v3982
  %v4028 = vadd.f32 %v25, %v3985
  %v4029 = vadd.f32 %v26, %v3988
  %v4030 = vadd.f32 %v27, %v3991
  %v4031 = vadd.f32 %v28, %v3994
  %v4032 = vadd.f32 %v29, %v3997
  %v4033 = vadd.f32 %v30, %v4000
  %v4034 = vadd.f32 %v31, %v4003
  %v4035 = vadd.f32 %v32, %v4006
  %v4036 = vadd.f32 %v33, %v4009
  %v4037 = vadd.f32 %v34, %v4012
  %v4038 = vadd.f32 %v35, %v4015
  %v4039 = vadd.f32 %v36, %v4018
  %v4040 = vadd.f32 %v37, %v4021
  %v4041 = vadd.f32 %v38, %v4024
  %v4042 = vsel %vm47, %v4026, 0.0
  %4043 = vadd.xlane.f32.xlu0 %v4042
  %v4044 = vpop.xlane.xlu0 %4043
  %v4045 = vsel %vm47, %v4027, 0.0
  %4046 = vadd.xlane.f32.xlu0 %v4045
  %v4047 = vpop.xlane.xlu0 %4046
  %v4048 = vsel %vm47, %v4028, 0.0
  %4049 = vadd.xlane.f32.xlu0 %v4048
  %v4050 = vpop.xlane.xlu0 %4049
  %v4051 = vsel %vm47, %v4029, 0.0
  %4052 = vadd.xlane.f32.xlu0 %v4051
  %v4053 = vpop.xlane.xlu0 %4052
  %v4054 = vsel %vm47, %v4030, 0.0
  %4055 = vadd.xlane.f32.xlu0 %v4054
  %v4056 = vpop.xlane.xlu0 %4055
  %v4057 = vsel %vm47, %v4031, 0.0
  %4058 = vadd.xlane.f32.xlu0 %v4057
  %v4059 = vpop.xlane.xlu0 %4058
  %v4060 = vsel %vm47, %v4032, 0.0
  %4061 = vadd.xlane.f32.xlu0 %v4060
  %v4062 = vpop.xlane.xlu0 %4061
  %v4063 = vsel %vm47, %v4033, 0.0
  %4064 = vadd.xlane.f32.xlu0 %v4063
  %v4065 = vpop.xlane.xlu0 %4064
  %v4066 = vsel %vm47, %v4034, 0.0
  %4067 = vadd.xlane.f32.xlu0 %v4066
  %v4068 = vpop.xlane.xlu0 %4067
  %v4069 = vsel %vm47, %v4035, 0.0
  %4070 = vadd.xlane.f32.xlu0 %v4069
  %v4071 = vpop.xlane.xlu0 %4070
  %v4072 = vsel %vm47, %v4036, 0.0
  %4073 = vadd.xlane.f32.xlu0 %v4072
  %v4074 = vpop.xlane.xlu0 %4073
  %v4075 = vsel %vm47, %v4037, 0.0
  %4076 = vadd.xlane.f32.xlu0 %v4075
  %v4077 = vpop.xlane.xlu0 %4076
  %v4078 = vsel %vm47, %v4038, 0.0
  %4079 = vadd.xlane.f32.xlu0 %v4078
  %v4080 = vpop.xlane.xlu0 %4079
  %v4081 = vsel %vm47, %v4039, 0.0
  %4082 = vadd.xlane.f32.xlu0 %v4081
  %v4083 = vpop.xlane.xlu0 %4082
  %v4084 = vsel %vm47, %v4040, 0.0
  %4085 = vadd.xlane.f32.xlu0 %v4084
  %v4086 = vpop.xlane.xlu0 %4085
  %v4087 = vsel %vm47, %v4041, 0.0
  %4088 = vadd.xlane.f32.xlu0 %v4087
  %v4089 = vpop.xlane.xlu0 %4088
  %v4090 = vmul.f32 %v4044, %v102
  %v4091 = vmul.f32 %v4047, %v102
  %v4092 = vmul.f32 %v4050, %v102
  %v4093 = vmul.f32 %v4053, %v102
  %v4094 = vmul.f32 %v4056, %v102
  %v4095 = vmul.f32 %v4059, %v102
  %v4096 = vmul.f32 %v4062, %v102
  %v4097 = vmul.f32 %v4065, %v102
  %v4098 = vmul.f32 %v4068, %v102
  %v4099 = vmul.f32 %v4071, %v102
  %v4100 = vmul.f32 %v4074, %v102
  %v4101 = vmul.f32 %v4077, %v102
  %v4102 = vmul.f32 %v4080, %v102
  %v4103 = vmul.f32 %v4083, %v102
  %v4104 = vmul.f32 %v4086, %v102
  %v4105 = vmul.f32 %v4089, %v102
  %v4106 = vsub.f32 %v4026, %v4090
  %v4107 = vsub.f32 %v4027, %v4091
  %v4108 = vsub.f32 %v4028, %v4092
  %v4109 = vsub.f32 %v4029, %v4093
  %v4110 = vsub.f32 %v4030, %v4094
  %v4111 = vsub.f32 %v4031, %v4095
  %v4112 = vsub.f32 %v4032, %v4096
  %v4113 = vsub.f32 %v4033, %v4097
  %v4114 = vsub.f32 %v4034, %v4098
  %v4115 = vsub.f32 %v4035, %v4099
  %v4116 = vsub.f32 %v4036, %v4100
  %v4117 = vsub.f32 %v4037, %v4101
  %v4118 = vsub.f32 %v4038, %v4102
  %v4119 = vsub.f32 %v4039, %v4103
  %v4120 = vsub.f32 %v4040, %v4104
  %v4121 = vsub.f32 %v4041, %v4105
  %v4122 = vmul.f32 %v4106, %v4106
  %v4123 = vmul.f32 %v4107, %v4107
  %v4124 = vmul.f32 %v4108, %v4108
  %v4125 = vmul.f32 %v4109, %v4109
  %v4126 = vmul.f32 %v4110, %v4110
  %v4127 = vmul.f32 %v4111, %v4111
  %v4128 = vmul.f32 %v4112, %v4112
  %v4129 = vmul.f32 %v4113, %v4113
  %v4130 = vmul.f32 %v4114, %v4114
  %v4131 = vmul.f32 %v4115, %v4115
  %v4132 = vmul.f32 %v4116, %v4116
  %v4133 = vmul.f32 %v4117, %v4117
  %v4134 = vmul.f32 %v4118, %v4118
  %v4135 = vmul.f32 %v4119, %v4119
  %v4136 = vmul.f32 %v4120, %v4120
  %v4137 = vmul.f32 %v4121, %v4121
  %v4138 = vsel %vm47, %v4122, 0.0
  %4139 = vadd.xlane.f32.xlu0 %v4138
  %v4140 = vpop.xlane.xlu0 %4139
  %v4141 = vsel %vm47, %v4123, 0.0
  %4142 = vadd.xlane.f32.xlu0 %v4141
  %v4143 = vpop.xlane.xlu0 %4142
  %v4144 = vsel %vm47, %v4124, 0.0
  %4145 = vadd.xlane.f32.xlu0 %v4144
  %v4146 = vpop.xlane.xlu0 %4145
  %v4147 = vsel %vm47, %v4125, 0.0
  %4148 = vadd.xlane.f32.xlu0 %v4147
  %v4149 = vpop.xlane.xlu0 %4148
  %v4150 = vsel %vm47, %v4126, 0.0
  %4151 = vadd.xlane.f32.xlu0 %v4150
  %v4152 = vpop.xlane.xlu0 %4151
  %v4153 = vsel %vm47, %v4127, 0.0
  %4154 = vadd.xlane.f32.xlu0 %v4153
  %v4155 = vpop.xlane.xlu0 %4154
  %v4156 = vsel %vm47, %v4128, 0.0
  %4157 = vadd.xlane.f32.xlu0 %v4156
  %v4158 = vpop.xlane.xlu0 %4157
  %v4159 = vsel %vm47, %v4129, 0.0
  %4160 = vadd.xlane.f32.xlu0 %v4159
  %v4161 = vpop.xlane.xlu0 %4160
  %v4162 = vsel %vm47, %v4130, 0.0
  %4163 = vadd.xlane.f32.xlu0 %v4162
  %v4164 = vpop.xlane.xlu0 %4163
  %v4165 = vsel %vm47, %v4131, 0.0
  %4166 = vadd.xlane.f32.xlu0 %v4165
  %v4167 = vpop.xlane.xlu0 %4166
  %v4168 = vsel %vm47, %v4132, 0.0
  %4169 = vadd.xlane.f32.xlu0 %v4168
  %v4170 = vpop.xlane.xlu0 %4169
  %v4171 = vsel %vm47, %v4133, 0.0
  %4172 = vadd.xlane.f32.xlu0 %v4171
  %v4173 = vpop.xlane.xlu0 %4172
  %v4174 = vsel %vm47, %v4134, 0.0
  %4175 = vadd.xlane.f32.xlu0 %v4174
  %v4176 = vpop.xlane.xlu0 %4175
  %v4177 = vsel %vm47, %v4135, 0.0
  %4178 = vadd.xlane.f32.xlu0 %v4177
  %v4179 = vpop.xlane.xlu0 %4178
  %v4180 = vsel %vm47, %v4136, 0.0
  %4181 = vadd.xlane.f32.xlu0 %v4180
  %v4182 = vpop.xlane.xlu0 %4181
  %v4183 = vsel %vm47, %v4137, 0.0
  %4184 = vadd.xlane.f32.xlu0 %v4183
  %v4185 = vpop.xlane.xlu0 %4184
  %v4186 = vmul.f32 %v4140, %v102
  %v4187 = vmul.f32 %v4143, %v102
  %v4188 = vmul.f32 %v4146, %v102
  %v4189 = vmul.f32 %v4149, %v102
  %v4190 = vmul.f32 %v4152, %v102
  %v4191 = vmul.f32 %v4155, %v102
  %v4192 = vmul.f32 %v4158, %v102
  %v4193 = vmul.f32 %v4161, %v102
  %v4194 = vmul.f32 %v4164, %v102
  %v4195 = vmul.f32 %v4167, %v102
  %v4196 = vmul.f32 %v4170, %v102
  %v4197 = vmul.f32 %v4173, %v102
  %v4198 = vmul.f32 %v4176, %v102
  %v4199 = vmul.f32 %v4179, %v102
  %v4200 = vmul.f32 %v4182, %v102
  %v4201 = vmul.f32 %v4185, %v102
  %v4202 = vadd.f32 %v4186, 1e-05
  %v4203 = vadd.f32 %v4187, 1e-05
  %v4204 = vadd.f32 %v4188, 1e-05
  %v4205 = vadd.f32 %v4189, 1e-05
  %v4206 = vadd.f32 %v4190, 1e-05
  %v4207 = vadd.f32 %v4191, 1e-05
  %v4208 = vadd.f32 %v4192, 1e-05
  %v4209 = vadd.f32 %v4193, 1e-05
  %v4210 = vadd.f32 %v4194, 1e-05
  %v4211 = vadd.f32 %v4195, 1e-05
  %v4212 = vadd.f32 %v4196, 1e-05
  %v4213 = vadd.f32 %v4197, 1e-05
  %v4214 = vadd.f32 %v4198, 1e-05
  %v4215 = vadd.f32 %v4199, 1e-05
  %v4216 = vadd.f32 %v4200, 1e-05
  %v4217 = vadd.f32 %v4201, 1e-05
  %v4218 = vrsqrt.pop %v4202
  %v4219 = vmul.f32 %v4218, %v4202
  %v4220 = vmul.f32 %v4219, %v4218
  %v4221 = vmul.f32 0.5, %v4220
  %v4222 = vsub.f32 1.5, %v4221
  %v4223 = vmul.f32 %v4218, %v4222
  %vm4224 = vweird.f32 %v4202
  %vm4225 = vweird.f32 %v4218
  %vm4226 = vmor %vm4224, %vm4225
  %v4227 = vsel %vm4226, %v4218, %v4223
  %v4228 = vrsqrt.pop %v4203
  %v4229 = vmul.f32 %v4228, %v4203
  %v4230 = vmul.f32 %v4229, %v4228
  %v4231 = vmul.f32 0.5, %v4230
  %v4232 = vsub.f32 1.5, %v4231
  %v4233 = vmul.f32 %v4228, %v4232
  %vm4234 = vweird.f32 %v4203
  %vm4235 = vweird.f32 %v4228
  %vm4236 = vmor %vm4234, %vm4235
  %v4237 = vsel %vm4236, %v4228, %v4233
  %v4238 = vrsqrt.pop %v4204
  %v4239 = vmul.f32 %v4238, %v4204
  %v4240 = vmul.f32 %v4239, %v4238
  %v4241 = vmul.f32 0.5, %v4240
  %v4242 = vsub.f32 1.5, %v4241
  %v4243 = vmul.f32 %v4238, %v4242
  %vm4244 = vweird.f32 %v4204
  %vm4245 = vweird.f32 %v4238
  %vm4246 = vmor %vm4244, %vm4245
  %v4247 = vsel %vm4246, %v4238, %v4243
  %v4248 = vrsqrt.pop %v4205
  %v4249 = vmul.f32 %v4248, %v4205
  %v4250 = vmul.f32 %v4249, %v4248
  %v4251 = vmul.f32 0.5, %v4250
  %v4252 = vsub.f32 1.5, %v4251
  %v4253 = vmul.f32 %v4248, %v4252
  %vm4254 = vweird.f32 %v4205
  %vm4255 = vweird.f32 %v4248
  %vm4256 = vmor %vm4254, %vm4255
  %v4257 = vsel %vm4256, %v4248, %v4253
  %v4258 = vrsqrt.pop %v4206
  %v4259 = vmul.f32 %v4258, %v4206
  %v4260 = vmul.f32 %v4259, %v4258
  %v4261 = vmul.f32 0.5, %v4260
  %v4262 = vsub.f32 1.5, %v4261
  %v4263 = vmul.f32 %v4258, %v4262
  %vm4264 = vweird.f32 %v4206
  %vm4265 = vweird.f32 %v4258
  %vm4266 = vmor %vm4264, %vm4265
  %v4267 = vsel %vm4266, %v4258, %v4263
  %v4268 = vrsqrt.pop %v4207
  %v4269 = vmul.f32 %v4268, %v4207
  %v4270 = vmul.f32 %v4269, %v4268
  %v4271 = vmul.f32 0.5, %v4270
  %v4272 = vsub.f32 1.5, %v4271
  %v4273 = vmul.f32 %v4268, %v4272
  %vm4274 = vweird.f32 %v4207
  %vm4275 = vweird.f32 %v4268
  %vm4276 = vmor %vm4274, %vm4275
  %v4277 = vsel %vm4276, %v4268, %v4273
  %v4278 = vrsqrt.pop %v4208
  %v4279 = vmul.f32 %v4278, %v4208
  %v4280 = vmul.f32 %v4279, %v4278
  %v4281 = vmul.f32 0.5, %v4280
  %v4282 = vsub.f32 1.5, %v4281
  %v4283 = vmul.f32 %v4278, %v4282
  %vm4284 = vweird.f32 %v4208
  %vm4285 = vweird.f32 %v4278
  %vm4286 = vmor %vm4284, %vm4285
  %v4287 = vsel %vm4286, %v4278, %v4283
  %v4288 = vrsqrt.pop %v4209
  %v4289 = vmul.f32 %v4288, %v4209
  %v4290 = vmul.f32 %v4289, %v4288
  %v4291 = vmul.f32 0.5, %v4290
  %v4292 = vsub.f32 1.5, %v4291
  %v4293 = vmul.f32 %v4288, %v4292
  %vm4294 = vweird.f32 %v4209
  %vm4295 = vweird.f32 %v4288
  %vm4296 = vmor %vm4294, %vm4295
  %v4297 = vsel %vm4296, %v4288, %v4293
  %v4298 = vrsqrt.pop %v4210
  %v4299 = vmul.f32 %v4298, %v4210
  %v4300 = vmul.f32 %v4299, %v4298
  %v4301 = vmul.f32 0.5, %v4300
  %v4302 = vsub.f32 1.5, %v4301
  %v4303 = vmul.f32 %v4298, %v4302
  %vm4304 = vweird.f32 %v4210
  %vm4305 = vweird.f32 %v4298
  %vm4306 = vmor %vm4304, %vm4305
  %v4307 = vsel %vm4306, %v4298, %v4303
  %v4308 = vrsqrt.pop %v4211
  %v4309 = vmul.f32 %v4308, %v4211
  %v4310 = vmul.f32 %v4309, %v4308
  %v4311 = vmul.f32 0.5, %v4310
  %v4312 = vsub.f32 1.5, %v4311
  %v4313 = vmul.f32 %v4308, %v4312
  %vm4314 = vweird.f32 %v4211
  %vm4315 = vweird.f32 %v4308
  %vm4316 = vmor %vm4314, %vm4315
  %v4317 = vsel %vm4316, %v4308, %v4313
  %v4318 = vrsqrt.pop %v4212
  %v4319 = vmul.f32 %v4318, %v4212
  %v4320 = vmul.f32 %v4319, %v4318
  %v4321 = vmul.f32 0.5, %v4320
  %v4322 = vsub.f32 1.5, %v4321
  %v4323 = vmul.f32 %v4318, %v4322
  %vm4324 = vweird.f32 %v4212
  %vm4325 = vweird.f32 %v4318
  %vm4326 = vmor %vm4324, %vm4325
  %v4327 = vsel %vm4326, %v4318, %v4323
  %v4328 = vrsqrt.pop %v4213
  %v4329 = vmul.f32 %v4328, %v4213
  %v4330 = vmul.f32 %v4329, %v4328
  %v4331 = vmul.f32 0.5, %v4330
  %v4332 = vsub.f32 1.5, %v4331
  %v4333 = vmul.f32 %v4328, %v4332
  %vm4334 = vweird.f32 %v4213
  %vm4335 = vweird.f32 %v4328
  %vm4336 = vmor %vm4334, %vm4335
  %v4337 = vsel %vm4336, %v4328, %v4333
  %v4338 = vrsqrt.pop %v4214
  %v4339 = vmul.f32 %v4338, %v4214
  %v4340 = vmul.f32 %v4339, %v4338
  %v4341 = vmul.f32 0.5, %v4340
  %v4342 = vsub.f32 1.5, %v4341
  %v4343 = vmul.f32 %v4338, %v4342
  %vm4344 = vweird.f32 %v4214
  %vm4345 = vweird.f32 %v4338
  %vm4346 = vmor %vm4344, %vm4345
  %v4347 = vsel %vm4346, %v4338, %v4343
  %v4348 = vrsqrt.pop %v4215
  %v4349 = vmul.f32 %v4348, %v4215
  %v4350 = vmul.f32 %v4349, %v4348
  %v4351 = vmul.f32 0.5, %v4350
  %v4352 = vsub.f32 1.5, %v4351
  %v4353 = vmul.f32 %v4348, %v4352
  %vm4354 = vweird.f32 %v4215
  %vm4355 = vweird.f32 %v4348
  %vm4356 = vmor %vm4354, %vm4355
  %v4357 = vsel %vm4356, %v4348, %v4353
  %v4358 = vrsqrt.pop %v4216
  %v4359 = vmul.f32 %v4358, %v4216
  %v4360 = vmul.f32 %v4359, %v4358
  %v4361 = vmul.f32 0.5, %v4360
  %v4362 = vsub.f32 1.5, %v4361
  %v4363 = vmul.f32 %v4358, %v4362
  %vm4364 = vweird.f32 %v4216
  %vm4365 = vweird.f32 %v4358
  %vm4366 = vmor %vm4364, %vm4365
  %v4367 = vsel %vm4366, %v4358, %v4363
  %v4368 = vrsqrt.pop %v4217
  %v4369 = vmul.f32 %v4368, %v4217
  %v4370 = vmul.f32 %v4369, %v4368
  %v4371 = vmul.f32 0.5, %v4370
  %v4372 = vsub.f32 1.5, %v4371
  %v4373 = vmul.f32 %v4368, %v4372
  %vm4374 = vweird.f32 %v4217
  %vm4375 = vweird.f32 %v4368
  %vm4376 = vmor %vm4374, %vm4375
  %v4377 = vsel %vm4376, %v4368, %v4373
  %v4378 = vmul.f32 %v4106, %v4227
  %v4379 = vmul.f32 %v4107, %v4237
  %v4380 = vmul.f32 %v4108, %v4247
  %v4381 = vmul.f32 %v4109, %v4257
  %v4382 = vmul.f32 %v4110, %v4267
  %v4383 = vmul.f32 %v4111, %v4277
  %v4384 = vmul.f32 %v4112, %v4287
  %v4385 = vmul.f32 %v4113, %v4297
  %v4386 = vmul.f32 %v4114, %v4307
  %v4387 = vmul.f32 %v4115, %v4317
  %v4388 = vmul.f32 %v4116, %v4327
  %v4389 = vmul.f32 %v4117, %v4337
  %v4390 = vmul.f32 %v4118, %v4347
  %v4391 = vmul.f32 %v4119, %v4357
  %v4392 = vmul.f32 %v4120, %v4367
  %v4393 = vmul.f32 %v4121, %v4377
  %v4394 = vperm.slane %v41, 0
  %v4395 = vmul.f32 %v4378, %v4394
  %v4396 = vmul.f32 %v4379, %v4394
  %v4397 = vmul.f32 %v4380, %v4394
  %v4398 = vmul.f32 %v4381, %v4394
  %v4399 = vmul.f32 %v4382, %v4394
  %v4400 = vmul.f32 %v4383, %v4394
  %v4401 = vmul.f32 %v4384, %v4394
  %v4402 = vmul.f32 %v4385, %v4394
  %v4403 = vmul.f32 %v4386, %v4394
  %v4404 = vmul.f32 %v4387, %v4394
  %v4405 = vmul.f32 %v4388, %v4394
  %v4406 = vmul.f32 %v4389, %v4394
  %v4407 = vmul.f32 %v4390, %v4394
  %v4408 = vmul.f32 %v4391, %v4394
  %v4409 = vmul.f32 %v4392, %v4394
  %v4410 = vmul.f32 %v4393, %v4394
  %v4411 = vperm.slane %v42, 0
  %v4412 = vadd.f32 %v4395, %v4411
  %v4413 = vadd.f32 %v4396, %v4411
  %v4414 = vadd.f32 %v4397, %v4411
  %v4415 = vadd.f32 %v4398, %v4411
  %v4416 = vadd.f32 %v4399, %v4411
  %v4417 = vadd.f32 %v4400, %v4411
  %v4418 = vadd.f32 %v4401, %v4411
  %v4419 = vadd.f32 %v4402, %v4411
  %v4420 = vadd.f32 %v4403, %v4411
  %v4421 = vadd.f32 %v4404, %v4411
  %v4422 = vadd.f32 %v4405, %v4411
  %v4423 = vadd.f32 %v4406, %v4411
  %v4424 = vadd.f32 %v4407, %v4411
  %v4425 = vadd.f32 %v4408, %v4411
  %v4426 = vadd.f32 %v4409, %v4411
  %v4427 = vadd.f32 %v4410, %v4411
  %v4428 = vld [vmem:[%s4] sm:$0xff]
  %v4429 = vld [vmem:[%s4 + $0x8] sm:$0xff]
  %v4430 = vld [vmem:[%s4 + $0x10] sm:$0xff]
  %v4431 = vld [vmem:[%s4 + $0x18] sm:$0xff]
  %v4432 = vperm.slane %v46, 0
  %v4434 = vsel %vm47, %v4412, 0
  %v4437 = vsel %vm47, %v4413, 0
  %v4440 = vsel %vm47, %v4414, 0
  %v4443 = vsel %vm47, %v4415, 0
  %v4446 = vsel %vm47, %v4416, 0
  %v4449 = vsel %vm47, %v4417, 0
  %v4452 = vsel %vm47, %v4418, 0
  %v4455 = vsel %vm47, %v4419, 0
  %v4458 = vsel %vm47, %v4420, 0
  %v4461 = vsel %vm47, %v4421, 0
  %v4464 = vsel %vm47, %v4422, 0
  %v4467 = vsel %vm47, %v4423, 0
  %v4470 = vsel %vm47, %v4424, 0
  %v4473 = vsel %vm47, %v4425, 0
  %v4476 = vsel %vm47, %v4426, 0
  %v4479 = vsel %vm47, %v4427, 0
  %4481 = vmatpush.msra.mxu0 0.0
  %4482 = vmatpush.msra.mxu0 0.0
  %4483 = vmatpush.msra.mxu0 0.0
  %4484 = vmatpush.msra.mxu0 0.0
  %4485 = vmatpush.msra.mxu0 0.0
  %4486 = vmatpush.msra.mxu0 0.0
  %4487 = vmatpush.msra.mxu0 0.0
  %4488 = vmatpush.msra.mxu0 0.0
  %4489 = vmatpush.msra.mxu0 0.0
  %4490 = vmatpush.msra.mxu0 0.0
  %4491 = vmatpush.msra.mxu0 0.0
  %4492 = vmatpush.msra.mxu0 0.0
  %4493 = vmatpush.msra.mxu0 %v4431
  %4494 = vmatpush.msra.mxu0 %v4430
  %4495 = vmatpush.msra.mxu0 %v4429
  %4496 = vmatpush.msra.mxu0 %v4428
  %4497 = vmatmul.f32.gmra.mxu0 %v4434
  %v4498 = vpop.f32.mrf.mxu0
  %v4499 = vadd.f32 %v4432, %v4498
  %4500 = vmatmul.f32.gmra.mxu0 %v4437
  %v4501 = vpop.f32.mrf.mxu0
  %v4502 = vadd.f32 %v4432, %v4501
  %4503 = vmatmul.f32.gmra.mxu0 %v4440
  %v4504 = vpop.f32.mrf.mxu0
  %v4505 = vadd.f32 %v4432, %v4504
  %4506 = vmatmul.f32.gmra.mxu0 %v4443
  %v4507 = vpop.f32.mrf.mxu0
  %v4508 = vadd.f32 %v4432, %v4507
  %4509 = vmatmul.f32.gmra.mxu0 %v4446
  %v4510 = vpop.f32.mrf.mxu0
  %v4511 = vadd.f32 %v4432, %v4510
  %4512 = vmatmul.f32.gmra.mxu0 %v4449
  %v4513 = vpop.f32.mrf.mxu0
  %v4514 = vadd.f32 %v4432, %v4513
  %4515 = vmatmul.f32.gmra.mxu0 %v4452
  %v4516 = vpop.f32.mrf.mxu0
  %v4517 = vadd.f32 %v4432, %v4516
  %4518 = vmatmul.f32.gmra.mxu0 %v4455
  %v4519 = vpop.f32.mrf.mxu0
  %v4520 = vadd.f32 %v4432, %v4519
  %4521 = vmatmul.f32.gmra.mxu0 %v4458
  %v4522 = vpop.f32.mrf.mxu0
  %v4523 = vadd.f32 %v4432, %v4522
  %4524 = vmatmul.f32.gmra.mxu0 %v4461
  %v4525 = vpop.f32.mrf.mxu0
  %v4526 = vadd.f32 %v4432, %v4525
  %4527 = vmatmul.f32.gmra.mxu0 %v4464
  %v4528 = vpop.f32.mrf.mxu0
  %v4529 = vadd.f32 %v4432, %v4528
  %4530 = vmatmul.f32.gmra.mxu0 %v4467
  %v4531 = vpop.f32.mrf.mxu0
  %v4532 = vadd.f32 %v4432, %v4531
  %4533 = vmatmul.f32.gmra.mxu0 %v4470
  %v4534 = vpop.f32.mrf.mxu0
  %v4535 = vadd.f32 %v4432, %v4534
  %4536 = vmatmul.f32.gmra.mxu0 %v4473
  %v4537 = vpop.f32.mrf.mxu0
  %v4538 = vadd.f32 %v4432, %v4537
  %4539 = vmatmul.f32.gmra.mxu0 %v4476
  %v4540 = vpop.f32.mrf.mxu0
  %v4541 = vadd.f32 %v4432, %v4540
  %4542 = vmatmul.f32.gmra.mxu0 %v4479
  %v4543 = vpop.f32.mrf.mxu0
  %v4544 = vadd.f32 %v4432, %v4543
  %4545 = vdwg.mxu0
  %v4546 = vmul.f32 %v4499, 0.5
  %v4547 = vmul.f32 %v4502, 0.5
  %v4548 = vmul.f32 %v4505, 0.5
  %v4549 = vmul.f32 %v4508, 0.5
  %v4550 = vmul.f32 %v4511, 0.5
  %v4551 = vmul.f32 %v4514, 0.5
  %v4552 = vmul.f32 %v4517, 0.5
  %v4553 = vmul.f32 %v4520, 0.5
  %v4554 = vmul.f32 %v4523, 0.5
  %v4555 = vmul.f32 %v4526, 0.5
  %v4556 = vmul.f32 %v4529, 0.5
  %v4557 = vmul.f32 %v4532, 0.5
  %v4558 = vmul.f32 %v4535, 0.5
  %v4559 = vmul.f32 %v4538, 0.5
  %v4560 = vmul.f32 %v4541, 0.5
  %v4561 = vmul.f32 %v4544, 0.5
  %v4562 = vmul.f32 %v4499, 0.70710677
  %v4563 = vmul.f32 %v4502, 0.70710677
  %v4564 = vmul.f32 %v4505, 0.70710677
  %v4565 = vmul.f32 %v4508, 0.70710677
  %v4566 = vmul.f32 %v4511, 0.70710677
  %v4567 = vmul.f32 %v4514, 0.70710677
  %v4568 = vmul.f32 %v4517, 0.70710677
  %v4569 = vmul.f32 %v4520, 0.70710677
  %v4570 = vmul.f32 %v4523, 0.70710677
  %v4571 = vmul.f32 %v4526, 0.70710677
  %v4572 = vmul.f32 %v4529, 0.70710677
  %v4573 = vmul.f32 %v4532, 0.70710677
  %v4574 = vmul.f32 %v4535, 0.70710677
  %v4575 = vmul.f32 %v4538, 0.70710677
  %v4576 = vmul.f32 %v4541, 0.70710677
  %v4577 = vmul.f32 %v4544, 0.70710677
  %v4578 = vmul.f32 %v4562, %v4562
  %v4579 = vmin.f32 16.0, %v4578
  %v4580 = vmul.f32 %v4579, 2.1237322e-06
  %v4581 = vadd.f32 %v4580, 0.00028619796
  %v4582 = vmul.f32 %v4579, %v4581
  %v4583 = vadd.f32 %v4582, 0.0036580483
  %v4584 = vmul.f32 %v4579, %v4583
  %v4585 = vadd.f32 %v4584, 0.05243302
  %v4586 = vmul.f32 %v4579, %v4585
  %v4587 = vadd.f32 %v4586, 0.18741608
  %v4588 = vmul.f32 %v4579, %v4587
  %v4589 = vadd.f32 %v4588, 1.1283791
  %v4590 = vmul.f32 %v4562, %v4589
  %v4591 = vmul.f32 %v4579, 3.8918573e-05
  %v4592 = vadd.f32 %v4591, 0.001143296
  %v4593 = vmul.f32 %v4579, %v4592
  %v4594 = vadd.f32 %v4593, 0.014752088
  %v4595 = vmul.f32 %v4579, %v4594
  %v4596 = vadd.f32 %v4595, 0.112945676
  %v4597 = vmul.f32 %v4579, %v4596
  %v4598 = vadd.f32 %v4597, 0.4994258
  %v4599 = vmul.f32 %v4579, %v4598
  %v4600 = vadd.f32 %v4599, 1.0
  %v4601 = vrcp.pop %v4600
  %v4602 = vmul.f32 %v4600, %v4601
  %v4603 = vsub.f32 1.0, %v4602
  %v4604 = vmul.f32 %v4601, %v4603
  %v4605 = vadd.f32 %v4601, %v4604
  %vm4606 = vweird.f32 %v4600
  %vm4607 = vweird.f32 %v4601
  %vm4608 = vmor %vm4606, %vm4607
  %v4609 = vsel %vm4608, %v4601, %v4605
  %v4610 = vand.u32 2147483647, %v4600
  %vm4611 = vcmp.eq.f32.partialorder %v4610, 8.507059e+37
  %v4612 = vand.u32 %v4600, 2147483648
  %v4613 = vor.u32 1.1754944e-38, %v4612
  %v4614 = vsel %vm4611, %v4613, %v4609
  %v4615 = vmul.f32 %v4590, %v4614
  %v4616 = vmin.f32 %v4615, 1.0
  %v4617 = vmax.f32 %v4616, -1.0
  %v4618 = vmul.f32 %v4563, %v4563
  %v4619 = vmin.f32 16.0, %v4618
  %v4620 = vmul.f32 %v4619, 2.1237322e-06
  %v4621 = vadd.f32 %v4620, 0.00028619796
  %v4622 = vmul.f32 %v4619, %v4621
  %v4623 = vadd.f32 %v4622, 0.0036580483
  %v4624 = vmul.f32 %v4619, %v4623
  %v4625 = vadd.f32 %v4624, 0.05243302
  %v4626 = vmul.f32 %v4619, %v4625
  %v4627 = vadd.f32 %v4626, 0.18741608
  %v4628 = vmul.f32 %v4619, %v4627
  %v4629 = vadd.f32 %v4628, 1.1283791
  %v4630 = vmul.f32 %v4563, %v4629
  %v4631 = vmul.f32 %v4619, 3.8918573e-05
  %v4632 = vadd.f32 %v4631, 0.001143296
  %v4633 = vmul.f32 %v4619, %v4632
  %v4634 = vadd.f32 %v4633, 0.014752088
  %v4635 = vmul.f32 %v4619, %v4634
  %v4636 = vadd.f32 %v4635, 0.112945676
  %v4637 = vmul.f32 %v4619, %v4636
  %v4638 = vadd.f32 %v4637, 0.4994258
  %v4639 = vmul.f32 %v4619, %v4638
  %v4640 = vadd.f32 %v4639, 1.0
  %v4641 = vrcp.pop %v4640
  %v4642 = vmul.f32 %v4640, %v4641
  %v4643 = vsub.f32 1.0, %v4642
  %v4644 = vmul.f32 %v4641, %v4643
  %v4645 = vadd.f32 %v4641, %v4644
  %vm4646 = vweird.f32 %v4640
  %vm4647 = vweird.f32 %v4641
  %vm4648 = vmor %vm4646, %vm4647
  %v4649 = vsel %vm4648, %v4641, %v4645
  %v4650 = vand.u32 2147483647, %v4640
  %vm4651 = vcmp.eq.f32.partialorder %v4650, 8.507059e+37
  %v4652 = vand.u32 %v4640, 2147483648
  %v4653 = vor.u32 1.1754944e-38, %v4652
  %v4654 = vsel %vm4651, %v4653, %v4649
  %v4655 = vmul.f32 %v4630, %v4654
  %v4656 = vmin.f32 %v4655, 1.0
  %v4657 = vmax.f32 %v4656, -1.0
  %v4658 = vmul.f32 %v4564, %v4564
  %v4659 = vmin.f32 16.0, %v4658
  %v4660 = vmul.f32 %v4659, 2.1237322e-06
  %v4661 = vadd.f32 %v4660, 0.00028619796
  %v4662 = vmul.f32 %v4659, %v4661
  %v4663 = vadd.f32 %v4662, 0.0036580483
  %v4664 = vmul.f32 %v4659, %v4663
  %v4665 = vadd.f32 %v4664, 0.05243302
  %v4666 = vmul.f32 %v4659, %v4665
  %v4667 = vadd.f32 %v4666, 0.18741608
  %v4668 = vmul.f32 %v4659, %v4667
  %v4669 = vadd.f32 %v4668, 1.1283791
  %v4670 = vmul.f32 %v4564, %v4669
  %v4671 = vmul.f32 %v4659, 3.8918573e-05
  %v4672 = vadd.f32 %v4671, 0.001143296
  %v4673 = vmul.f32 %v4659, %v4672
  %v4674 = vadd.f32 %v4673, 0.014752088
  %v4675 = vmul.f32 %v4659, %v4674
  %v4676 = vadd.f32 %v4675, 0.112945676
  %v4677 = vmul.f32 %v4659, %v4676
  %v4678 = vadd.f32 %v4677, 0.4994258
  %v4679 = vmul.f32 %v4659, %v4678
  %v4680 = vadd.f32 %v4679, 1.0
  %v4681 = vrcp.pop %v4680
  %v4682 = vmul.f32 %v4680, %v4681
  %v4683 = vsub.f32 1.0, %v4682
  %v4684 = vmul.f32 %v4681, %v4683
  %v4685 = vadd.f32 %v4681, %v4684
  %vm4686 = vweird.f32 %v4680
  %vm4687 = vweird.f32 %v4681
  %vm4688 = vmor %vm4686, %vm4687
  %v4689 = vsel %vm4688, %v4681, %v4685
  %v4690 = vand.u32 2147483647, %v4680
  %vm4691 = vcmp.eq.f32.partialorder %v4690, 8.507059e+37
  %v4692 = vand.u32 %v4680, 2147483648
  %v4693 = vor.u32 1.1754944e-38, %v4692
  %v4694 = vsel %vm4691, %v4693, %v4689
  %v4695 = vmul.f32 %v4670, %v4694
  %v4696 = vmin.f32 %v4695, 1.0
  %v4697 = vmax.f32 %v4696, -1.0
  %v4698 = vmul.f32 %v4565, %v4565
  %v4699 = vmin.f32 16.0, %v4698
  %v4700 = vmul.f32 %v4699, 2.1237322e-06
  %v4701 = vadd.f32 %v4700, 0.00028619796
  %v4702 = vmul.f32 %v4699, %v4701
  %v4703 = vadd.f32 %v4702, 0.0036580483
  %v4704 = vmul.f32 %v4699, %v4703
  %v4705 = vadd.f32 %v4704, 0.05243302
  %v4706 = vmul.f32 %v4699, %v4705
  %v4707 = vadd.f32 %v4706, 0.18741608
  %v4708 = vmul.f32 %v4699, %v4707
  %v4709 = vadd.f32 %v4708, 1.1283791
  %v4710 = vmul.f32 %v4565, %v4709
  %v4711 = vmul.f32 %v4699, 3.8918573e-05
  %v4712 = vadd.f32 %v4711, 0.001143296
  %v4713 = vmul.f32 %v4699, %v4712
  %v4714 = vadd.f32 %v4713, 0.014752088
  %v4715 = vmul.f32 %v4699, %v4714
  %v4716 = vadd.f32 %v4715, 0.112945676
  %v4717 = vmul.f32 %v4699, %v4716
  %v4718 = vadd.f32 %v4717, 0.4994258
  %v4719 = vmul.f32 %v4699, %v4718
  %v4720 = vadd.f32 %v4719, 1.0
  %v4721 = vrcp.pop %v4720
  %v4722 = vmul.f32 %v4720, %v4721
  %v4723 = vsub.f32 1.0, %v4722
  %v4724 = vmul.f32 %v4721, %v4723
  %v4725 = vadd.f32 %v4721, %v4724
  %vm4726 = vweird.f32 %v4720
  %vm4727 = vweird.f32 %v4721
  %vm4728 = vmor %vm4726, %vm4727
  %v4729 = vsel %vm4728, %v4721, %v4725
  %v4730 = vand.u32 2147483647, %v4720
  %vm4731 = vcmp.eq.f32.partialorder %v4730, 8.507059e+37
  %v4732 = vand.u32 %v4720, 2147483648
  %v4733 = vor.u32 1.1754944e-38, %v4732
  %v4734 = vsel %vm4731, %v4733, %v4729
  %v4735 = vmul.f32 %v4710, %v4734
  %v4736 = vmin.f32 %v4735, 1.0
  %v4737 = vmax.f32 %v4736, -1.0
  %v4738 = vmul.f32 %v4566, %v4566
  %v4739 = vmin.f32 16.0, %v4738
  %v4740 = vmul.f32 %v4739, 2.1237322e-06
  %v4741 = vadd.f32 %v4740, 0.00028619796
  %v4742 = vmul.f32 %v4739, %v4741
  %v4743 = vadd.f32 %v4742, 0.0036580483
  %v4744 = vmul.f32 %v4739, %v4743
  %v4745 = vadd.f32 %v4744, 0.05243302
  %v4746 = vmul.f32 %v4739, %v4745
  %v4747 = vadd.f32 %v4746, 0.18741608
  %v4748 = vmul.f32 %v4739, %v4747
  %v4749 = vadd.f32 %v4748, 1.1283791
  %v4750 = vmul.f32 %v4566, %v4749
  %v4751 = vmul.f32 %v4739, 3.8918573e-05
  %v4752 = vadd.f32 %v4751, 0.001143296
  %v4753 = vmul.f32 %v4739, %v4752
  %v4754 = vadd.f32 %v4753, 0.014752088
  %v4755 = vmul.f32 %v4739, %v4754
  %v4756 = vadd.f32 %v4755, 0.112945676
  %v4757 = vmul.f32 %v4739, %v4756
  %v4758 = vadd.f32 %v4757, 0.4994258
  %v4759 = vmul.f32 %v4739, %v4758
  %v4760 = vadd.f32 %v4759, 1.0
  %v4761 = vrcp.pop %v4760
  %v4762 = vmul.f32 %v4760, %v4761
  %v4763 = vsub.f32 1.0, %v4762
  %v4764 = vmul.f32 %v4761, %v4763
  %v4765 = vadd.f32 %v4761, %v4764
  %vm4766 = vweird.f32 %v4760
  %vm4767 = vweird.f32 %v4761
  %vm4768 = vmor %vm4766, %vm4767
  %v4769 = vsel %vm4768, %v4761, %v4765
  %v4770 = vand.u32 2147483647, %v4760
  %vm4771 = vcmp.eq.f32.partialorder %v4770, 8.507059e+37
  %v4772 = vand.u32 %v4760, 2147483648
  %v4773 = vor.u32 1.1754944e-38, %v4772
  %v4774 = vsel %vm4771, %v4773, %v4769
  %v4775 = vmul.f32 %v4750, %v4774
  %v4776 = vmin.f32 %v4775, 1.0
  %v4777 = vmax.f32 %v4776, -1.0
  %v4778 = vmul.f32 %v4567, %v4567
  %v4779 = vmin.f32 16.0, %v4778
  %v4780 = vmul.f32 %v4779, 2.1237322e-06
  %v4781 = vadd.f32 %v4780, 0.00028619796
  %v4782 = vmul.f32 %v4779, %v4781
  %v4783 = vadd.f32 %v4782, 0.0036580483
  %v4784 = vmul.f32 %v4779, %v4783
  %v4785 = vadd.f32 %v4784, 0.05243302
  %v4786 = vmul.f32 %v4779, %v4785
  %v4787 = vadd.f32 %v4786, 0.18741608
  %v4788 = vmul.f32 %v4779, %v4787
  %v4789 = vadd.f32 %v4788, 1.1283791
  %v4790 = vmul.f32 %v4567, %v4789
  %v4791 = vmul.f32 %v4779, 3.8918573e-05
  %v4792 = vadd.f32 %v4791, 0.001143296
  %v4793 = vmul.f32 %v4779, %v4792
  %v4794 = vadd.f32 %v4793, 0.014752088
  %v4795 = vmul.f32 %v4779, %v4794
  %v4796 = vadd.f32 %v4795, 0.112945676
  %v4797 = vmul.f32 %v4779, %v4796
  %v4798 = vadd.f32 %v4797, 0.4994258
  %v4799 = vmul.f32 %v4779, %v4798
  %v4800 = vadd.f32 %v4799, 1.0
  %v4801 = vrcp.pop %v4800
  %v4802 = vmul.f32 %v4800, %v4801
  %v4803 = vsub.f32 1.0, %v4802
  %v4804 = vmul.f32 %v4801, %v4803
  %v4805 = vadd.f32 %v4801, %v4804
  %vm4806 = vweird.f32 %v4800
  %vm4807 = vweird.f32 %v4801
  %vm4808 = vmor %vm4806, %vm4807
  %v4809 = vsel %vm4808, %v4801, %v4805
  %v4810 = vand.u32 2147483647, %v4800
  %vm4811 = vcmp.eq.f32.partialorder %v4810, 8.507059e+37
  %v4812 = vand.u32 %v4800, 2147483648
  %v4813 = vor.u32 1.1754944e-38, %v4812
  %v4814 = vsel %vm4811, %v4813, %v4809
  %v4815 = vmul.f32 %v4790, %v4814
  %v4816 = vmin.f32 %v4815, 1.0
  %v4817 = vmax.f32 %v4816, -1.0
  %v4818 = vmul.f32 %v4568, %v4568
  %v4819 = vmin.f32 16.0, %v4818
  %v4820 = vmul.f32 %v4819, 2.1237322e-06
  %v4821 = vadd.f32 %v4820, 0.00028619796
  %v4822 = vmul.f32 %v4819, %v4821
  %v4823 = vadd.f32 %v4822, 0.0036580483
  %v4824 = vmul.f32 %v4819, %v4823
  %v4825 = vadd.f32 %v4824, 0.05243302
  %v4826 = vmul.f32 %v4819, %v4825
  %v4827 = vadd.f32 %v4826, 0.18741608
  %v4828 = vmul.f32 %v4819, %v4827
  %v4829 = vadd.f32 %v4828, 1.1283791
  %v4830 = vmul.f32 %v4568, %v4829
  %v4831 = vmul.f32 %v4819, 3.8918573e-05
  %v4832 = vadd.f32 %v4831, 0.001143296
  %v4833 = vmul.f32 %v4819, %v4832
  %v4834 = vadd.f32 %v4833, 0.014752088
  %v4835 = vmul.f32 %v4819, %v4834
  %v4836 = vadd.f32 %v4835, 0.112945676
  %v4837 = vmul.f32 %v4819, %v4836
  %v4838 = vadd.f32 %v4837, 0.4994258
  %v4839 = vmul.f32 %v4819, %v4838
  %v4840 = vadd.f32 %v4839, 1.0
  %v4841 = vrcp.pop %v4840
  %v4842 = vmul.f32 %v4840, %v4841
  %v4843 = vsub.f32 1.0, %v4842
  %v4844 = vmul.f32 %v4841, %v4843
  %v4845 = vadd.f32 %v4841, %v4844
  %vm4846 = vweird.f32 %v4840
  %vm4847 = vweird.f32 %v4841
  %vm4848 = vmor %vm4846, %vm4847
  %v4849 = vsel %vm4848, %v4841, %v4845
  %v4850 = vand.u32 2147483647, %v4840
  %vm4851 = vcmp.eq.f32.partialorder %v4850, 8.507059e+37
  %v4852 = vand.u32 %v4840, 2147483648
  %v4853 = vor.u32 1.1754944e-38, %v4852
  %v4854 = vsel %vm4851, %v4853, %v4849
  %v4855 = vmul.f32 %v4830, %v4854
  %v4856 = vmin.f32 %v4855, 1.0
  %v4857 = vmax.f32 %v4856, -1.0
  %v4858 = vmul.f32 %v4569, %v4569
  %v4859 = vmin.f32 16.0, %v4858
  %v4860 = vmul.f32 %v4859, 2.1237322e-06
  %v4861 = vadd.f32 %v4860, 0.00028619796
  %v4862 = vmul.f32 %v4859, %v4861
  %v4863 = vadd.f32 %v4862, 0.0036580483
  %v4864 = vmul.f32 %v4859, %v4863
  %v4865 = vadd.f32 %v4864, 0.05243302
  %v4866 = vmul.f32 %v4859, %v4865
  %v4867 = vadd.f32 %v4866, 0.18741608
  %v4868 = vmul.f32 %v4859, %v4867
  %v4869 = vadd.f32 %v4868, 1.1283791
  %v4870 = vmul.f32 %v4569, %v4869
  %v4871 = vmul.f32 %v4859, 3.8918573e-05
  %v4872 = vadd.f32 %v4871, 0.001143296
  %v4873 = vmul.f32 %v4859, %v4872
  %v4874 = vadd.f32 %v4873, 0.014752088
  %v4875 = vmul.f32 %v4859, %v4874
  %v4876 = vadd.f32 %v4875, 0.112945676
  %v4877 = vmul.f32 %v4859, %v4876
  %v4878 = vadd.f32 %v4877, 0.4994258
  %v4879 = vmul.f32 %v4859, %v4878
  %v4880 = vadd.f32 %v4879, 1.0
  %v4881 = vrcp.pop %v4880
  %v4882 = vmul.f32 %v4880, %v4881
  %v4883 = vsub.f32 1.0, %v4882
  %v4884 = vmul.f32 %v4881, %v4883
  %v4885 = vadd.f32 %v4881, %v4884
  %vm4886 = vweird.f32 %v4880
  %vm4887 = vweird.f32 %v4881
  %vm4888 = vmor %vm4886, %vm4887
  %v4889 = vsel %vm4888, %v4881, %v4885
  %v4890 = vand.u32 2147483647, %v4880
  %vm4891 = vcmp.eq.f32.partialorder %v4890, 8.507059e+37
  %v4892 = vand.u32 %v4880, 2147483648
  %v4893 = vor.u32 1.1754944e-38, %v4892
  %v4894 = vsel %vm4891, %v4893, %v4889
  %v4895 = vmul.f32 %v4870, %v4894
  %v4896 = vmin.f32 %v4895, 1.0
  %v4897 = vmax.f32 %v4896, -1.0
  %v4898 = vmul.f32 %v4570, %v4570
  %v4899 = vmin.f32 16.0, %v4898
  %v4900 = vmul.f32 %v4899, 2.1237322e-06
  %v4901 = vadd.f32 %v4900, 0.00028619796
  %v4902 = vmul.f32 %v4899, %v4901
  %v4903 = vadd.f32 %v4902, 0.0036580483
  %v4904 = vmul.f32 %v4899, %v4903
  %v4905 = vadd.f32 %v4904, 0.05243302
  %v4906 = vmul.f32 %v4899, %v4905
  %v4907 = vadd.f32 %v4906, 0.18741608
  %v4908 = vmul.f32 %v4899, %v4907
  %v4909 = vadd.f32 %v4908, 1.1283791
  %v4910 = vmul.f32 %v4570, %v4909
  %v4911 = vmul.f32 %v4899, 3.8918573e-05
  %v4912 = vadd.f32 %v4911, 0.001143296
  %v4913 = vmul.f32 %v4899, %v4912
  %v4914 = vadd.f32 %v4913, 0.014752088
  %v4915 = vmul.f32 %v4899, %v4914
  %v4916 = vadd.f32 %v4915, 0.112945676
  %v4917 = vmul.f32 %v4899, %v4916
  %v4918 = vadd.f32 %v4917, 0.4994258
  %v4919 = vmul.f32 %v4899, %v4918
  %v4920 = vadd.f32 %v4919, 1.0
  %v4921 = vrcp.pop %v4920
  %v4922 = vmul.f32 %v4920, %v4921
  %v4923 = vsub.f32 1.0, %v4922
  %v4924 = vmul.f32 %v4921, %v4923
  %v4925 = vadd.f32 %v4921, %v4924
  %vm4926 = vweird.f32 %v4920
  %vm4927 = vweird.f32 %v4921
  %vm4928 = vmor %vm4926, %vm4927
  %v4929 = vsel %vm4928, %v4921, %v4925
  %v4930 = vand.u32 2147483647, %v4920
  %vm4931 = vcmp.eq.f32.partialorder %v4930, 8.507059e+37
  %v4932 = vand.u32 %v4920, 2147483648
  %v4933 = vor.u32 1.1754944e-38, %v4932
  %v4934 = vsel %vm4931, %v4933, %v4929
  %v4935 = vmul.f32 %v4910, %v4934
  %v4936 = vmin.f32 %v4935, 1.0
  %v4937 = vmax.f32 %v4936, -1.0
  %v4938 = vmul.f32 %v4571, %v4571
  %v4939 = vmin.f32 16.0, %v4938
  %v4940 = vmul.f32 %v4939, 2.1237322e-06
  %v4941 = vadd.f32 %v4940, 0.00028619796
  %v4942 = vmul.f32 %v4939, %v4941
  %v4943 = vadd.f32 %v4942, 0.0036580483
  %v4944 = vmul.f32 %v4939, %v4943
  %v4945 = vadd.f32 %v4944, 0.05243302
  %v4946 = vmul.f32 %v4939, %v4945
  %v4947 = vadd.f32 %v4946, 0.18741608
  %v4948 = vmul.f32 %v4939, %v4947
  %v4949 = vadd.f32 %v4948, 1.1283791
  %v4950 = vmul.f32 %v4571, %v4949
  %v4951 = vmul.f32 %v4939, 3.8918573e-05
  %v4952 = vadd.f32 %v4951, 0.001143296
  %v4953 = vmul.f32 %v4939, %v4952
  %v4954 = vadd.f32 %v4953, 0.014752088
  %v4955 = vmul.f32 %v4939, %v4954
  %v4956 = vadd.f32 %v4955, 0.112945676
  %v4957 = vmul.f32 %v4939, %v4956
  %v4958 = vadd.f32 %v4957, 0.4994258
  %v4959 = vmul.f32 %v4939, %v4958
  %v4960 = vadd.f32 %v4959, 1.0
  %v4961 = vrcp.pop %v4960
  %v4962 = vmul.f32 %v4960, %v4961
  %v4963 = vsub.f32 1.0, %v4962
  %v4964 = vmul.f32 %v4961, %v4963
  %v4965 = vadd.f32 %v4961, %v4964
  %vm4966 = vweird.f32 %v4960
  %vm4967 = vweird.f32 %v4961
  %vm4968 = vmor %vm4966, %vm4967
  %v4969 = vsel %vm4968, %v4961, %v4965
  %v4970 = vand.u32 2147483647, %v4960
  %vm4971 = vcmp.eq.f32.partialorder %v4970, 8.507059e+37
  %v4972 = vand.u32 %v4960, 2147483648
  %v4973 = vor.u32 1.1754944e-38, %v4972
  %v4974 = vsel %vm4971, %v4973, %v4969
  %v4975 = vmul.f32 %v4950, %v4974
  %v4976 = vmin.f32 %v4975, 1.0
  %v4977 = vmax.f32 %v4976, -1.0
  %v4978 = vmul.f32 %v4572, %v4572
  %v4979 = vmin.f32 16.0, %v4978
  %v4980 = vmul.f32 %v4979, 2.1237322e-06
  %v4981 = vadd.f32 %v4980, 0.00028619796
  %v4982 = vmul.f32 %v4979, %v4981
  %v4983 = vadd.f32 %v4982, 0.0036580483
  %v4984 = vmul.f32 %v4979, %v4983
  %v4985 = vadd.f32 %v4984, 0.05243302
  %v4986 = vmul.f32 %v4979, %v4985
  %v4987 = vadd.f32 %v4986, 0.18741608
  %v4988 = vmul.f32 %v4979, %v4987
  %v4989 = vadd.f32 %v4988, 1.1283791
  %v4990 = vmul.f32 %v4572, %v4989
  %v4991 = vmul.f32 %v4979, 3.8918573e-05
  %v4992 = vadd.f32 %v4991, 0.001143296
  %v4993 = vmul.f32 %v4979, %v4992
  %v4994 = vadd.f32 %v4993, 0.014752088
  %v4995 = vmul.f32 %v4979, %v4994
  %v4996 = vadd.f32 %v4995, 0.112945676
  %v4997 = vmul.f32 %v4979, %v4996
  %v4998 = vadd.f32 %v4997, 0.4994258
  %v4999 = vmul.f32 %v4979, %v4998
  %v5000 = vadd.f32 %v4999, 1.0
  %v5001 = vrcp.pop %v5000
  %v5002 = vmul.f32 %v5000, %v5001
  %v5003 = vsub.f32 1.0, %v5002
  %v5004 = vmul.f32 %v5001, %v5003
  %v5005 = vadd.f32 %v5001, %v5004
  %vm5006 = vweird.f32 %v5000
  %vm5007 = vweird.f32 %v5001
  %vm5008 = vmor %vm5006, %vm5007
  %v5009 = vsel %vm5008, %v5001, %v5005
  %v5010 = vand.u32 2147483647, %v5000
  %vm5011 = vcmp.eq.f32.partialorder %v5010, 8.507059e+37
  %v5012 = vand.u32 %v5000, 2147483648
  %v5013 = vor.u32 1.1754944e-38, %v5012
  %v5014 = vsel %vm5011, %v5013, %v5009
  %v5015 = vmul.f32 %v4990, %v5014
  %v5016 = vmin.f32 %v5015, 1.0
  %v5017 = vmax.f32 %v5016, -1.0
  %v5018 = vmul.f32 %v4573, %v4573
  %v5019 = vmin.f32 16.0, %v5018
  %v5020 = vmul.f32 %v5019, 2.1237322e-06
  %v5021 = vadd.f32 %v5020, 0.00028619796
  %v5022 = vmul.f32 %v5019, %v5021
  %v5023 = vadd.f32 %v5022, 0.0036580483
  %v5024 = vmul.f32 %v5019, %v5023
  %v5025 = vadd.f32 %v5024, 0.05243302
  %v5026 = vmul.f32 %v5019, %v5025
  %v5027 = vadd.f32 %v5026, 0.18741608
  %v5028 = vmul.f32 %v5019, %v5027
  %v5029 = vadd.f32 %v5028, 1.1283791
  %v5030 = vmul.f32 %v4573, %v5029
  %v5031 = vmul.f32 %v5019, 3.8918573e-05
  %v5032 = vadd.f32 %v5031, 0.001143296
  %v5033 = vmul.f32 %v5019, %v5032
  %v5034 = vadd.f32 %v5033, 0.014752088
  %v5035 = vmul.f32 %v5019, %v5034
  %v5036 = vadd.f32 %v5035, 0.112945676
  %v5037 = vmul.f32 %v5019, %v5036
  %v5038 = vadd.f32 %v5037, 0.4994258
  %v5039 = vmul.f32 %v5019, %v5038
  %v5040 = vadd.f32 %v5039, 1.0
  %v5041 = vrcp.pop %v5040
  %v5042 = vmul.f32 %v5040, %v5041
  %v5043 = vsub.f32 1.0, %v5042
  %v5044 = vmul.f32 %v5041, %v5043
  %v5045 = vadd.f32 %v5041, %v5044
  %vm5046 = vweird.f32 %v5040
  %vm5047 = vweird.f32 %v5041
  %vm5048 = vmor %vm5046, %vm5047
  %v5049 = vsel %vm5048, %v5041, %v5045
  %v5050 = vand.u32 2147483647, %v5040
  %vm5051 = vcmp.eq.f32.partialorder %v5050, 8.507059e+37
  %v5052 = vand.u32 %v5040, 2147483648
  %v5053 = vor.u32 1.1754944e-38, %v5052
  %v5054 = vsel %vm5051, %v5053, %v5049
  %v5055 = vmul.f32 %v5030, %v5054
  %v5056 = vmin.f32 %v5055, 1.0
  %v5057 = vmax.f32 %v5056, -1.0
  %v5058 = vmul.f32 %v4574, %v4574
  %v5059 = vmin.f32 16.0, %v5058
  %v5060 = vmul.f32 %v5059, 2.1237322e-06
  %v5061 = vadd.f32 %v5060, 0.00028619796
  %v5062 = vmul.f32 %v5059, %v5061
  %v5063 = vadd.f32 %v5062, 0.0036580483
  %v5064 = vmul.f32 %v5059, %v5063
  %v5065 = vadd.f32 %v5064, 0.05243302
  %v5066 = vmul.f32 %v5059, %v5065
  %v5067 = vadd.f32 %v5066, 0.18741608
  %v5068 = vmul.f32 %v5059, %v5067
  %v5069 = vadd.f32 %v5068, 1.1283791
  %v5070 = vmul.f32 %v4574, %v5069
  %v5071 = vmul.f32 %v5059, 3.8918573e-05
  %v5072 = vadd.f32 %v5071, 0.001143296
  %v5073 = vmul.f32 %v5059, %v5072
  %v5074 = vadd.f32 %v5073, 0.014752088
  %v5075 = vmul.f32 %v5059, %v5074
  %v5076 = vadd.f32 %v5075, 0.112945676
  %v5077 = vmul.f32 %v5059, %v5076
  %v5078 = vadd.f32 %v5077, 0.4994258
  %v5079 = vmul.f32 %v5059, %v5078
  %v5080 = vadd.f32 %v5079, 1.0
  %v5081 = vrcp.pop %v5080
  %v5082 = vmul.f32 %v5080, %v5081
  %v5083 = vsub.f32 1.0, %v5082
  %v5084 = vmul.f32 %v5081, %v5083
  %v5085 = vadd.f32 %v5081, %v5084
  %vm5086 = vweird.f32 %v5080
  %vm5087 = vweird.f32 %v5081
  %vm5088 = vmor %vm5086, %vm5087
  %v5089 = vsel %vm5088, %v5081, %v5085
  %v5090 = vand.u32 2147483647, %v5080
  %vm5091 = vcmp.eq.f32.partialorder %v5090, 8.507059e+37
  %v5092 = vand.u32 %v5080, 2147483648
  %v5093 = vor.u32 1.1754944e-38, %v5092
  %v5094 = vsel %vm5091, %v5093, %v5089
  %v5095 = vmul.f32 %v5070, %v5094
  %v5096 = vmin.f32 %v5095, 1.0
  %v5097 = vmax.f32 %v5096, -1.0
  %v5098 = vmul.f32 %v4575, %v4575
  %v5099 = vmin.f32 16.0, %v5098
  %v5100 = vmul.f32 %v5099, 2.1237322e-06
  %v5101 = vadd.f32 %v5100, 0.00028619796
  %v5102 = vmul.f32 %v5099, %v5101
  %v5103 = vadd.f32 %v5102, 0.0036580483
  %v5104 = vmul.f32 %v5099, %v5103
  %v5105 = vadd.f32 %v5104, 0.05243302
  %v5106 = vmul.f32 %v5099, %v5105
  %v5107 = vadd.f32 %v5106, 0.18741608
  %v5108 = vmul.f32 %v5099, %v5107
  %v5109 = vadd.f32 %v5108, 1.1283791
  %v5110 = vmul.f32 %v4575, %v5109
  %v5111 = vmul.f32 %v5099, 3.8918573e-05
  %v5112 = vadd.f32 %v5111, 0.001143296
  %v5113 = vmul.f32 %v5099, %v5112
  %v5114 = vadd.f32 %v5113, 0.014752088
  %v5115 = vmul.f32 %v5099, %v5114
  %v5116 = vadd.f32 %v5115, 0.112945676
  %v5117 = vmul.f32 %v5099, %v5116
  %v5118 = vadd.f32 %v5117, 0.4994258
  %v5119 = vmul.f32 %v5099, %v5118
  %v5120 = vadd.f32 %v5119, 1.0
  %v5121 = vrcp.pop %v5120
  %v5122 = vmul.f32 %v5120, %v5121
  %v5123 = vsub.f32 1.0, %v5122
  %v5124 = vmul.f32 %v5121, %v5123
  %v5125 = vadd.f32 %v5121, %v5124
  %vm5126 = vweird.f32 %v5120
  %vm5127 = vweird.f32 %v5121
  %vm5128 = vmor %vm5126, %vm5127
  %v5129 = vsel %vm5128, %v5121, %v5125
  %v5130 = vand.u32 2147483647, %v5120
  %vm5131 = vcmp.eq.f32.partialorder %v5130, 8.507059e+37
  %v5132 = vand.u32 %v5120, 2147483648
  %v5133 = vor.u32 1.1754944e-38, %v5132
  %v5134 = vsel %vm5131, %v5133, %v5129
  %v5135 = vmul.f32 %v5110, %v5134
  %v5136 = vmin.f32 %v5135, 1.0
  %v5137 = vmax.f32 %v5136, -1.0
  %v5138 = vmul.f32 %v4576, %v4576
  %v5139 = vmin.f32 16.0, %v5138
  %v5140 = vmul.f32 %v5139, 2.1237322e-06
  %v5141 = vadd.f32 %v5140, 0.00028619796
  %v5142 = vmul.f32 %v5139, %v5141
  %v5143 = vadd.f32 %v5142, 0.0036580483
  %v5144 = vmul.f32 %v5139, %v5143
  %v5145 = vadd.f32 %v5144, 0.05243302
  %v5146 = vmul.f32 %v5139, %v5145
  %v5147 = vadd.f32 %v5146, 0.18741608
  %v5148 = vmul.f32 %v5139, %v5147
  %v5149 = vadd.f32 %v5148, 1.1283791
  %v5150 = vmul.f32 %v4576, %v5149
  %v5151 = vmul.f32 %v5139, 3.8918573e-05
  %v5152 = vadd.f32 %v5151, 0.001143296
  %v5153 = vmul.f32 %v5139, %v5152
  %v5154 = vadd.f32 %v5153, 0.014752088
  %v5155 = vmul.f32 %v5139, %v5154
  %v5156 = vadd.f32 %v5155, 0.112945676
  %v5157 = vmul.f32 %v5139, %v5156
  %v5158 = vadd.f32 %v5157, 0.4994258
  %v5159 = vmul.f32 %v5139, %v5158
  %v5160 = vadd.f32 %v5159, 1.0
  %v5161 = vrcp.pop %v5160
  %v5162 = vmul.f32 %v5160, %v5161
  %v5163 = vsub.f32 1.0, %v5162
  %v5164 = vmul.f32 %v5161, %v5163
  %v5165 = vadd.f32 %v5161, %v5164
  %vm5166 = vweird.f32 %v5160
  %vm5167 = vweird.f32 %v5161
  %vm5168 = vmor %vm5166, %vm5167
  %v5169 = vsel %vm5168, %v5161, %v5165
  %v5170 = vand.u32 2147483647, %v5160
  %vm5171 = vcmp.eq.f32.partialorder %v5170, 8.507059e+37
  %v5172 = vand.u32 %v5160, 2147483648
  %v5173 = vor.u32 1.1754944e-38, %v5172
  %v5174 = vsel %vm5171, %v5173, %v5169
  %v5175 = vmul.f32 %v5150, %v5174
  %v5176 = vmin.f32 %v5175, 1.0
  %v5177 = vmax.f32 %v5176, -1.0
  %v5178 = vmul.f32 %v4577, %v4577
  %v5179 = vmin.f32 16.0, %v5178
  %v5180 = vmul.f32 %v5179, 2.1237322e-06
  %v5181 = vadd.f32 %v5180, 0.00028619796
  %v5182 = vmul.f32 %v5179, %v5181
  %v5183 = vadd.f32 %v5182, 0.0036580483
  %v5184 = vmul.f32 %v5179, %v5183
  %v5185 = vadd.f32 %v5184, 0.05243302
  %v5186 = vmul.f32 %v5179, %v5185
  %v5187 = vadd.f32 %v5186, 0.18741608
  %v5188 = vmul.f32 %v5179, %v5187
  %v5189 = vadd.f32 %v5188, 1.1283791
  %v5190 = vmul.f32 %v4577, %v5189
  %v5191 = vmul.f32 %v5179, 3.8918573e-05
  %v5192 = vadd.f32 %v5191, 0.001143296
  %v5193 = vmul.f32 %v5179, %v5192
  %v5194 = vadd.f32 %v5193, 0.014752088
  %v5195 = vmul.f32 %v5179, %v5194
  %v5196 = vadd.f32 %v5195, 0.112945676
  %v5197 = vmul.f32 %v5179, %v5196
  %v5198 = vadd.f32 %v5197, 0.4994258
  %v5199 = vmul.f32 %v5179, %v5198
  %v5200 = vadd.f32 %v5199, 1.0
  %v5201 = vrcp.pop %v5200
  %v5202 = vmul.f32 %v5200, %v5201
  %v5203 = vsub.f32 1.0, %v5202
  %v5204 = vmul.f32 %v5201, %v5203
  %v5205 = vadd.f32 %v5201, %v5204
  %vm5206 = vweird.f32 %v5200
  %vm5207 = vweird.f32 %v5201
  %vm5208 = vmor %vm5206, %vm5207
  %v5209 = vsel %vm5208, %v5201, %v5205
  %v5210 = vand.u32 2147483647, %v5200
  %vm5211 = vcmp.eq.f32.partialorder %v5210, 8.507059e+37
  %v5212 = vand.u32 %v5200, 2147483648
  %v5213 = vor.u32 1.1754944e-38, %v5212
  %v5214 = vsel %vm5211, %v5213, %v5209
  %v5215 = vmul.f32 %v5190, %v5214
  %v5216 = vmin.f32 %v5215, 1.0
  %v5217 = vmax.f32 %v5216, -1.0
  %v5218 = vadd.f32 %v4617, 1.0
  %v5219 = vadd.f32 %v4657, 1.0
  %v5220 = vadd.f32 %v4697, 1.0
  %v5221 = vadd.f32 %v4737, 1.0
  %v5222 = vadd.f32 %v4777, 1.0
  %v5223 = vadd.f32 %v4817, 1.0
  %v5224 = vadd.f32 %v4857, 1.0
  %v5225 = vadd.f32 %v4897, 1.0
  %v5226 = vadd.f32 %v4937, 1.0
  %v5227 = vadd.f32 %v4977, 1.0
  %v5228 = vadd.f32 %v5017, 1.0
  %v5229 = vadd.f32 %v5057, 1.0
  %v5230 = vadd.f32 %v5097, 1.0
  %v5231 = vadd.f32 %v5137, 1.0
  %v5232 = vadd.f32 %v5177, 1.0
  %v5233 = vadd.f32 %v5217, 1.0
  %v5234 = vmul.f32 %v4546, %v5218
  %v5235 = vmul.f32 %v4547, %v5219
  %v5236 = vmul.f32 %v4548, %v5220
  %v5237 = vmul.f32 %v4549, %v5221
  %v5238 = vmul.f32 %v4550, %v5222
  %v5239 = vmul.f32 %v4551, %v5223
  %v5240 = vmul.f32 %v4552, %v5224
  %v5241 = vmul.f32 %v4553, %v5225
  %v5242 = vmul.f32 %v4554, %v5226
  %v5243 = vmul.f32 %v4555, %v5227
  %v5244 = vmul.f32 %v4556, %v5228
  %v5245 = vmul.f32 %v4557, %v5229
  %v5246 = vmul.f32 %v4558, %v5230
  %v5247 = vmul.f32 %v4559, %v5231
  %v5248 = vmul.f32 %v4560, %v5232
  %v5249 = vmul.f32 %v4561, %v5233
  %v5250 = vld [vmem:[%s5] sm:$0xff]
  %v5251 = vld [vmem:[%s5 + $0x8] sm:$0xff]
  %v5252 = vld [vmem:[%s5 + $0x10] sm:$0xff]
  %v5253 = vld [vmem:[%s5 + $0x18] sm:$0xff]
  %v5254 = vld [vmem:[%s5 + $0x20] sm:$0xff]
  %v5255 = vld [vmem:[%s5 + $0x28] sm:$0xff]
  %v5256 = vld [vmem:[%s5 + $0x30] sm:$0xff]
  %v5257 = vld [vmem:[%s5 + $0x38] sm:$0xff]
  %v5258 = vld [vmem:[%s5 + $0x40] sm:$0xff]
  %v5259 = vld [vmem:[%s5 + $0x48] sm:$0xff]
  %v5260 = vld [vmem:[%s5 + $0x50] sm:$0xff]
  %v5261 = vld [vmem:[%s5 + $0x58] sm:$0xff]
  %v5262 = vld [vmem:[%s5 + $0x60] sm:$0xff]
  %v5263 = vld [vmem:[%s5 + $0x68] sm:$0xff]
  %v5264 = vld [vmem:[%s5 + $0x70] sm:$0xff]
  %v5265 = vld [vmem:[%s5 + $0x78] sm:$0xff]
  %5266 = vmatpush.msra.mxu0 %v5265
  %5267 = vmatpush.msra.mxu0 %v5264
  %5268 = vmatpush.msra.mxu0 %v5263
  %5269 = vmatpush.msra.mxu0 %v5262
  %5270 = vmatpush.msra.mxu0 %v5261
  %5271 = vmatpush.msra.mxu0 %v5260
  %5272 = vmatpush.msra.mxu0 %v5259
  %5273 = vmatpush.msra.mxu0 %v5258
  %5274 = vmatpush.msra.mxu0 %v5257
  %5275 = vmatpush.msra.mxu0 %v5256
  %5276 = vmatpush.msra.mxu0 %v5255
  %5277 = vmatpush.msra.mxu0 %v5254
  %5278 = vmatpush.msra.mxu0 %v5253
  %5279 = vmatpush.msra.mxu0 %v5252
  %5280 = vmatpush.msra.mxu0 %v5251
  %5281 = vmatpush.msra.mxu0 %v5250
  %5282 = vmatmul.f32.gmra.mxu0 %v5234
  %v5283 = vpop.f32.mrf.mxu0
  %v5284 = vadd.f32 0.0, %v5283
  %5285 = vmatmul.f32.gmra.mxu0 %v5235
  %v5286 = vpop.f32.mrf.mxu0
  %v5287 = vadd.f32 0.0, %v5286
  %5288 = vmatmul.f32.gmra.mxu0 %v5236
  %v5289 = vpop.f32.mrf.mxu0
  %v5290 = vadd.f32 0.0, %v5289
  %5291 = vmatmul.f32.gmra.mxu0 %v5237
  %v5292 = vpop.f32.mrf.mxu0
  %v5293 = vadd.f32 0.0, %v5292
  %5294 = vmatmul.f32.gmra.mxu0 %v5238
  %v5295 = vpop.f32.mrf.mxu0
  %v5296 = vadd.f32 0.0, %v5295
  %5297 = vmatmul.f32.gmra.mxu0 %v5239
  %v5298 = vpop.f32.mrf.mxu0
  %v5299 = vadd.f32 0.0, %v5298
  %5300 = vmatmul.f32.gmra.mxu0 %v5240
  %v5301 = vpop.f32.mrf.mxu0
  %v5302 = vadd.f32 0.0, %v5301
  %5303 = vmatmul.f32.gmra.mxu0 %v5241
  %v5304 = vpop.f32.mrf.mxu0
  %v5305 = vadd.f32 0.0, %v5304
  %5306 = vmatmul.f32.gmra.mxu0 %v5242
  %v5307 = vpop.f32.mrf.mxu0
  %v5308 = vadd.f32 0.0, %v5307
  %5309 = vmatmul.f32.gmra.mxu0 %v5243
  %v5310 = vpop.f32.mrf.mxu0
  %v5311 = vadd.f32 0.0, %v5310
  %5312 = vmatmul.f32.gmra.mxu0 %v5244
  %v5313 = vpop.f32.mrf.mxu0
  %v5314 = vadd.f32 0.0, %v5313
  %5315 = vmatmul.f32.gmra.mxu0 %v5245
  %v5316 = vpop.f32.mrf.mxu0
  %v5317 = vadd.f32 0.0, %v5316
  %5318 = vmatmul.f32.gmra.mxu0 %v5246
  %v5319 = vpop.f32.mrf.mxu0
  %v5320 = vadd.f32 0.0, %v5319
  %5321 = vmatmul.f32.gmra.mxu0 %v5247
  %v5322 = vpop.f32.mrf.mxu0
  %v5323 = vadd.f32 0.0, %v5322
  %5324 = vmatmul.f32.gmra.mxu0 %v5248
  %v5325 = vpop.f32.mrf.mxu0
  %v5326 = vadd.f32 0.0, %v5325
  %5327 = vmatmul.f32.gmra.mxu0 %v5249
  %v5328 = vpop.f32.mrf.mxu0
  %v5329 = vadd.f32 0.0, %v5328
  %5330 = vdwg.mxu0
  %v5331 = vadd.f32 %v4026, %v5284
  %v5332 = vadd.f32 %v4027, %v5287
  %v5333 = vadd.f32 %v4028, %v5290
  %v5334 = vadd.f32 %v4029, %v5293
  %v5335 = vadd.f32 %v4030, %v5296
  %v5336 = vadd.f32 %v4031, %v5299
  %v5337 = vadd.f32 %v4032, %v5302
  %v5338 = vadd.f32 %v4033, %v5305
  %v5339 = vadd.f32 %v4034, %v5308
  %v5340 = vadd.f32 %v4035, %v5311
  %v5341 = vadd.f32 %v4036, %v5314
  %v5342 = vadd.f32 %v4037, %v5317
  %v5343 = vadd.f32 %v4038, %v5320
  %v5344 = vadd.f32 %v4039, %v5323
  %v5345 = vadd.f32 %v4040, %v5326
  %v5346 = vadd.f32 %v4041, %v5329
  %v5347 = vperm.slane %v44, 0
  %v5348 = vadd.f32 %v5331, %v5347
  %v5349 = vadd.f32 %v5332, %v5347
  %v5350 = vadd.f32 %v5333, %v5347
  %v5351 = vadd.f32 %v5334, %v5347
  %v5352 = vadd.f32 %v5335, %v5347
  %v5353 = vadd.f32 %v5336, %v5347
  %v5354 = vadd.f32 %v5337, %v5347
  %v5355 = vadd.f32 %v5338, %v5347
  %v5356 = vadd.f32 %v5339, %v5347
  %v5357 = vadd.f32 %v5340, %v5347
  %v5358 = vadd.f32 %v5341, %v5347
  %v5359 = vadd.f32 %v5342, %v5347
  %v5360 = vadd.f32 %v5343, %v5347
  %v5361 = vadd.f32 %v5344, %v5347
  %v5362 = vadd.f32 %v5345, %v5347
  %v5363 = vadd.f32 %v5346, %v5347
  %5364 = vst.msk [vmem:[%s6] sm:$0xff] %vm47, %v5348
  %5365 = vst.msk [vmem:[%s6 + $0x8] sm:$0xff] %vm47, %v5349
  %5366 = vst.msk [vmem:[%s6 + $0x10] sm:$0xff] %vm47, %v5350
  %5367 = vst.msk [vmem:[%s6 + $0x18] sm:$0xff] %vm47, %v5351
  %5368 = vst.msk [vmem:[%s6 + $0x20] sm:$0xff] %vm47, %v5352
  %5369 = vst.msk [vmem:[%s6 + $0x28] sm:$0xff] %vm47, %v5353
  %5370 = vst.msk [vmem:[%s6 + $0x30] sm:$0xff] %vm47, %v5354
  %5371 = vst.msk [vmem:[%s6 + $0x38] sm:$0xff] %vm47, %v5355
  %5372 = vst.msk [vmem:[%s6 + $0x40] sm:$0xff] %vm47, %v5356
  %5373 = vst.msk [vmem:[%s6 + $0x48] sm:$0xff] %vm47, %v5357
  %5374 = vst.msk [vmem:[%s6 + $0x50] sm:$0xff] %vm47, %v5358
  %5375 = vst.msk [vmem:[%s6 + $0x58] sm:$0xff] %vm47, %v5359
  %5376 = vst.msk [vmem:[%s6 + $0x60] sm:$0xff] %vm47, %v5360
  %5377 = vst.msk [vmem:[%s6 + $0x68] sm:$0xff] %vm47, %v5361
  %5378 = vst.msk [vmem:[%s6 + $0x70] sm:$0xff] %vm47, %v5362
  %5379 = vst.msk [vmem:[%s6 + $0x78] sm:$0xff] %vm47, %v5363
  // Predicated region
  $region26: #{transformer_block.1} parent=0 // pred_check
    _
  $region27: #{transformer_block.1} parent=0 // pred_check_branch
    %5381 = sbr.rel (0) target = $region29
  $region28: #{transformer_block.1} parent=0 // pred_region
    _
  $region29: #{transformer_block.1} parent=0 // pred_fallthru
    _
  // Predicated region
  $region30: #{transformer_block.1} parent=0 // pred_check
    _
  $region31: #{transformer_block.1} parent=0 // pred_check_branch
    %5383 = sbr.rel (0) target = $region33
  $region32: #{transformer_block.1} parent=0 // pred_region
    _
  $region33: #{transformer_block.1} parent=0 // pred_fallthru
    _

</llo_original>
